<compile_context>
chip_gen: v7x
topology: tpu7x:2x2x1
jax: 0.10.0
libtpu: 0.0.40
codegen_flags: <defaults>
</compile_context>

<pallas_src>
import functools

import jax
import jax.numpy as jnp
from jax.experimental import pallas as pl
from jax.experimental.pallas import tpu as pltpu


def _round_up(x, m):
    return ((x + m - 1) // m) * m


def _sage_conv_kernel(a_ref, xk_ref, xi_ref, wl_ref, wr_ref, b_ref, o_ref,
                      agg_ref, *, apply_relu):
    # a_ref:  (TM, TK)   bf16  row-normalized adjacency tile (row = target node)
    # xk_ref: (TK, Cin)  bf16  feature rows contracted at this k step
    # xi_ref: (TM, Cin)  f32   root/self features of this row tile
    # wl_ref: (Cin, Cout) f32  lin_l weight (pre-transposed)
    # wr_ref: (Cin, Cout) f32  lin_r weight (pre-transposed)
    # b_ref:  (1, Cout)   f32  lin_l bias
    # o_ref:  (TM, Cout)       output tile (resident across the k axis)
    # agg_ref:(TM, Cin)   f32  mean-aggregation accumulator (VMEM scratch)
    k = pl.program_id(1)

    @pl.when(k == 0)
    def _():
        agg_ref[...] = jnp.zeros_like(agg_ref)

    # Mean aggregation: accumulate this K-slab of A @ X on the MXU (f32 acc).
    agg_ref[...] += jnp.dot(a_ref[...], xk_ref[...],
                            preferred_element_type=jnp.float32)

    @pl.when(k == pl.num_programs(1) - 1)
    def _():
        # Epilogue: lin_l(agg) + lin_r(x) + b, both dots into one f32 value.
        out = jnp.dot(agg_ref[...], wl_ref[...],
                      preferred_element_type=jnp.float32)
        out = out + jnp.dot(xi_ref[...], wr_ref[...],
                            preferred_element_type=jnp.float32)
        out = out + b_ref[...]
        if apply_relu:
            out = jnp.maximum(out, 0.0)
        o_ref[...] = out.astype(o_ref.dtype)


def sage_conv(a_bf16, x_root, w_l_t, w_r_t, b_row, *, apply_relu, tile):
    """One SAGEConv layer on padded inputs (optionally fused with the ReLU)."""
    n_pad = a_bf16.shape[0]
    cin = x_root.shape[1]
    cout = w_l_t.shape[1]
    assert n_pad % tile == 0

    # bf16 halves the HBM traffic on the aggregation path; accumulation stays f32.
    x_agg = x_root.astype(jnp.bfloat16)

    kernel = functools.partial(_sage_conv_kernel, apply_relu=apply_relu)
    grid = (n_pad // tile, n_pad // tile)

    return pl.pallas_call(
        kernel,
        out_shape=jax.ShapeDtypeStruct((n_pad, cout), jnp.float32),
        grid_spec=pltpu.PrefetchScalarGridSpec(
            num_scalar_prefetch=0,
            grid=grid,
            in_specs=[
                pl.BlockSpec((tile, tile), lambda i, k: (i, k)),   # A tile
                pl.BlockSpec((tile, cin), lambda i, k: (k, 0)),    # X rows (contraction)
                pl.BlockSpec((tile, cin), lambda i, k: (i, 0)),    # X rows (root path)
                pl.BlockSpec((cin, cout), lambda i, k: (0, 0)),    # W_l^T
                pl.BlockSpec((cin, cout), lambda i, k: (0, 0)),    # W_r^T
                pl.BlockSpec((1, cout), lambda i, k: (0, 0)),      # b_l
            ],
            out_specs=pl.BlockSpec((tile, cout), lambda i, k: (i, 0)),
            scratch_shapes=[pltpu.VMEM((tile, cin), jnp.float32)],
        ),
        compiler_params=pltpu.CompilerParams(
            dimension_semantics=("parallel", "arbitrary")),
    )(a_bf16, x_agg, x_root, w_l_t, w_r_t, b_row)


def build_mean_adjacency(edge_index, num_nodes):
    """Dense row-normalized adjacency: A[i, j] = 1/deg_in(i) for edge j -> i."""
    src = edge_index[0]
    dst = edge_index[1]
    a = jnp.zeros((num_nodes, num_nodes), dtype=jnp.float32)
    a = a.at[dst, src].add(1.0)
    deg = jnp.sum(a, axis=1, keepdims=True)
    return a / jnp.maximum(deg, 1.0)


def init_sage_params(key, in_channels, hidden_channels, out_channels):
    """SAGEConv-shaped params (lin_l has bias, lin_r has no bias)."""
    ks = jax.random.split(key, 6)

    def lin(k, fan_in, fan_out):
        scale = 1.0 / jnp.sqrt(jnp.float32(fan_in))
        return jax.random.uniform(k, (fan_out, fan_in), jnp.float32, -scale, scale)

    return {
        "conv0": {
            "w_l": lin(ks[0], in_channels, hidden_channels),
            "w_r": lin(ks[1], in_channels, hidden_channels),
            "b_l": jax.random.uniform(ks[2], (hidden_channels,), jnp.float32, -0.1, 0.1),
        },
        "conv1": {
            "w_l": lin(ks[3], hidden_channels, out_channels),
            "w_r": lin(ks[4], hidden_channels, out_channels),
            "b_l": jax.random.uniform(ks[5], (out_channels,), jnp.float32, -0.1, 0.1),
        },
    }


def sage_forward(params, x, edge_index, *, tile=256):
    """Two-layer SAGE forward (eval mode: dropout is identity)."""
    n, _ = x.shape
    hidden = params["conv0"]["w_l"].shape[0]
    cout = params["conv1"]["w_l"].shape[0]

    # Padded/tiled sizes: rows to a tile multiple, channels to 128 for lane-dense
    # stores (inter-layer hidden stays padded so layer 1 consumes it directly).
    n_pad = _round_up(n, 128)
    tile = min(tile, n_pad)
    n_pad = _round_up(n_pad, tile)
    hidden_pad = _round_up(hidden, 128)
    cout_pad = _round_up(cout, 128)

    adj = build_mean_adjacency(edge_index, n)
    adj = jnp.pad(adj, ((0, n_pad - n), (0, n_pad - n))).astype(jnp.bfloat16)

    x_pad = jnp.pad(x.astype(jnp.float32), ((0, n_pad - n), (0, 0)))

    # Pre-transpose weights to (Cin, Cout); zero-pad channels.
    wl0 = jnp.pad(params["conv0"]["w_l"].T, ((0, 0), (0, hidden_pad - hidden)))
    wr0 = jnp.pad(params["conv0"]["w_r"].T, ((0, 0), (0, hidden_pad - hidden)))
    b0 = jnp.pad(params["conv0"]["b_l"], (0, hidden_pad - hidden)).reshape(1, hidden_pad)

    wl1 = jnp.pad(params["conv1"]["w_l"].T,
                  ((0, hidden_pad - hidden), (0, cout_pad - cout)))
    wr1 = jnp.pad(params["conv1"]["w_r"].T,
                  ((0, hidden_pad - hidden), (0, cout_pad - cout)))
    b1 = jnp.pad(params["conv1"]["b_l"], (0, cout_pad - cout)).reshape(1, cout_pad)

    # Layer 0 + fused ReLU (dropout p=0.5 skipped: eval mode).
    h = sage_conv(adj, x_pad, wl0, wr0, b0, apply_relu=True, tile=tile)
    # Layer 1, no activation.
    out = sage_conv(adj, h, wl1, wr1, b1, apply_relu=False, tile=tile)
    return out[:n, :cout]


if __name__ == "__main__":
    key = jax.random.PRNGKey(0)
    k_x, k_e, k_p = jax.random.split(key, 3)

    num_nodes = 512
    in_channels = 16
    hidden_channels = 32
    out_channels = 8
    num_edges = 2048

    x = jax.random.normal(k_x, (num_nodes, in_channels), dtype=jnp.float32)
    edge_index = jax.random.randint(k_e, (2, num_edges), 0, num_nodes, dtype=jnp.int32)
    params = init_sage_params(k_p, in_channels, hidden_channels, out_channels)

    fwd = jax.jit(sage_forward)
    out = jax.block_until_ready(fwd(params, x, edge_index))
    assert out.shape == (num_nodes, out_channels)

    # Plain-JAX f32 reference (loose tolerance: kernel streams A / agg features in bf16).
    adj_ref = build_mean_adjacency(edge_index, num_nodes)

    def ref_layer(h, p, relu):
        o = (adj_ref @ h) @ p["w_l"].T + p["b_l"] + h @ p["w_r"].T
        return jnp.maximum(o, 0.0) if relu else o

    ref = ref_layer(ref_layer(x, params["conv0"], True), params["conv1"], False)
    assert jnp.allclose(out, ref, atol=1e-1, rtol=1e-1), float(jnp.max(jnp.abs(out - ref)))

    print("KERNEL_OK")
</pallas_src>

<mosaic_0001>
module attributes {stable_mosaic.version = 11 : i64} {
  func.func private @main(%arg0: i32) attributes {dimension_semantics = [#tpu.dimension_semantics<core_parallel>], iteration_bounds = array<i64: 2>, tpu.core_type = #tpu.core_type<sc_scalar_subcore>, window_params = []} {
    return
  }
}

module attributes {stable_mosaic.version = 11 : i64} {
  func.func private @main(%arg0: i32) attributes {dimension_semantics = [#tpu.dimension_semantics<core_parallel>], iteration_bounds = array<i64: 2>, tpu.core_type = #tpu.core_type<sc_scalar_subcore>, window_params = []} {
    return
  }
}

module attributes {stable_mosaic.version = 11 : i64} {
  func.func @_sage_conv_kernel(%arg0: i32, %arg1: i32, %arg2: memref<256x256xbf16, #tpu.memory_space<vmem>>, %arg3: memref<256x16xbf16, #tpu.memory_space<vmem>>, %arg4: memref<256x16xf32, #tpu.memory_space<vmem>>, %arg5: memref<16x128xf32, #tpu.memory_space<vmem>>, %arg6: memref<16x128xf32, #tpu.memory_space<vmem>>, %arg7: memref<1x128xf32, #tpu.memory_space<vmem>>, %arg8: memref<256x128xf32, #tpu.memory_space<vmem>>, %arg9: memref<256x16xf32, #tpu.memory_space<vmem>>) attributes {dimension_semantics = [#tpu.dimension_semantics<parallel>, #tpu.dimension_semantics<arbitrary>], iteration_bounds = array<i64: 2, 2>, scalar_prefetch = 0 : i64, scratch_operands = 1 : i64, tpu.core_type = #tpu.core_type<tc>, window_params = [{transform_indices = @transform_0, window_bounds = array<i64: 256, 256>}, {transform_indices = @transform_1, window_bounds = array<i64: 256, 16>}, {transform_indices = @transform_2, window_bounds = array<i64: 256, 16>}, {pipeline_mode = #tpu.pipeline_mode<synchronous>, transform_indices = @transform_3, window_bounds = array<i64: 16, 128>}, {pipeline_mode = #tpu.pipeline_mode<synchronous>, transform_indices = @transform_4, window_bounds = array<i64: 16, 128>}, {pipeline_mode = #tpu.pipeline_mode<synchronous>, transform_indices = @transform_5, window_bounds = array<i64: 1, 128>}, {transform_indices = @transform_6, window_bounds = array<i64: 256, 128>}]} {
    %c0_i32 = arith.constant 0 : i32
    %0 = arith.cmpi eq, %arg1, %c0_i32 : i32
    %1 = arith.extui %0 : i1 to i32
    %c0_i32_0 = arith.constant 0 : i32
    %2 = arith.cmpi ne, %1, %c0_i32_0 : i32
    scf.if %2 {
      %cst_9 = arith.constant 0.000000e+00 : f32
      %12 = vector.broadcast %cst_9 : f32 to vector<256x16xf32>
      %c0_10 = arith.constant 0 : index
      %c0_11 = arith.constant 0 : index
      %13 = vector.load %arg9[%c0_10, %c0_11] : memref<256x16xf32, #tpu.memory_space<vmem>>, vector<256x16xf32>
      tpu.vector_store %arg9[%c0_10, %c0_11], %12 {strides = array<i32>} : memref<256x16xf32, #tpu.memory_space<vmem>>, vector<256x16xf32>,
    } else {
    }
    %c0 = arith.constant 0 : index
    %c0_1 = arith.constant 0 : index
    %3 = vector.load %arg9[%c0, %c0_1] : memref<256x16xf32, #tpu.memory_space<vmem>>, vector<256x16xf32>
    %c0_2 = arith.constant 0 : index
    %c0_3 = arith.constant 0 : index
    %4 = vector.load %arg2[%c0_2, %c0_3] : memref<256x256xbf16, #tpu.memory_space<vmem>>, vector<256x256xbf16>
    %c0_4 = arith.constant 0 : index
    %c0_5 = arith.constant 0 : index
    %5 = vector.load %arg3[%c0_4, %c0_5] : memref<256x16xbf16, #tpu.memory_space<vmem>>, vector<256x16xbf16>
    %cst = arith.constant dense<0.000000e+00> : vector<256x16xf32>
    %6 = tpu.matmul %4, %5, %cst {dimension_numbers = #tpu.dot_dimension_numbers<[1], [0], [0], [1], [0, 0, 1, 1], [], []>} : vector<256x256xbf16>, vector<256x16xbf16>, vector<256x16xf32> -> vector<256x16xf32>
    %7 = arith.addf %3, %6 : vector<256x16xf32>
    %c0_6 = arith.constant 0 : index
    %c0_7 = arith.constant 0 : index
    %8 = vector.load %arg9[%c0_6, %c0_7] : memref<256x16xf32, #tpu.memory_space<vmem>>, vector<256x16xf32>
    tpu.vector_store %arg9[%c0_6, %c0_7], %7 {strides = array<i32>} : memref<256x16xf32, #tpu.memory_space<vmem>>, vector<256x16xf32>,
    %c1_i32 = arith.constant 1 : i32
    %9 = arith.cmpi eq, %arg1, %c1_i32 : i32
    %10 = arith.extui %9 : i1 to i32
    %c0_i32_8 = arith.constant 0 : i32
    %11 = arith.cmpi ne, %10, %c0_i32_8 : i32
    scf.if %11 {
      %c0_9 = arith.constant 0 : index
      %c0_10 = arith.constant 0 : index
      %12 = vector.load %arg9[%c0_9, %c0_10] : memref<256x16xf32, #tpu.memory_space<vmem>>, vector<256x16xf32>
      %c0_11 = arith.constant 0 : index
      %c0_12 = arith.constant 0 : index
      %13 = vector.load %arg5[%c0_11, %c0_12] : memref<16x128xf32, #tpu.memory_space<vmem>>, vector<16x128xf32>
      %cst_13 = arith.constant dense<0.000000e+00> : vector<256x128xf32>
      %14 = tpu.matmul %12, %13, %cst_13 {dimension_numbers = #tpu.dot_dimension_numbers<[1], [0], [0], [1], [0, 0, 1, 1], [], []>} : vector<256x16xf32>, vector<16x128xf32>, vector<256x128xf32> -> vector<256x128xf32>
      %c0_14 = arith.constant 0 : index
      %c0_15 = arith.constant 0 : index
      %15 = vector.load %arg4[%c0_14, %c0_15] : memref<256x16xf32, #tpu.memory_space<vmem>>, vector<256x16xf32>
      %c0_16 = arith.constant 0 : index
      %c0_17 = arith.constant 0 : index
      %16 = vector.load %arg6[%c0_16, %c0_17] : memref<16x128xf32, #tpu.memory_space<vmem>>, vector<16x128xf32>
      %cst_18 = arith.constant dense<0.000000e+00> : vector<256x128xf32>
      %17 = tpu.matmul %15, %16, %cst_18 {dimension_numbers = #tpu.dot_dimension_numbers<[1], [0], [0], [1], [0, 0, 1, 1], [], []>} : vector<256x16xf32>, vector<16x128xf32>, vector<256x128xf32> -> vector<256x128xf32>
      %18 = arith.addf %14, %17 : vector<256x128xf32>
      %c0_19 = arith.constant 0 : index
      %c0_20 = arith.constant 0 : index
      %19 = vector.load %arg7[%c0_19, %c0_20] : memref<1x128xf32, #tpu.memory_space<vmem>>, vector<1x128xf32>
      %20 = vector.broadcast %19 : vector<1x128xf32> to vector<256x128xf32>
      %21 = arith.addf %18, %20 : vector<256x128xf32>
      %cst_21 = arith.constant 0.000000e+00 : f32
      %22 = vector.broadcast %cst_21 : f32 to vector<256x128xf32>
      %23 = arith.maximumf %21, %22 : vector<256x128xf32>
      %c0_22 = arith.constant 0 : index
      %c0_23 = arith.constant 0 : index
      %24 = vector.load %arg8[%c0_22, %c0_23] : memref<256x128xf32, #tpu.memory_space<vmem>>, vector<256x128xf32>
      tpu.vector_store %arg8[%c0_22, %c0_23], %23 {strides = array<i32>} : memref<256x128xf32, #tpu.memory_space<vmem>>, vector<256x128xf32>,
    } else {
    }
    return
  }
  func.func @transform_0(%arg0: i32, %arg1: i32) -> (i32, i32) {
    %c0_i32 = arith.constant 0 : i32
    return %arg0, %arg1 : i32, i32
  }
  func.func @transform_1(%arg0: i32, %arg1: i32) -> (i32, i32) {
    %c0_i32 = arith.constant 0 : i32
    %c0_i32_0 = arith.constant 0 : i32
    return %arg1, %c0_i32 : i32, i32
  }
  func.func @transform_2(%arg0: i32, %arg1: i32) -> (i32, i32) {
    %c0_i32 = arith.constant 0 : i32
    %c0_i32_0 = arith.constant 0 : i32
    return %arg0, %c0_i32 : i32, i32
  }
  func.func @transform_3(%arg0: i32, %arg1: i32) -> (i32, i32) {
    %c0_i32 = arith.constant 0 : i32
    %c0_i32_0 = arith.constant 0 : i32
    %c0_i32_1 = arith.constant 0 : i32
    return %c0_i32, %c0_i32_0 : i32, i32
  }
  func.func @transform_4(%arg0: i32, %arg1: i32) -> (i32, i32) {
    %c0_i32 = arith.constant 0 : i32
    %c0_i32_0 = arith.constant 0 : i32
    %c0_i32_1 = arith.constant 0 : i32
    return %c0_i32, %c0_i32_0 : i32, i32
  }
  func.func @transform_5(%arg0: i32, %arg1: i32) -> (i32, i32) {
    %c0_i32 = arith.constant 0 : i32
    %c0_i32_0 = arith.constant 0 : i32
    %c0_i32_1 = arith.constant 0 : i32
    return %c0_i32, %c0_i32_0 : i32, i32
  }
  func.func @transform_6(%arg0: i32, %arg1: i32) -> (i32, i32) {
    %c0_i32 = arith.constant 0 : i32
    %c0_i32_0 = arith.constant 0 : i32
    return %arg0, %c0_i32 : i32, i32
  }
}

module attributes {stable_mosaic.version = 11 : i64} {
  func.func @_sage_conv_kernel(%arg0: i32, %arg1: i32, %arg2: memref<256x256xbf16, #tpu.memory_space<vmem>>, %arg3: memref<256x128xbf16, #tpu.memory_space<vmem>>, %arg4: memref<256x128xf32, #tpu.memory_space<vmem>>, %arg5: memref<128x128xf32, #tpu.memory_space<vmem>>, %arg6: memref<128x128xf32, #tpu.memory_space<vmem>>, %arg7: memref<1x128xf32, #tpu.memory_space<vmem>>, %arg8: memref<256x128xf32, #tpu.memory_space<vmem>>, %arg9: memref<256x128xf32, #tpu.memory_space<vmem>>) attributes {dimension_semantics = [#tpu.dimension_semantics<parallel>, #tpu.dimension_semantics<arbitrary>], iteration_bounds = array<i64: 2, 2>, scalar_prefetch = 0 : i64, scratch_operands = 1 : i64, tpu.core_type = #tpu.core_type<tc>, window_params = [{transform_indices = @transform_0, window_bounds = array<i64: 256, 256>}, {transform_indices = @transform_1, window_bounds = array<i64: 256, 128>}, {transform_indices = @transform_2, window_bounds = array<i64: 256, 128>}, {pipeline_mode = #tpu.pipeline_mode<synchronous>, transform_indices = @transform_3, window_bounds = array<i64: 128, 128>}, {pipeline_mode = #tpu.pipeline_mode<synchronous>, transform_indices = @transform_4, window_bounds = array<i64: 128, 128>}, {pipeline_mode = #tpu.pipeline_mode<synchronous>, transform_indices = @transform_5, window_bounds = array<i64: 1, 128>}, {transform_indices = @transform_6, window_bounds = array<i64: 256, 128>}]} {
    %c0_i32 = arith.constant 0 : i32
    %0 = arith.cmpi eq, %arg1, %c0_i32 : i32
    %1 = arith.extui %0 : i1 to i32
    %c0_i32_0 = arith.constant 0 : i32
    %2 = arith.cmpi ne, %1, %c0_i32_0 : i32
    scf.if %2 {
      %cst_9 = arith.constant 0.000000e+00 : f32
      %12 = vector.broadcast %cst_9 : f32 to vector<256x128xf32>
      %c0_10 = arith.constant 0 : index
      %c0_11 = arith.constant 0 : index
      %13 = vector.load %arg9[%c0_10, %c0_11] : memref<256x128xf32, #tpu.memory_space<vmem>>, vector<256x128xf32>
      tpu.vector_store %arg9[%c0_10, %c0_11], %12 {strides = array<i32>} : memref<256x128xf32, #tpu.memory_space<vmem>>, vector<256x128xf32>,
    } else {
    }
    %c0 = arith.constant 0 : index
    %c0_1 = arith.constant 0 : index
    %3 = vector.load %arg9[%c0, %c0_1] : memref<256x128xf32, #tpu.memory_space<vmem>>, vector<256x128xf32>
    %c0_2 = arith.constant 0 : index
    %c0_3 = arith.constant 0 : index
    %4 = vector.load %arg2[%c0_2, %c0_3] : memref<256x256xbf16, #tpu.memory_space<vmem>>, vector<256x256xbf16>
    %c0_4 = arith.constant 0 : index
    %c0_5 = arith.constant 0 : index
    %5 = vector.load %arg3[%c0_4, %c0_5] : memref<256x128xbf16, #tpu.memory_space<vmem>>, vector<256x128xbf16>
    %cst = arith.constant dense<0.000000e+00> : vector<256x128xf32>
    %6 = tpu.matmul %4, %5, %cst {dimension_numbers = #tpu.dot_dimension_numbers<[1], [0], [0], [1], [0, 0, 1, 1], [], []>} : vector<256x256xbf16>, vector<256x128xbf16>, vector<256x128xf32> -> vector<256x128xf32>
    %7 = arith.addf %3, %6 : vector<256x128xf32>
    %c0_6 = arith.constant 0 : index
    %c0_7 = arith.constant 0 : index
    %8 = vector.load %arg9[%c0_6, %c0_7] : memref<256x128xf32, #tpu.memory_space<vmem>>, vector<256x128xf32>
    tpu.vector_store %arg9[%c0_6, %c0_7], %7 {strides = array<i32>} : memref<256x128xf32, #tpu.memory_space<vmem>>, vector<256x128xf32>,
    %c1_i32 = arith.constant 1 : i32
    %9 = arith.cmpi eq, %arg1, %c1_i32 : i32
    %10 = arith.extui %9 : i1 to i32
    %c0_i32_8 = arith.constant 0 : i32
    %11 = arith.cmpi ne, %10, %c0_i32_8 : i32
    scf.if %11 {
      %c0_9 = arith.constant 0 : index
      %c0_10 = arith.constant 0 : index
      %12 = vector.load %arg9[%c0_9, %c0_10] : memref<256x128xf32, #tpu.memory_space<vmem>>, vector<256x128xf32>
      %c0_11 = arith.constant 0 : index
      %c0_12 = arith.constant 0 : index
      %13 = vector.load %arg5[%c0_11, %c0_12] : memref<128x128xf32, #tpu.memory_space<vmem>>, vector<128x128xf32>
      %cst_13 = arith.constant dense<0.000000e+00> : vector<256x128xf32>
      %14 = tpu.matmul %12, %13, %cst_13 {dimension_numbers = #tpu.dot_dimension_numbers<[1], [0], [0], [1], [0, 0, 1, 1], [], []>} : vector<256x128xf32>, vector<128x128xf32>, vector<256x128xf32> -> vector<256x128xf32>
      %c0_14 = arith.constant 0 : index
      %c0_15 = arith.constant 0 : index
      %15 = vector.load %arg4[%c0_14, %c0_15] : memref<256x128xf32, #tpu.memory_space<vmem>>, vector<256x128xf32>
      %c0_16 = arith.constant 0 : index
      %c0_17 = arith.constant 0 : index
      %16 = vector.load %arg6[%c0_16, %c0_17] : memref<128x128xf32, #tpu.memory_space<vmem>>, vector<128x128xf32>
      %cst_18 = arith.constant dense<0.000000e+00> : vector<256x128xf32>
      %17 = tpu.matmul %15, %16, %cst_18 {dimension_numbers = #tpu.dot_dimension_numbers<[1], [0], [0], [1], [0, 0, 1, 1], [], []>} : vector<256x128xf32>, vector<128x128xf32>, vector<256x128xf32> -> vector<256x128xf32>
      %18 = arith.addf %14, %17 : vector<256x128xf32>
      %c0_19 = arith.constant 0 : index
      %c0_20 = arith.constant 0 : index
      %19 = vector.load %arg7[%c0_19, %c0_20] : memref<1x128xf32, #tpu.memory_space<vmem>>, vector<1x128xf32>
      %20 = vector.broadcast %19 : vector<1x128xf32> to vector<256x128xf32>
      %21 = arith.addf %18, %20 : vector<256x128xf32>
      %c0_21 = arith.constant 0 : index
      %c0_22 = arith.constant 0 : index
      %22 = vector.load %arg8[%c0_21, %c0_22] : memref<256x128xf32, #tpu.memory_space<vmem>>, vector<256x128xf32>
      tpu.vector_store %arg8[%c0_21, %c0_22], %21 {strides = array<i32>} : memref<256x128xf32, #tpu.memory_space<vmem>>, vector<256x128xf32>,
    } else {
    }
    return
  }
  func.func @transform_0(%arg0: i32, %arg1: i32) -> (i32, i32) {
    %c0_i32 = arith.constant 0 : i32
    return %arg0, %arg1 : i32, i32
  }
  func.func @transform_1(%arg0: i32, %arg1: i32) -> (i32, i32) {
    %c0_i32 = arith.constant 0 : i32
    %c0_i32_0 = arith.constant 0 : i32
    return %arg1, %c0_i32 : i32, i32
  }
  func.func @transform_2(%arg0: i32, %arg1: i32) -> (i32, i32) {
    %c0_i32 = arith.constant 0 : i32
    %c0_i32_0 = arith.constant 0 : i32
    return %arg0, %c0_i32 : i32, i32
  }
  func.func @transform_3(%arg0: i32, %arg1: i32) -> (i32, i32) {
    %c0_i32 = arith.constant 0 : i32
    %c0_i32_0 = arith.constant 0 : i32
    %c0_i32_1 = arith.constant 0 : i32
    return %c0_i32, %c0_i32_0 : i32, i32
  }
  func.func @transform_4(%arg0: i32, %arg1: i32) -> (i32, i32) {
    %c0_i32 = arith.constant 0 : i32
    %c0_i32_0 = arith.constant 0 : i32
    %c0_i32_1 = arith.constant 0 : i32
    return %c0_i32, %c0_i32_0 : i32, i32
  }
  func.func @transform_5(%arg0: i32, %arg1: i32) -> (i32, i32) {
    %c0_i32 = arith.constant 0 : i32
    %c0_i32_0 = arith.constant 0 : i32
    %c0_i32_1 = arith.constant 0 : i32
    return %c0_i32, %c0_i32_0 : i32, i32
  }
  func.func @transform_6(%arg0: i32, %arg1: i32) -> (i32, i32) {
    %c0_i32 = arith.constant 0 : i32
    %c0_i32_0 = arith.constant 0 : i32
    return %arg0, %c0_i32 : i32, i32
  }
}

</mosaic_0001>

<llo_original>
// kernel: sage_forward.2
$region0: #{sage_forward.2}
  #allocation0 [shape = 'u32[]', space=smem, size = 0x4, offset = 0x4, fixed_abs, tag = 'smem constant byte address 0x4 - core index']
  #allocation1 [shape = 'u32[144,128]{1,0:T(1,128)}', space=vmem, size = 0x12000, scoped, tag = 'internal scratch']
  #allocation2 [shape = 'f32[256,16]{1,0:T(8,128)}', space=vmem, size = 0x20000, scoped, tag = 'scratch operand']
  %s0 = inlined_call_operand.vmem [shape: bf16[512,512], index: 0, kind: input, shape index: {}]
  %s1 = inlined_call_operand.vmem [shape: bf16[512,16], index: 1, kind: input, shape index: {}]
  %s2 = inlined_call_operand.vmem [shape: f32[512,16], index: 2, kind: input, shape index: {}]
  %s3 = inlined_call_operand.vmem [shape: f32[16,128], index: 3, kind: input, shape index: {}]
  %s4 = inlined_call_operand.vmem [shape: f32[16,128], index: 4, kind: input, shape index: {}]
  %s5 = inlined_call_operand.vmem [shape: f32[1,128], index: 5, kind: input, shape index: {}]
  %s6 = inlined_call_operand.vmem [shape: f32[512,128], index: 6, kind: output, shape index: {}]
  %s7 = sld [smem:[#allocation0]]
  $region103: #{sage_forward.2} parent=0
    _
  %s9 = ssub.s32 1, %s7
  %s10 = scalar_select 0, %s9, %s7
  $region1: #{sage_forward.2} parent=0
    #allocation3 [shape = 'u8[262144]{0}', space=vmem, size = 0x40000, scoped, tag = 'input window, operand 0']
    loop: start=0, step=1, limit=6
    $region2: #{sage_forward.2} parent=1 // loop_pre_header
      _
    $region3: #{sage_forward.2} parent=1 // loop_header
      %s12 = sphi 0, %s16
      %p13 = scmp.ge.s32.totalorder %s12, 6
      %s19 = sphi 0, %s31
      %s20 = sphi 0, %s27
      %s21 = sphi 0, %s19
      %s22 = sphi 0, %s20
      %s23 = sphi 0, %s21
      %s24 = sphi 0, %s22
      %s36 = sphi 0, %s38
      %s39 = sphi 0, %s36
      %s40 = sphi 0, %s39
      %s56 = sphi 0, %s40
      %s62 = sphi 0, %s64
      %s65 = sphi 0, %s62
      %s66 = sphi 0, %s65
      %s82 = sphi 0, %s66
      %s88 = sphi 0, %s90
      %s91 = sphi 0, %s88
      %s92 = sphi 0, %s91
      %s108 = sphi 0, %s92
      %s112 = sphi 0, %s112
      %s114 = sphi 0, %s112
      %s115 = sphi 0, %s114
      %s129 = sphi 0, %s115
      %s133 = sphi 0, %s133
      %s135 = sphi 0, %s133
      %s136 = sphi 0, %s135
      %s150 = sphi 0, %s136
      %s154 = sphi 0, %s154
      %s156 = sphi 0, %s154
      %s157 = sphi 0, %s156
      %s171 = sphi 0, %s157
      %s177 = sphi 0, %s179
      %s180 = sphi 0, %s177
      %s181 = sphi 0, %s180
      %s197 = sphi 0, %s181
    $region4: #{sage_forward.2} parent=1 // loop_header_branch
      %15 = sbr.rel (%p13) target = $region8
    $region5: #{sage_forward.2} parent=1 // loop_body
      %s17 = ssub.s32 %s12, 1
      %s18 = ssub.s32 %s12, 2
      %s25 = sadd.s32 1, %s20
      %p26 = scmp.ge.s32.totalorder %s25, 2
      %s27 = scalar_select %p26, 0, %s25
      %s28 = sadd.s32 1, %s19
      %s29 = scalar_select %p26, %s28, %s19
      %p30 = scmp.ge.s32.totalorder %s29, 2
      %s31 = scalar_select %p30, 0, %s29
      %s32 = ssub.s32 %s19, %s31
      %s33 = ssub.s32 %s20, %s27
      %s34 = sor.u32 %s32, %s33
      %p35 = scmp.eq.s32.totalorder %s34, 0
      %s37 = sadd.s32 %s36, 1
      %s38 = scalar_select %p35, %s36, %s37
      %p41 = pneg %p35
      %p42 = scmp.eq.s32.totalorder %s12, 3
      %p43 = por %p41, %p42
      %p44 = scmp.ne.s32.totalorder %s36, %s39
      %p45 = scmp.eq.s32.totalorder %s12, 0
      %p46 = por %p44, %p45
      %p47 = scmp.ne.s32.totalorder %s36, %s39
      %p48 = scmp.eq.s32.totalorder %s17, 3
      %p49 = por %p47, %p48
      %p50 = scmp.ne.s32.totalorder %s39, %s40
      %p51 = scmp.eq.s32.totalorder %s17, 0
      %p52 = por %p50, %p51
      %p53 = scmp.ne.s32.totalorder %s39, %s40
      %p54 = scmp.eq.s32.totalorder %s18, 3
      %p55 = por %p53, %p54
      %p57 = scmp.ne.s32.totalorder %s40, %s56
      %p58 = scmp.eq.s32.totalorder %s18, 0
      %p59 = por %p57, %p58
      %s60 = ssub.s32 %s20, %s27
      %p61 = scmp.eq.s32.totalorder %s60, 0
      %s63 = sadd.s32 %s62, 1
      %s64 = scalar_select %p61, %s62, %s63
      %p67 = pneg %p61
      %p68 = scmp.eq.s32.totalorder %s12, 3
      %p69 = por %p67, %p68
      %p70 = scmp.ne.s32.totalorder %s62, %s65
      %p71 = scmp.eq.s32.totalorder %s12, 0
      %p72 = por %p70, %p71
      %p73 = scmp.ne.s32.totalorder %s62, %s65
      %p74 = scmp.eq.s32.totalorder %s17, 3
      %p75 = por %p73, %p74
      %p76 = scmp.ne.s32.totalorder %s65, %s66
      %p77 = scmp.eq.s32.totalorder %s17, 0
      %p78 = por %p76, %p77
      %p79 = scmp.ne.s32.totalorder %s65, %s66
      %p80 = scmp.eq.s32.totalorder %s18, 3
      %p81 = por %p79, %p80
      %p83 = scmp.ne.s32.totalorder %s66, %s82
      %p84 = scmp.eq.s32.totalorder %s18, 0
      %p85 = por %p83, %p84
      %s86 = ssub.s32 %s19, %s31
      %p87 = scmp.eq.s32.totalorder %s86, 0
      %s89 = sadd.s32 %s88, 1
      %s90 = scalar_select %p87, %s88, %s89
      %p93 = pneg %p87
      %p94 = scmp.eq.s32.totalorder %s12, 3
      %p95 = por %p93, %p94
      %p96 = scmp.ne.s32.totalorder %s88, %s91
      %p97 = scmp.eq.s32.totalorder %s12, 0
      %p98 = por %p96, %p97
      %p99 = scmp.ne.s32.totalorder %s88, %s91
      %p100 = scmp.eq.s32.totalorder %s17, 3
      %p101 = por %p99, %p100
      %p102 = scmp.ne.s32.totalorder %s91, %s92
      %p103 = scmp.eq.s32.totalorder %s17, 0
      %p104 = por %p102, %p103
      %p105 = scmp.ne.s32.totalorder %s91, %s92
      %p106 = scmp.eq.s32.totalorder %s18, 3
      %p107 = por %p105, %p106
      %p109 = scmp.ne.s32.totalorder %s92, %s108
      %p110 = scmp.eq.s32.totalorder %s18, 0
      %p111 = por %p109, %p110
      %s113 = sadd.s32 %s112, 1
      %p116 = scmp.eq.s32.totalorder %s12, 3
      %p117 = scmp.ne.s32.totalorder %s112, %s114
      %p118 = scmp.eq.s32.totalorder %s12, 0
      %p119 = por %p117, %p118
      %p120 = scmp.ne.s32.totalorder %s112, %s114
      %p121 = scmp.eq.s32.totalorder %s17, 3
      %p122 = por %p120, %p121
      %p123 = scmp.ne.s32.totalorder %s114, %s115
      %p124 = scmp.eq.s32.totalorder %s17, 0
      %p125 = por %p123, %p124
      %p126 = scmp.ne.s32.totalorder %s114, %s115
      %p127 = scmp.eq.s32.totalorder %s18, 3
      %p128 = por %p126, %p127
      %p130 = scmp.ne.s32.totalorder %s115, %s129
      %p131 = scmp.eq.s32.totalorder %s18, 0
      %p132 = por %p130, %p131
      %s134 = sadd.s32 %s133, 1
      %p137 = scmp.eq.s32.totalorder %s12, 3
      %p138 = scmp.ne.s32.totalorder %s133, %s135
      %p139 = scmp.eq.s32.totalorder %s12, 0
      %p140 = por %p138, %p139
      %p141 = scmp.ne.s32.totalorder %s133, %s135
      %p142 = scmp.eq.s32.totalorder %s17, 3
      %p143 = por %p141, %p142
      %p144 = scmp.ne.s32.totalorder %s135, %s136
      %p145 = scmp.eq.s32.totalorder %s17, 0
      %p146 = por %p144, %p145
      %p147 = scmp.ne.s32.totalorder %s135, %s136
      %p148 = scmp.eq.s32.totalorder %s18, 3
      %p149 = por %p147, %p148
      %p151 = scmp.ne.s32.totalorder %s136, %s150
      %p152 = scmp.eq.s32.totalorder %s18, 0
      %p153 = por %p151, %p152
      %s155 = sadd.s32 %s154, 1
      %p158 = scmp.eq.s32.totalorder %s12, 3
      %p159 = scmp.ne.s32.totalorder %s154, %s156
      %p160 = scmp.eq.s32.totalorder %s12, 0
      %p161 = por %p159, %p160
      %p162 = scmp.ne.s32.totalorder %s154, %s156
      %p163 = scmp.eq.s32.totalorder %s17, 3
      %p164 = por %p162, %p163
      %p165 = scmp.ne.s32.totalorder %s156, %s157
      %p166 = scmp.eq.s32.totalorder %s17, 0
      %p167 = por %p165, %p166
      %p168 = scmp.ne.s32.totalorder %s156, %s157
      %p169 = scmp.eq.s32.totalorder %s18, 3
      %p170 = por %p168, %p169
      %p172 = scmp.ne.s32.totalorder %s157, %s171
      %p173 = scmp.eq.s32.totalorder %s18, 0
      %p174 = por %p172, %p173
      %s175 = ssub.s32 %s19, %s31
      %p176 = scmp.eq.s32.totalorder %s175, 0
      %s178 = sadd.s32 %s177, 1
      %s179 = scalar_select %p176, %s177, %s178
      %p182 = pneg %p176
      %p183 = scmp.eq.s32.totalorder %s12, 3
      %p184 = por %p182, %p183
      %p185 = scmp.ne.s32.totalorder %s177, %s180
      %p186 = scmp.eq.s32.totalorder %s12, 0
      %p187 = por %p185, %p186
      %p188 = scmp.ne.s32.totalorder %s177, %s180
      %p189 = scmp.eq.s32.totalorder %s17, 3
      %p190 = por %p188, %p189
      %p191 = scmp.ne.s32.totalorder %s180, %s181
      %p192 = scmp.eq.s32.totalorder %s17, 0
      %p193 = por %p191, %p192
      %p194 = scmp.ne.s32.totalorder %s180, %s181
      %p195 = scmp.eq.s32.totalorder %s18, 3
      %p196 = por %p194, %p195
      %p198 = scmp.ne.s32.totalorder %s181, %s197
      %p199 = scmp.eq.s32.totalorder %s18, 0
      %p200 = por %p198, %p199
      %p201 = scmp.le.s32.totalorder 1, %s12
      %p202 = scmp.lt.s32.totalorder %s12, 5
      %p203 = pnand %p201, %p202
      %p204 = pneg %p203
      // Predicated region
      $region9: #{sage_forward.2} parent=5 // pred_check
        _
      $region10: #{sage_forward.2} parent=5 // pred_check_branch
        %206 = sbr.rel (%p203) target = $region12
      $region11: #{sage_forward.2} parent=5 // pred_region
        %s207 = ssub.s32 %s12, 1
        // Predicated region
        $region13: #{sage_forward.2} parent=11 // pred_check
          %p208 = pneg %p125
        $region14: #{sage_forward.2} parent=11 // pred_check_branch
          %210 = sbr.rel (%p208) target = $region16
        $region15: #{sage_forward.2} parent=11 // pred_region
          _
        $region16: #{sage_forward.2} parent=11 // pred_fallthru
          _
        // Predicated region
        $region17: #{sage_forward.2} parent=11 // pred_check
          %p211 = pneg %p146
        $region18: #{sage_forward.2} parent=11 // pred_check_branch
          %213 = sbr.rel (%p211) target = $region20
        $region19: #{sage_forward.2} parent=11 // pred_region
          _
        $region20: #{sage_forward.2} parent=11 // pred_fallthru
          _
        // Predicated region
        $region21: #{sage_forward.2} parent=11 // pred_check
          %p214 = pneg %p167
        $region22: #{sage_forward.2} parent=11 // pred_check_branch
          %216 = sbr.rel (%p214) target = $region24
        $region23: #{sage_forward.2} parent=11 // pred_region
          _
        $region24: #{sage_forward.2} parent=11 // pred_fallthru
          _
      $region12: #{sage_forward.2} parent=5 // pred_fallthru
        _
      %p217 = scmp.lt.s32.totalorder %s12, 4
      // Predicated region
      $region25: #{sage_forward.2} parent=5 // pred_check
        %p218 = pneg %p217
      $region26: #{sage_forward.2} parent=5 // pred_check_branch
        %220 = sbr.rel (%p218) target = $region28
      $region27: #{sage_forward.2} parent=5 // pred_region
        // Predicated region
        $region29: #{sage_forward.2} parent=27 // pred_check
          %p221 = pneg %p46
        $region30: #{sage_forward.2} parent=27 // pred_check_branch
          %223 = sbr.rel (%p221) target = $region32
        $region31: #{sage_forward.2} parent=27 // pred_region
          %s224 = sand.u32 %s36, 1
          %s225 = sand.u32 %s36, 1
          %s226 = smul.addr %s225, 256
          %s227 = scalar_lea.vmem [#allocation3], %s226
          %s228 = smul.u32 32, %s19
          %s229 = smul.u32 2, %s20
          %s230 = smul.addr %s228, 4
          %s231 = sadd.s32 %s229, %s230
          %s232 = smul.addr %s231, 4
          %s233 = scalar_lea.vmem %s0, %s232
          // Predicated region
          $region33: #{sage_forward.2} parent=31 // pred_check
            _
          $region34: #{sage_forward.2} parent=31 // pred_check_branch
            %235 = sbr.rel (0) target = $region36
          $region35: #{sage_forward.2} parent=31 // pred_region
            // Predicated region
            $region37: #{sage_forward.2} parent=35 // pred_check
              _
            $region38: #{sage_forward.2} parent=35 // pred_check_branch
              %237 = sbr.rel (0) target = $region40
            $region39: #{sage_forward.2} parent=35 // pred_region
              // Predicated region
              $region52: #{sage_forward.2} parent=39 // pred_check
                _
              $region53: #{sage_forward.2} parent=39 // pred_check_branch
                %314 = sbr.rel (0) target = $region55
              $region54: #{sage_forward.2} parent=39 // pred_region
                loop: start=0, step=1, limit=1
                $region56: #{sage_forward.2} parent=54 // loop_pre_header
                  _
                $region57: #{sage_forward.2} parent=54 // loop_header
                  %s316 = sphi 0, %s320
                  %p317 = scmp.ge.s32.totalorder %s316, 1
                  %s321 = sphi %s233, %s233
                  %s322 = sphi %s227, %s227
                $region58: #{sage_forward.2} parent=54 // loop_header_branch
                  %319 = sbr.rel (%p317) target = $region62
                $region59: #{sage_forward.2} parent=54 // loop_body
                  %v323 = vld [vmem:[%s321] sm:$0xff]
                  %324 = vst [vmem:[%s322] sm:$0xff] %v323
                  %v325 = vld [vmem:[%s321 + $0x10] sm:$0xff]
                  %326 = vst [vmem:[%s322 + $0x8] sm:$0xff] %v325
                  %v327 = vld [vmem:[%s321 + $0x20] sm:$0xff]
                  %328 = vst [vmem:[%s322 + $0x10] sm:$0xff] %v327
                  %v329 = vld [vmem:[%s321 + $0x30] sm:$0xff]
                  %330 = vst [vmem:[%s322 + $0x18] sm:$0xff] %v329
                  %v331 = vld [vmem:[%s321 + $0x40] sm:$0xff]
                  %332 = vst [vmem:[%s322 + $0x20] sm:$0xff] %v331
                  %v333 = vld [vmem:[%s321 + $0x50] sm:$0xff]
                  %334 = vst [vmem:[%s322 + $0x28] sm:$0xff] %v333
                  %v335 = vld [vmem:[%s321 + $0x60] sm:$0xff]
                  %336 = vst [vmem:[%s322 + $0x30] sm:$0xff] %v335
                  %v337 = vld [vmem:[%s321 + $0x70] sm:$0xff]
                  %338 = vst [vmem:[%s322 + $0x38] sm:$0xff] %v337
                  %v339 = vld [vmem:[%s321 + $0x80] sm:$0xff]
                  %340 = vst [vmem:[%s322 + $0x40] sm:$0xff] %v339
                  %v341 = vld [vmem:[%s321 + $0x90] sm:$0xff]
                  %342 = vst [vmem:[%s322 + $0x48] sm:$0xff] %v341
                  %v343 = vld [vmem:[%s321 + $0xa0] sm:$0xff]
                  %344 = vst [vmem:[%s322 + $0x50] sm:$0xff] %v343
                  %v345 = vld [vmem:[%s321 + $0xb0] sm:$0xff]
                  %346 = vst [vmem:[%s322 + $0x58] sm:$0xff] %v345
                  %v347 = vld [vmem:[%s321 + $0xc0] sm:$0xff]
                  %348 = vst [vmem:[%s322 + $0x60] sm:$0xff] %v347
                  %v349 = vld [vmem:[%s321 + $0xd0] sm:$0xff]
                  %350 = vst [vmem:[%s322 + $0x68] sm:$0xff] %v349
                  %v351 = vld [vmem:[%s321 + $0xe0] sm:$0xff]
                  %352 = vst [vmem:[%s322 + $0x70] sm:$0xff] %v351
                  %v353 = vld [vmem:[%s321 + $0xf0] sm:$0xff]
                  %354 = vst [vmem:[%s322 + $0x78] sm:$0xff] %v353
                  %v355 = vld [vmem:[%s321 + $0x100] sm:$0xff]
                  %356 = vst [vmem:[%s322 + $0x80] sm:$0xff] %v355
                  %v357 = vld [vmem:[%s321 + $0x110] sm:$0xff]
                  %358 = vst [vmem:[%s322 + $0x88] sm:$0xff] %v357
                  %v359 = vld [vmem:[%s321 + $0x120] sm:$0xff]
                  %360 = vst [vmem:[%s322 + $0x90] sm:$0xff] %v359
                  %v361 = vld [vmem:[%s321 + $0x130] sm:$0xff]
                  %362 = vst [vmem:[%s322 + $0x98] sm:$0xff] %v361
                  %v363 = vld [vmem:[%s321 + $0x140] sm:$0xff]
                  %364 = vst [vmem:[%s322 + $0xa0] sm:$0xff] %v363
                  %v365 = vld [vmem:[%s321 + $0x150] sm:$0xff]
                  %366 = vst [vmem:[%s322 + $0xa8] sm:$0xff] %v365
                  %v367 = vld [vmem:[%s321 + $0x160] sm:$0xff]
                  %368 = vst [vmem:[%s322 + $0xb0] sm:$0xff] %v367
                  %v369 = vld [vmem:[%s321 + $0x170] sm:$0xff]
                  %370 = vst [vmem:[%s322 + $0xb8] sm:$0xff] %v369
                  %v371 = vld [vmem:[%s321 + $0x180] sm:$0xff]
                  %372 = vst [vmem:[%s322 + $0xc0] sm:$0xff] %v371
                  %v373 = vld [vmem:[%s321 + $0x190] sm:$0xff]
                  %374 = vst [vmem:[%s322 + $0xc8] sm:$0xff] %v373
                  %v375 = vld [vmem:[%s321 + $0x1a0] sm:$0xff]
                  %376 = vst [vmem:[%s322 + $0xd0] sm:$0xff] %v375
                  %v377 = vld [vmem:[%s321 + $0x1b0] sm:$0xff]
                  %378 = vst [vmem:[%s322 + $0xd8] sm:$0xff] %v377
                  %v379 = vld [vmem:[%s321 + $0x1c0] sm:$0xff]
                  %380 = vst [vmem:[%s322 + $0xe0] sm:$0xff] %v379
                  %v381 = vld [vmem:[%s321 + $0x1d0] sm:$0xff]
                  %382 = vst [vmem:[%s322 + $0xe8] sm:$0xff] %v381
                  %v383 = vld [vmem:[%s321 + $0x1e0] sm:$0xff]
                  %384 = vst [vmem:[%s322 + $0xf0] sm:$0xff] %v383
                  %v385 = vld [vmem:[%s321 + $0x1f0] sm:$0xff]
                  %386 = vst [vmem:[%s322 + $0xf8] sm:$0xff] %v385
                $region60: #{sage_forward.2} parent=54 // loop_footer
                  %s320 = sadd.s32 1, %s316
                $region61: #{sage_forward.2} parent=54 // loop_footer_branch
                  %315 = sbr.rel target = $region57
                $region62: #{sage_forward.2} parent=54 // loop_exit
                  _
              $region55: #{sage_forward.2} parent=39 // pred_fallthru
                _
              // Predicated region
              $region63: #{sage_forward.2} parent=39 // pred_check
                _
              $region64: #{sage_forward.2} parent=39 // pred_check_branch
                %388 = sbr.rel target = $region66
              $region65: #{sage_forward.2} parent=39 // pred_region
                _
              $region66: #{sage_forward.2} parent=39 // pred_fallthru
                _
            $region40: #{sage_forward.2} parent=35 // pred_fallthru
              _
            // Predicated region
            $region41: #{sage_forward.2} parent=35 // pred_check
              _
            $region42: #{sage_forward.2} parent=35 // pred_check_branch
              %239 = sbr.rel target = $region44
            $region43: #{sage_forward.2} parent=35 // pred_region
              loop: start=0, step=1, limit=1
              $region45: #{sage_forward.2} parent=43 // loop_pre_header
                _
              $region46: #{sage_forward.2} parent=43 // loop_header
                %s242 = sphi 0, %s246
                %p243 = scmp.ge.s32.totalorder %s242, 1
                %s247 = sphi %s233, %s233
                %s248 = sphi %s227, %s227
              $region47: #{sage_forward.2} parent=43 // loop_header_branch
                %245 = sbr.rel (%p243) target = $region51
              $region48: #{sage_forward.2} parent=43 // loop_body
                %v249 = vld [vmem:[%s247] sm:$0xff]
                %250 = vst [vmem:[%s248] sm:$0xff] %v249
                %v251 = vld [vmem:[%s247 + $0x10] sm:$0xff]
                %252 = vst [vmem:[%s248 + $0x8] sm:$0xff] %v251
                %v253 = vld [vmem:[%s247 + $0x20] sm:$0xff]
                %254 = vst [vmem:[%s248 + $0x10] sm:$0xff] %v253
                %v255 = vld [vmem:[%s247 + $0x30] sm:$0xff]
                %256 = vst [vmem:[%s248 + $0x18] sm:$0xff] %v255
                %v257 = vld [vmem:[%s247 + $0x40] sm:$0xff]
                %258 = vst [vmem:[%s248 + $0x20] sm:$0xff] %v257
                %v259 = vld [vmem:[%s247 + $0x50] sm:$0xff]
                %260 = vst [vmem:[%s248 + $0x28] sm:$0xff] %v259
                %v261 = vld [vmem:[%s247 + $0x60] sm:$0xff]
                %262 = vst [vmem:[%s248 + $0x30] sm:$0xff] %v261
                %v263 = vld [vmem:[%s247 + $0x70] sm:$0xff]
                %264 = vst [vmem:[%s248 + $0x38] sm:$0xff] %v263
                %v265 = vld [vmem:[%s247 + $0x80] sm:$0xff]
                %266 = vst [vmem:[%s248 + $0x40] sm:$0xff] %v265
                %v267 = vld [vmem:[%s247 + $0x90] sm:$0xff]
                %268 = vst [vmem:[%s248 + $0x48] sm:$0xff] %v267
                %v269 = vld [vmem:[%s247 + $0xa0] sm:$0xff]
                %270 = vst [vmem:[%s248 + $0x50] sm:$0xff] %v269
                %v271 = vld [vmem:[%s247 + $0xb0] sm:$0xff]
                %272 = vst [vmem:[%s248 + $0x58] sm:$0xff] %v271
                %v273 = vld [vmem:[%s247 + $0xc0] sm:$0xff]
                %274 = vst [vmem:[%s248 + $0x60] sm:$0xff] %v273
                %v275 = vld [vmem:[%s247 + $0xd0] sm:$0xff]
                %276 = vst [vmem:[%s248 + $0x68] sm:$0xff] %v275
                %v277 = vld [vmem:[%s247 + $0xe0] sm:$0xff]
                %278 = vst [vmem:[%s248 + $0x70] sm:$0xff] %v277
                %v279 = vld [vmem:[%s247 + $0xf0] sm:$0xff]
                %280 = vst [vmem:[%s248 + $0x78] sm:$0xff] %v279
                %v281 = vld [vmem:[%s247 + $0x100] sm:$0xff]
                %282 = vst [vmem:[%s248 + $0x80] sm:$0xff] %v281
                %v283 = vld [vmem:[%s247 + $0x110] sm:$0xff]
                %284 = vst [vmem:[%s248 + $0x88] sm:$0xff] %v283
                %v285 = vld [vmem:[%s247 + $0x120] sm:$0xff]
                %286 = vst [vmem:[%s248 + $0x90] sm:$0xff] %v285
                %v287 = vld [vmem:[%s247 + $0x130] sm:$0xff]
                %288 = vst [vmem:[%s248 + $0x98] sm:$0xff] %v287
                %v289 = vld [vmem:[%s247 + $0x140] sm:$0xff]
                %290 = vst [vmem:[%s248 + $0xa0] sm:$0xff] %v289
                %v291 = vld [vmem:[%s247 + $0x150] sm:$0xff]
                %292 = vst [vmem:[%s248 + $0xa8] sm:$0xff] %v291
                %v293 = vld [vmem:[%s247 + $0x160] sm:$0xff]
                %294 = vst [vmem:[%s248 + $0xb0] sm:$0xff] %v293
                %v295 = vld [vmem:[%s247 + $0x170] sm:$0xff]
                %296 = vst [vmem:[%s248 + $0xb8] sm:$0xff] %v295
                %v297 = vld [vmem:[%s247 + $0x180] sm:$0xff]
                %298 = vst [vmem:[%s248 + $0xc0] sm:$0xff] %v297
                %v299 = vld [vmem:[%s247 + $0x190] sm:$0xff]
                %300 = vst [vmem:[%s248 + $0xc8] sm:$0xff] %v299
                %v301 = vld [vmem:[%s247 + $0x1a0] sm:$0xff]
                %302 = vst [vmem:[%s248 + $0xd0] sm:$0xff] %v301
                %v303 = vld [vmem:[%s247 + $0x1b0] sm:$0xff]
                %304 = vst [vmem:[%s248 + $0xd8] sm:$0xff] %v303
                %v305 = vld [vmem:[%s247 + $0x1c0] sm:$0xff]
                %306 = vst [vmem:[%s248 + $0xe0] sm:$0xff] %v305
                %v307 = vld [vmem:[%s247 + $0x1d0] sm:$0xff]
                %308 = vst [vmem:[%s248 + $0xe8] sm:$0xff] %v307
                %v309 = vld [vmem:[%s247 + $0x1e0] sm:$0xff]
                %310 = vst [vmem:[%s248 + $0xf0] sm:$0xff] %v309
                %v311 = vld [vmem:[%s247 + $0x1f0] sm:$0xff]
                %312 = vst [vmem:[%s248 + $0xf8] sm:$0xff] %v311
              $region49: #{sage_forward.2} parent=43 // loop_footer
                %s246 = sadd.s32 1, %s242
              $region50: #{sage_forward.2} parent=43 // loop_footer_branch
                %241 = sbr.rel target = $region46
              $region51: #{sage_forward.2} parent=43 // loop_exit
                _
            $region44: #{sage_forward.2} parent=35 // pred_fallthru
              _
          $region36: #{sage_forward.2} parent=31 // pred_fallthru
            _
          %389 = vnop
        $region32: #{sage_forward.2} parent=27 // pred_fallthru
          _
        // Predicated region
        $region67: #{sage_forward.2} parent=27 // pred_check
          %p390 = pneg %p72
        $region68: #{sage_forward.2} parent=27 // pred_check_branch
          %392 = sbr.rel (%p390) target = $region70
        $region69: #{sage_forward.2} parent=27 // pred_region
          %s393 = smul.u32 32, %s20
          %p394 = scmp.lt.s32.totalorder %s393, 63
          %s395 = scalar_select %p394, %s393, 63
          %s396 = smul.addr %s395, 4
          %s397 = scalar_lea.vmem %s1, %s396
          %s398 = smul.u32 32, %s20
        $region70: #{sage_forward.2} parent=27 // pred_fallthru
          _
        // Predicated region
        $region71: #{sage_forward.2} parent=27 // pred_check
          %p399 = pneg %p98
        $region72: #{sage_forward.2} parent=27 // pred_check_branch
          %401 = sbr.rel (%p399) target = $region74
        $region73: #{sage_forward.2} parent=27 // pred_region
          %s402 = smul.u32 32, %s19
          %p403 = scmp.lt.s32.totalorder %s402, 63
          %s404 = scalar_select %p403, %s402, 63
          %s405 = smul.addr %s404, 8
          %s406 = scalar_lea.vmem %s2, %s405
          %s407 = smul.u32 32, %s19
        $region74: #{sage_forward.2} parent=27 // pred_fallthru
          _
      $region28: #{sage_forward.2} parent=5 // pred_fallthru
        _
      %p408 = scmp.le.s32.totalorder 1, %s12
      %p409 = scmp.lt.s32.totalorder %s12, 5
      %p410 = pnand %p408, %p409
      %p411 = pneg %p410
      // Predicated region
      $region75: #{sage_forward.2} parent=5 // pred_check
        _
      $region76: #{sage_forward.2} parent=5 // pred_check_branch
        %413 = sbr.rel (%p410) target = $region78
      $region77: #{sage_forward.2} parent=5 // pred_region
        %s414 = ssub.s32 %s12, 1
        %s415 = sand.u32 %s39, 1
        %s416 = sand.u32 %s39, 1
        %s417 = smul.addr %s416, 256
        %s418 = scalar_lea.vmem [#allocation3], %s417
        // Predicated region
        $region79: #{sage_forward.2} parent=77 // pred_check
          %p419 = pneg %p52
        $region80: #{sage_forward.2} parent=77 // pred_check_branch
          %421 = sbr.rel (%p419) target = $region82
        $region81: #{sage_forward.2} parent=77 // pred_region
          _
        $region82: #{sage_forward.2} parent=77 // pred_fallthru
          _
        %s422 = sand.u32 %s39, 1
        %s423 = sand.u32 %s39, 1
        %s424 = smul.addr %s423, 256
        %s425 = scalar_lea.vmem [#allocation3], %s424
        %p426 = pneg %p52
        %p427 = pneg %p49
        %s428 = smul.u32 32, %s22
        %p429 = scmp.lt.s32.totalorder %s428, 63
        %s430 = scalar_select %p429, %s428, 63
        %s431 = smul.addr %s430, 4
        %s432 = scalar_lea.vmem %s1, %s431
        %p433 = pneg %p78
        %p434 = pneg %p75
        %s435 = smul.u32 32, %s21
        %p436 = scmp.lt.s32.totalorder %s435, 63
        %s437 = scalar_select %p436, %s435, 63
        %s438 = smul.addr %s437, 8
        %s439 = scalar_lea.vmem %s2, %s438
        %p440 = pneg %p104
        %p441 = pneg %p101
        %p442 = pneg %p125
        %p443 = pneg %p122
        %p444 = pneg %p146
        %p445 = pneg %p143
        %p446 = pneg %p167
        %p447 = pneg %p164
        %p448 = pneg %p193
        %p449 = pneg %p190
        %s450 = smul.u32 32, %s21
        %p451 = scmp.lt.s32.totalorder %s450, 63
        %s452 = scalar_select %p451, %s450, 63
        %s453 = smul.addr %s452, 8
        %s454 = scalar_lea.vmem %s6, %s453
        %s455 = smul.u32 32, %s21
        %s456 = smul.u32 2, %s22
        %s457 = smul.u32 32, %s22
        %p458 = scmp.lt.s32.totalorder %s457, 63
        %s459 = scalar_select %p458, %s457, 63
        %s460 = smul.addr %s459, 4
        %s461 = scalar_lea.vmem %s1, %s460
        %s462 = smul.u32 32, %s22
        %s463 = smul.u32 32, %s21
        %p464 = scmp.lt.s32.totalorder %s463, 63
        %s465 = scalar_select %p464, %s463, 63
        %s466 = smul.addr %s465, 8
        %s467 = scalar_lea.vmem %s2, %s466
        %s468 = smul.u32 32, %s21
        %s469 = smul.u32 32, %s21
        %p470 = scmp.lt.s32.totalorder %s469, 63
        %s471 = scalar_select %p470, %s469, 63
        %s472 = smul.addr %s471, 8
        %s473 = scalar_lea.vmem %s6, %s472
        %s474 = smul.u32 32, %s21
        %p476 = scmp.eq.s32.totalorder %s22, 0
        // Predicated region
        $region83: #{sage_forward.2} parent=77 // pred_check
          %p477 = pneg %p476
        $region84: #{sage_forward.2} parent=77 // pred_check_branch
          %479 = sbr.rel (%p477) target = $region86
        $region85: #{sage_forward.2} parent=77 // pred_region
          %vm480 = vcmask 130048
          %481 = vst.msk [vmem:[#allocation2] sm:$0xff] %vm480, 0.0
          %482 = vst.msk [vmem:[#allocation2 + $0x8] sm:$0xff] %vm480, 0.0
          %483 = vst.msk [vmem:[#allocation2 + $0x10] sm:$0xff] %vm480, 0.0
          %484 = vst.msk [vmem:[#allocation2 + $0x18] sm:$0xff] %vm480, 0.0
          %485 = vst.msk [vmem:[#allocation2 + $0x20] sm:$0xff] %vm480, 0.0
          %486 = vst.msk [vmem:[#allocation2 + $0x28] sm:$0xff] %vm480, 0.0
          %487 = vst.msk [vmem:[#allocation2 + $0x30] sm:$0xff] %vm480, 0.0
          %488 = vst.msk [vmem:[#allocation2 + $0x38] sm:$0xff] %vm480, 0.0
          %489 = vst.msk [vmem:[#allocation2 + $0x40] sm:$0xff] %vm480, 0.0
          %490 = vst.msk [vmem:[#allocation2 + $0x48] sm:$0xff] %vm480, 0.0
          %491 = vst.msk [vmem:[#allocation2 + $0x50] sm:$0xff] %vm480, 0.0
          %492 = vst.msk [vmem:[#allocation2 + $0x58] sm:$0xff] %vm480, 0.0
          %493 = vst.msk [vmem:[#allocation2 + $0x60] sm:$0xff] %vm480, 0.0
          %494 = vst.msk [vmem:[#allocation2 + $0x68] sm:$0xff] %vm480, 0.0
          %495 = vst.msk [vmem:[#allocation2 + $0x70] sm:$0xff] %vm480, 0.0
          %496 = vst.msk [vmem:[#allocation2 + $0x78] sm:$0xff] %vm480, 0.0
          %497 = vst.msk [vmem:[#allocation2 + $0x80] sm:$0xff] %vm480, 0.0
          %498 = vst.msk [vmem:[#allocation2 + $0x88] sm:$0xff] %vm480, 0.0
          %499 = vst.msk [vmem:[#allocation2 + $0x90] sm:$0xff] %vm480, 0.0
          %500 = vst.msk [vmem:[#allocation2 + $0x98] sm:$0xff] %vm480, 0.0
          %501 = vst.msk [vmem:[#allocation2 + $0xa0] sm:$0xff] %vm480, 0.0
          %502 = vst.msk [vmem:[#allocation2 + $0xa8] sm:$0xff] %vm480, 0.0
          %503 = vst.msk [vmem:[#allocation2 + $0xb0] sm:$0xff] %vm480, 0.0
          %504 = vst.msk [vmem:[#allocation2 + $0xb8] sm:$0xff] %vm480, 0.0
          %505 = vst.msk [vmem:[#allocation2 + $0xc0] sm:$0xff] %vm480, 0.0
          %506 = vst.msk [vmem:[#allocation2 + $0xc8] sm:$0xff] %vm480, 0.0
          %507 = vst.msk [vmem:[#allocation2 + $0xd0] sm:$0xff] %vm480, 0.0
          %508 = vst.msk [vmem:[#allocation2 + $0xd8] sm:$0xff] %vm480, 0.0
          %509 = vst.msk [vmem:[#allocation2 + $0xe0] sm:$0xff] %vm480, 0.0
          %510 = vst.msk [vmem:[#allocation2 + $0xe8] sm:$0xff] %vm480, 0.0
          %511 = vst.msk [vmem:[#allocation2 + $0xf0] sm:$0xff] %vm480, 0.0
          %512 = vst.msk [vmem:[#allocation2 + $0xf8] sm:$0xff] %vm480, 0.0
        $region86: #{sage_forward.2} parent=77 // pred_fallthru
          _
        %v513 = vld [vmem:[#allocation2] sm:$0xff]
        %v514 = vld [vmem:[#allocation2 + $0x8] sm:$0xff]
        %v515 = vld [vmem:[#allocation2 + $0x10] sm:$0xff]
        %v516 = vld [vmem:[#allocation2 + $0x18] sm:$0xff]
        %v517 = vld [vmem:[#allocation2 + $0x20] sm:$0xff]
        %v518 = vld [vmem:[#allocation2 + $0x28] sm:$0xff]
        %v519 = vld [vmem:[#allocation2 + $0x30] sm:$0xff]
        %v520 = vld [vmem:[#allocation2 + $0x38] sm:$0xff]
        %v521 = vld [vmem:[#allocation2 + $0x40] sm:$0xff]
        %v522 = vld [vmem:[#allocation2 + $0x48] sm:$0xff]
        %v523 = vld [vmem:[#allocation2 + $0x50] sm:$0xff]
        %v524 = vld [vmem:[#allocation2 + $0x58] sm:$0xff]
        %v525 = vld [vmem:[#allocation2 + $0x60] sm:$0xff]
        %v526 = vld [vmem:[#allocation2 + $0x68] sm:$0xff]
        %v527 = vld [vmem:[#allocation2 + $0x70] sm:$0xff]
        %v528 = vld [vmem:[#allocation2 + $0x78] sm:$0xff]
        %v529 = vld [vmem:[#allocation2 + $0x80] sm:$0xff]
        %v530 = vld [vmem:[#allocation2 + $0x88] sm:$0xff]
        %v531 = vld [vmem:[#allocation2 + $0x90] sm:$0xff]
        %v532 = vld [vmem:[#allocation2 + $0x98] sm:$0xff]
        %v533 = vld [vmem:[#allocation2 + $0xa0] sm:$0xff]
        %v534 = vld [vmem:[#allocation2 + $0xa8] sm:$0xff]
        %v535 = vld [vmem:[#allocation2 + $0xb0] sm:$0xff]
        %v536 = vld [vmem:[#allocation2 + $0xb8] sm:$0xff]
        %v537 = vld [vmem:[#allocation2 + $0xc0] sm:$0xff]
        %v538 = vld [vmem:[#allocation2 + $0xc8] sm:$0xff]
        %v539 = vld [vmem:[#allocation2 + $0xd0] sm:$0xff]
        %v540 = vld [vmem:[#allocation2 + $0xd8] sm:$0xff]
        %v541 = vld [vmem:[#allocation2 + $0xe0] sm:$0xff]
        %v542 = vld [vmem:[#allocation2 + $0xe8] sm:$0xff]
        %v543 = vld [vmem:[#allocation2 + $0xf0] sm:$0xff]
        %v544 = vld [vmem:[#allocation2 + $0xf8] sm:$0xff]
        %v545 = vld [vmem:[%s418] sm:$0xff]
        %v546 = vld [vmem:[%s418 + $0x8] sm:$0xff]
        %v547 = vld [vmem:[%s418 + $0x10] sm:$0xff]
        %v548 = vld [vmem:[%s418 + $0x18] sm:$0xff]
        %v549 = vld [vmem:[%s418 + $0x20] sm:$0xff]
        %v550 = vld [vmem:[%s418 + $0x28] sm:$0xff]
        %v551 = vld [vmem:[%s418 + $0x30] sm:$0xff]
        %v552 = vld [vmem:[%s418 + $0x38] sm:$0xff]
        %v553 = vld [vmem:[%s418 + $0x40] sm:$0xff]
        %v554 = vld [vmem:[%s418 + $0x48] sm:$0xff]
        %v555 = vld [vmem:[%s418 + $0x50] sm:$0xff]
        %v556 = vld [vmem:[%s418 + $0x58] sm:$0xff]
        %v557 = vld [vmem:[%s418 + $0x60] sm:$0xff]
        %v558 = vld [vmem:[%s418 + $0x68] sm:$0xff]
        %v559 = vld [vmem:[%s418 + $0x70] sm:$0xff]
        %v560 = vld [vmem:[%s418 + $0x78] sm:$0xff]
        %v561 = vld [vmem:[%s418 + $0x80] sm:$0xff]
        %v562 = vld [vmem:[%s418 + $0x88] sm:$0xff]
        %v563 = vld [vmem:[%s418 + $0x90] sm:$0xff]
        %v564 = vld [vmem:[%s418 + $0x98] sm:$0xff]
        %v565 = vld [vmem:[%s418 + $0xa0] sm:$0xff]
        %v566 = vld [vmem:[%s418 + $0xa8] sm:$0xff]
        %v567 = vld [vmem:[%s418 + $0xb0] sm:$0xff]
        %v568 = vld [vmem:[%s418 + $0xb8] sm:$0xff]
        %v569 = vld [vmem:[%s418 + $0xc0] sm:$0xff]
        %v570 = vld [vmem:[%s418 + $0xc8] sm:$0xff]
        %v571 = vld [vmem:[%s418 + $0xd0] sm:$0xff]
        %v572 = vld [vmem:[%s418 + $0xd8] sm:$0xff]
        %v573 = vld [vmem:[%s418 + $0xe0] sm:$0xff]
        %v574 = vld [vmem:[%s418 + $0xe8] sm:$0xff]
        %v575 = vld [vmem:[%s418 + $0xf0] sm:$0xff]
        %v576 = vld [vmem:[%s418 + $0xf8] sm:$0xff]
        %v577 = vld [vmem:[%s461] sm:$0xf]
        %v578 = vld [vmem:[%s461 + $0x4] sm:$0xf]
        %v579 = vld [vmem:[%s461 + $0x8] sm:$0xf]
        %v580 = vld [vmem:[%s461 + $0xc] sm:$0xf]
        %v581 = vld [vmem:[%s461 + $0x10] sm:$0xf]
        %v582 = vld [vmem:[%s461 + $0x14] sm:$0xf]
        %v583 = vld [vmem:[%s461 + $0x18] sm:$0xf]
        %v584 = vld [vmem:[%s461 + $0x1c] sm:$0xf]
        %v585 = vld [vmem:[%s461 + $0x20] sm:$0xf]
        %v586 = vld [vmem:[%s461 + $0x24] sm:$0xf]
        %v587 = vld [vmem:[%s461 + $0x28] sm:$0xf]
        %v588 = vld [vmem:[%s461 + $0x2c] sm:$0xf]
        %v589 = vld [vmem:[%s461 + $0x30] sm:$0xf]
        %v590 = vld [vmem:[%s461 + $0x34] sm:$0xf]
        %v591 = vld [vmem:[%s461 + $0x38] sm:$0xf]
        %v592 = vld [vmem:[%s461 + $0x3c] sm:$0xf]
        %v593 = vld [vmem:[%s461 + $0x40] sm:$0xf]
        %v594 = vld [vmem:[%s461 + $0x44] sm:$0xf]
        %v595 = vld [vmem:[%s461 + $0x48] sm:$0xf]
        %v596 = vld [vmem:[%s461 + $0x4c] sm:$0xf]
        %v597 = vld [vmem:[%s461 + $0x50] sm:$0xf]
        %v598 = vld [vmem:[%s461 + $0x54] sm:$0xf]
        %v599 = vld [vmem:[%s461 + $0x58] sm:$0xf]
        %v600 = vld [vmem:[%s461 + $0x5c] sm:$0xf]
        %v601 = vld [vmem:[%s461 + $0x60] sm:$0xf]
        %v602 = vld [vmem:[%s461 + $0x64] sm:$0xf]
        %v603 = vld [vmem:[%s461 + $0x68] sm:$0xf]
        %v604 = vld [vmem:[%s461 + $0x6c] sm:$0xf]
        %v605 = vld [vmem:[%s461 + $0x70] sm:$0xf]
        %v606 = vld [vmem:[%s461 + $0x74] sm:$0xf]
        %v607 = vld [vmem:[%s461 + $0x78] sm:$0xf]
        %v608 = vld [vmem:[%s461 + $0x7c] sm:$0xf]
        %v641 = vunpack.c.l.b16 %v545
        %v642 = vunpack.c.h.b16 %v545
        %v643 = vunpack.c.l.b16 %v546
        %v644 = vunpack.c.h.b16 %v546
        %v645 = vunpack.c.l.b16 %v547
        %v646 = vunpack.c.h.b16 %v547
        %v647 = vunpack.c.l.b16 %v548
        %v648 = vunpack.c.h.b16 %v548
        %v649 = vunpack.c.l.b16 %v549
        %v650 = vunpack.c.h.b16 %v549
        %v651 = vunpack.c.l.b16 %v550
        %v652 = vunpack.c.h.b16 %v550
        %v653 = vunpack.c.l.b16 %v551
        %v654 = vunpack.c.h.b16 %v551
        %v655 = vunpack.c.l.b16 %v552
        %v656 = vunpack.c.h.b16 %v552
        %v657 = vunpack.c.l.b16 %v553
        %v658 = vunpack.c.h.b16 %v553
        %v659 = vunpack.c.l.b16 %v554
        %v660 = vunpack.c.h.b16 %v554
        %v661 = vunpack.c.l.b16 %v555
        %v662 = vunpack.c.h.b16 %v555
        %v663 = vunpack.c.l.b16 %v556
        %v664 = vunpack.c.h.b16 %v556
        %v665 = vunpack.c.l.b16 %v557
        %v666 = vunpack.c.h.b16 %v557
        %v667 = vunpack.c.l.b16 %v558
        %v668 = vunpack.c.h.b16 %v558
        %v669 = vunpack.c.l.b16 %v559
        %v670 = vunpack.c.h.b16 %v559
        %v671 = vunpack.c.l.b16 %v560
        %v672 = vunpack.c.h.b16 %v560
        %v673 = vunpack.c.l.b16 %v561
        %v674 = vunpack.c.h.b16 %v561
        %v675 = vunpack.c.l.b16 %v562
        %v676 = vunpack.c.h.b16 %v562
        %v677 = vunpack.c.l.b16 %v563
        %v678 = vunpack.c.h.b16 %v563
        %v679 = vunpack.c.l.b16 %v564
        %v680 = vunpack.c.h.b16 %v564
        %v681 = vunpack.c.l.b16 %v565
        %v682 = vunpack.c.h.b16 %v565
        %v683 = vunpack.c.l.b16 %v566
        %v684 = vunpack.c.h.b16 %v566
        %v685 = vunpack.c.l.b16 %v567
        %v686 = vunpack.c.h.b16 %v567
        %v687 = vunpack.c.l.b16 %v568
        %v688 = vunpack.c.h.b16 %v568
        %v689 = vunpack.c.l.b16 %v569
        %v690 = vunpack.c.h.b16 %v569
        %v691 = vunpack.c.l.b16 %v570
        %v692 = vunpack.c.h.b16 %v570
        %v693 = vunpack.c.l.b16 %v571
        %v694 = vunpack.c.h.b16 %v571
        %v695 = vunpack.c.l.b16 %v572
        %v696 = vunpack.c.h.b16 %v572
        %v697 = vunpack.c.l.b16 %v573
        %v698 = vunpack.c.h.b16 %v573
        %v699 = vunpack.c.l.b16 %v574
        %v700 = vunpack.c.h.b16 %v574
        %v701 = vunpack.c.l.b16 %v575
        %v702 = vunpack.c.h.b16 %v575
        %v703 = vunpack.c.l.b16 %v576
        %v704 = vunpack.c.h.b16 %v576
        %v705 = vpack.c.b16 %v643, %v641
        %v706 = vpack.c.b16 %v644, %v642
        %v707 = vpack.c.b16 %v647, %v645
        %v708 = vpack.c.b16 %v648, %v646
        %v709 = vpack.c.b16 %v651, %v649
        %v710 = vpack.c.b16 %v652, %v650
        %v711 = vpack.c.b16 %v655, %v653
        %v712 = vpack.c.b16 %v656, %v654
        %v713 = vpack.c.b16 %v659, %v657
        %v714 = vpack.c.b16 %v660, %v658
        %v715 = vpack.c.b16 %v663, %v661
        %v716 = vpack.c.b16 %v664, %v662
        %v717 = vpack.c.b16 %v667, %v665
        %v718 = vpack.c.b16 %v668, %v666
        %v719 = vpack.c.b16 %v671, %v669
        %v720 = vpack.c.b16 %v672, %v670
        %v721 = vpack.c.b16 %v675, %v673
        %v722 = vpack.c.b16 %v676, %v674
        %v723 = vpack.c.b16 %v679, %v677
        %v724 = vpack.c.b16 %v680, %v678
        %v725 = vpack.c.b16 %v683, %v681
        %v726 = vpack.c.b16 %v684, %v682
        %v727 = vpack.c.b16 %v687, %v685
        %v728 = vpack.c.b16 %v688, %v686
        %v729 = vpack.c.b16 %v691, %v689
        %v730 = vpack.c.b16 %v692, %v690
        %v731 = vpack.c.b16 %v695, %v693
        %v732 = vpack.c.b16 %v696, %v694
        %v733 = vpack.c.b16 %v699, %v697
        %v734 = vpack.c.b16 %v700, %v698
        %v735 = vpack.c.b16 %v703, %v701
        %v736 = vpack.c.b16 %v704, %v702
        %v801 = vunpack.c.l.b16 %v577
        %v802 = vunpack.c.l.b16 %v578
        %v803 = vunpack.c.l.b16 %v579
        %v804 = vunpack.c.l.b16 %v580
        %v805 = vunpack.c.l.b16 %v581
        %v806 = vunpack.c.l.b16 %v582
        %v807 = vunpack.c.l.b16 %v583
        %v808 = vunpack.c.l.b16 %v584
        %v809 = vunpack.c.l.b16 %v585
        %v810 = vunpack.c.l.b16 %v586
        %v811 = vunpack.c.l.b16 %v587
        %v812 = vunpack.c.l.b16 %v588
        %v813 = vunpack.c.l.b16 %v589
        %v814 = vunpack.c.l.b16 %v590
        %v815 = vunpack.c.l.b16 %v591
        %v816 = vunpack.c.l.b16 %v592
        %v817 = vunpack.c.l.b16 %v593
        %v818 = vunpack.c.l.b16 %v594
        %v819 = vunpack.c.l.b16 %v595
        %v820 = vunpack.c.l.b16 %v596
        %v821 = vunpack.c.l.b16 %v597
        %v822 = vunpack.c.l.b16 %v598
        %v823 = vunpack.c.l.b16 %v599
        %v824 = vunpack.c.l.b16 %v600
        %v825 = vunpack.c.l.b16 %v601
        %v826 = vunpack.c.l.b16 %v602
        %v827 = vunpack.c.l.b16 %v603
        %v828 = vunpack.c.l.b16 %v604
        %v829 = vunpack.c.l.b16 %v605
        %v830 = vunpack.c.l.b16 %v606
        %v831 = vunpack.c.l.b16 %v607
        %v832 = vunpack.c.l.b16 %v608
        %v833 = vpack.c.b16 %v802, %v801
        %v834 = vpack.c.b16 %v804, %v803
        %v835 = vpack.c.b16 %v806, %v805
        %v836 = vpack.c.b16 %v808, %v807
        %v837 = vpack.c.b16 %v810, %v809
        %v838 = vpack.c.b16 %v812, %v811
        %v839 = vpack.c.b16 %v814, %v813
        %v840 = vpack.c.b16 %v816, %v815
        %v841 = vpack.c.b16 %v818, %v817
        %v842 = vpack.c.b16 %v820, %v819
        %v843 = vpack.c.b16 %v822, %v821
        %v844 = vpack.c.b16 %v824, %v823
        %v845 = vpack.c.b16 %v826, %v825
        %v846 = vpack.c.b16 %v828, %v827
        %v847 = vpack.c.b16 %v830, %v829
        %v848 = vpack.c.b16 %v832, %v831
        %865 = vmatprep.subr.bf16.mxu0 0
        %866 = vmatpush1.bf16.msra.mxu0 %v833
        %867 = vmatprep.subr.bf16.mxu0 0
        %868 = vmatpush1.bf16.msra.mxu0 %v834
        %869 = vmatprep.subr.bf16.mxu0 0
        %870 = vmatpush1.bf16.msra.mxu0 %v835
        %871 = vmatprep.subr.bf16.mxu0 0
        %872 = vmatpush1.bf16.msra.mxu0 %v836
        %873 = vmatprep.subr.bf16.mxu0 0
        %874 = vmatpush1.bf16.msra.mxu0 %v837
        %875 = vmatprep.subr.bf16.mxu0 0
        %876 = vmatpush1.bf16.msra.mxu0 %v838
        %877 = vmatprep.subr.bf16.mxu0 0
        %878 = vmatpush1.bf16.msra.mxu0 %v839
        %879 = vmatprep.subr.bf16.mxu0 0
        %880 = vmatpush1.bf16.msra.mxu0 %v840
        %881 = vmatprep.subr.bf16.mxu0 0
        %882 = vmatpush1.bf16.msra.mxu0 %v841
        %883 = vmatprep.subr.bf16.mxu0 0
        %884 = vmatpush1.bf16.msra.mxu0 %v842
        %885 = vmatprep.subr.bf16.mxu0 0
        %886 = vmatpush1.bf16.msra.mxu0 %v843
        %887 = vmatprep.subr.bf16.mxu0 0
        %888 = vmatpush1.bf16.msra.mxu0 %v844
        %889 = vmatprep.subr.bf16.mxu0 0
        %890 = vmatpush1.bf16.msra.mxu0 %v845
        %891 = vmatprep.subr.bf16.mxu0 0
        %892 = vmatpush1.bf16.msra.mxu0 %v846
        %893 = vmatprep.subr.bf16.mxu0 0
        %894 = vmatpush1.bf16.msra.mxu0 %v847
        %895 = vmatprep.subr.bf16.mxu0 0
        %896 = vmatpush1.bf16.msra.mxu0 %v848
        %897 = vmatprep.mubr.bf16.mxu0 %v706
        %898 = vmatmul.mubr.bf16.gmra.mrb[0].mxu0 %v705
        %v899 = vpop.f32.mrb[0].mxu0
        %v900 = vadd.f32 0.0, %v899
        %v901 = vpop.f32.mrb[0].mxu0
        %v902 = vpop.f32.mrb[0].mxu0
        %v903 = vadd.f32 0.0, %v902
        %v904 = vpop.f32.mrb[0].mxu0
        %905 = vmatprep.mubr.bf16.mxu0 %v708
        %906 = vmatmul.mubr.bf16.gmra.mrb[0].mxu0 %v707
        %v907 = vpop.f32.mrb[0].mxu0
        %v908 = vadd.f32 0.0, %v907
        %v909 = vpop.f32.mrb[0].mxu0
        %v910 = vpop.f32.mrb[0].mxu0
        %v911 = vadd.f32 0.0, %v910
        %v912 = vpop.f32.mrb[0].mxu0
        %913 = vmatprep.mubr.bf16.mxu0 %v710
        %914 = vmatmul.mubr.bf16.gmra.mrb[0].mxu0 %v709
        %v915 = vpop.f32.mrb[0].mxu0
        %v916 = vadd.f32 0.0, %v915
        %v917 = vpop.f32.mrb[0].mxu0
        %v918 = vpop.f32.mrb[0].mxu0
        %v919 = vadd.f32 0.0, %v918
        %v920 = vpop.f32.mrb[0].mxu0
        %921 = vmatprep.mubr.bf16.mxu0 %v712
        %922 = vmatmul.mubr.bf16.gmra.mrb[0].mxu0 %v711
        %v923 = vpop.f32.mrb[0].mxu0
        %v924 = vadd.f32 0.0, %v923
        %v925 = vpop.f32.mrb[0].mxu0
        %v926 = vpop.f32.mrb[0].mxu0
        %v927 = vadd.f32 0.0, %v926
        %v928 = vpop.f32.mrb[0].mxu0
        %929 = vmatprep.mubr.bf16.mxu0 %v714
        %930 = vmatmul.mubr.bf16.gmra.mrb[0].mxu0 %v713
        %v931 = vpop.f32.mrb[0].mxu0
        %v932 = vadd.f32 0.0, %v931
        %v933 = vpop.f32.mrb[0].mxu0
        %v934 = vpop.f32.mrb[0].mxu0
        %v935 = vadd.f32 0.0, %v934
        %v936 = vpop.f32.mrb[0].mxu0
        %937 = vmatprep.mubr.bf16.mxu0 %v716
        %938 = vmatmul.mubr.bf16.gmra.mrb[0].mxu0 %v715
        %v939 = vpop.f32.mrb[0].mxu0
        %v940 = vadd.f32 0.0, %v939
        %v941 = vpop.f32.mrb[0].mxu0
        %v942 = vpop.f32.mrb[0].mxu0
        %v943 = vadd.f32 0.0, %v942
        %v944 = vpop.f32.mrb[0].mxu0
        %945 = vmatprep.mubr.bf16.mxu0 %v718
        %946 = vmatmul.mubr.bf16.gmra.mrb[0].mxu0 %v717
        %v947 = vpop.f32.mrb[0].mxu0
        %v948 = vadd.f32 0.0, %v947
        %v949 = vpop.f32.mrb[0].mxu0
        %v950 = vpop.f32.mrb[0].mxu0
        %v951 = vadd.f32 0.0, %v950
        %v952 = vpop.f32.mrb[0].mxu0
        %953 = vmatprep.mubr.bf16.mxu0 %v720
        %954 = vmatmul.mubr.bf16.gmra.mrb[0].mxu0 %v719
        %v955 = vpop.f32.mrb[0].mxu0
        %v956 = vadd.f32 0.0, %v955
        %v957 = vpop.f32.mrb[0].mxu0
        %v958 = vpop.f32.mrb[0].mxu0
        %v959 = vadd.f32 0.0, %v958
        %v960 = vpop.f32.mrb[0].mxu0
        %961 = vmatprep.mubr.bf16.mxu0 %v722
        %962 = vmatmul.mubr.bf16.gmra.mrb[0].mxu0 %v721
        %v963 = vpop.f32.mrb[0].mxu0
        %v964 = vadd.f32 0.0, %v963
        %v965 = vpop.f32.mrb[0].mxu0
        %v966 = vpop.f32.mrb[0].mxu0
        %v967 = vadd.f32 0.0, %v966
        %v968 = vpop.f32.mrb[0].mxu0
        %969 = vmatprep.mubr.bf16.mxu0 %v724
        %970 = vmatmul.mubr.bf16.gmra.mrb[0].mxu0 %v723
        %v971 = vpop.f32.mrb[0].mxu0
        %v972 = vadd.f32 0.0, %v971
        %v973 = vpop.f32.mrb[0].mxu0
        %v974 = vpop.f32.mrb[0].mxu0
        %v975 = vadd.f32 0.0, %v974
        %v976 = vpop.f32.mrb[0].mxu0
        %977 = vmatprep.mubr.bf16.mxu0 %v726
        %978 = vmatmul.mubr.bf16.gmra.mrb[0].mxu0 %v725
        %v979 = vpop.f32.mrb[0].mxu0
        %v980 = vadd.f32 0.0, %v979
        %v981 = vpop.f32.mrb[0].mxu0
        %v982 = vpop.f32.mrb[0].mxu0
        %v983 = vadd.f32 0.0, %v982
        %v984 = vpop.f32.mrb[0].mxu0
        %985 = vmatprep.mubr.bf16.mxu0 %v728
        %986 = vmatmul.mubr.bf16.gmra.mrb[0].mxu0 %v727
        %v987 = vpop.f32.mrb[0].mxu0
        %v988 = vadd.f32 0.0, %v987
        %v989 = vpop.f32.mrb[0].mxu0
        %v990 = vpop.f32.mrb[0].mxu0
        %v991 = vadd.f32 0.0, %v990
        %v992 = vpop.f32.mrb[0].mxu0
        %993 = vmatprep.mubr.bf16.mxu0 %v730
        %994 = vmatmul.mubr.bf16.gmra.mrb[0].mxu0 %v729
        %v995 = vpop.f32.mrb[0].mxu0
        %v996 = vadd.f32 0.0, %v995
        %v997 = vpop.f32.mrb[0].mxu0
        %v998 = vpop.f32.mrb[0].mxu0
        %v999 = vadd.f32 0.0, %v998
        %v1000 = vpop.f32.mrb[0].mxu0
        %1001 = vmatprep.mubr.bf16.mxu0 %v732
        %1002 = vmatmul.mubr.bf16.gmra.mrb[0].mxu0 %v731
        %v1003 = vpop.f32.mrb[0].mxu0
        %v1004 = vadd.f32 0.0, %v1003
        %v1005 = vpop.f32.mrb[0].mxu0
        %v1006 = vpop.f32.mrb[0].mxu0
        %v1007 = vadd.f32 0.0, %v1006
        %v1008 = vpop.f32.mrb[0].mxu0
        %1009 = vmatprep.mubr.bf16.mxu0 %v734
        %1010 = vmatmul.mubr.bf16.gmra.mrb[0].mxu0 %v733
        %v1011 = vpop.f32.mrb[0].mxu0
        %v1012 = vadd.f32 0.0, %v1011
        %v1013 = vpop.f32.mrb[0].mxu0
        %v1014 = vpop.f32.mrb[0].mxu0
        %v1015 = vadd.f32 0.0, %v1014
        %v1016 = vpop.f32.mrb[0].mxu0
        %1017 = vmatprep.mubr.bf16.mxu0 %v736
        %1018 = vmatmul.mubr.bf16.gmra.mrb[0].mxu0 %v735
        %v1019 = vpop.f32.mrb[0].mxu0
        %v1020 = vadd.f32 0.0, %v1019
        %v1021 = vpop.f32.mrb[0].mxu0
        %v1022 = vpop.f32.mrb[0].mxu0
        %v1023 = vadd.f32 0.0, %v1022
        %v1024 = vpop.f32.mrb[0].mxu0
        %1025 = vdwg.mxu0
        %v1026 = vadd.f32 %v513, %v900
        %v1027 = vadd.f32 %v514, %v903
        %v1028 = vadd.f32 %v515, %v908
        %v1029 = vadd.f32 %v516, %v911
        %v1030 = vadd.f32 %v517, %v916
        %v1031 = vadd.f32 %v518, %v919
        %v1032 = vadd.f32 %v519, %v924
        %v1033 = vadd.f32 %v520, %v927
        %v1034 = vadd.f32 %v521, %v932
        %v1035 = vadd.f32 %v522, %v935
        %v1036 = vadd.f32 %v523, %v940
        %v1037 = vadd.f32 %v524, %v943
        %v1038 = vadd.f32 %v525, %v948
        %v1039 = vadd.f32 %v526, %v951
        %v1040 = vadd.f32 %v527, %v956
        %v1041 = vadd.f32 %v528, %v959
        %v1042 = vadd.f32 %v529, %v964
        %v1043 = vadd.f32 %v530, %v967
        %v1044 = vadd.f32 %v531, %v972
        %v1045 = vadd.f32 %v532, %v975
        %v1046 = vadd.f32 %v533, %v980
        %v1047 = vadd.f32 %v534, %v983
        %v1048 = vadd.f32 %v535, %v988
        %v1049 = vadd.f32 %v536, %v991
        %v1050 = vadd.f32 %v537, %v996
        %v1051 = vadd.f32 %v538, %v999
        %v1052 = vadd.f32 %v539, %v1004
        %v1053 = vadd.f32 %v540, %v1007
        %v1054 = vadd.f32 %v541, %v1012
        %v1055 = vadd.f32 %v542, %v1015
        %v1056 = vadd.f32 %v543, %v1020
        %v1057 = vadd.f32 %v544, %v1023
        %vm1058 = vcmask 130048
        %1059 = vst.msk [vmem:[#allocation2] sm:$0xff] %vm1058, %v1026
        %1060 = vst.msk [vmem:[#allocation2 + $0x8] sm:$0xff] %vm1058, %v1027
        %1061 = vst.msk [vmem:[#allocation2 + $0x10] sm:$0xff] %vm1058, %v1028
        %1062 = vst.msk [vmem:[#allocation2 + $0x18] sm:$0xff] %vm1058, %v1029
        %1063 = vst.msk [vmem:[#allocation2 + $0x20] sm:$0xff] %vm1058, %v1030
        %1064 = vst.msk [vmem:[#allocation2 + $0x28] sm:$0xff] %vm1058, %v1031
        %1065 = vst.msk [vmem:[#allocation2 + $0x30] sm:$0xff] %vm1058, %v1032
        %1066 = vst.msk [vmem:[#allocation2 + $0x38] sm:$0xff] %vm1058, %v1033
        %1067 = vst.msk [vmem:[#allocation2 + $0x40] sm:$0xff] %vm1058, %v1034
        %1068 = vst.msk [vmem:[#allocation2 + $0x48] sm:$0xff] %vm1058, %v1035
        %1069 = vst.msk [vmem:[#allocation2 + $0x50] sm:$0xff] %vm1058, %v1036
        %1070 = vst.msk [vmem:[#allocation2 + $0x58] sm:$0xff] %vm1058, %v1037
        %1071 = vst.msk [vmem:[#allocation2 + $0x60] sm:$0xff] %vm1058, %v1038
        %1072 = vst.msk [vmem:[#allocation2 + $0x68] sm:$0xff] %vm1058, %v1039
        %1073 = vst.msk [vmem:[#allocation2 + $0x70] sm:$0xff] %vm1058, %v1040
        %1074 = vst.msk [vmem:[#allocation2 + $0x78] sm:$0xff] %vm1058, %v1041
        %1075 = vst.msk [vmem:[#allocation2 + $0x80] sm:$0xff] %vm1058, %v1042
        %1076 = vst.msk [vmem:[#allocation2 + $0x88] sm:$0xff] %vm1058, %v1043
        %1077 = vst.msk [vmem:[#allocation2 + $0x90] sm:$0xff] %vm1058, %v1044
        %1078 = vst.msk [vmem:[#allocation2 + $0x98] sm:$0xff] %vm1058, %v1045
        %1079 = vst.msk [vmem:[#allocation2 + $0xa0] sm:$0xff] %vm1058, %v1046
        %1080 = vst.msk [vmem:[#allocation2 + $0xa8] sm:$0xff] %vm1058, %v1047
        %1081 = vst.msk [vmem:[#allocation2 + $0xb0] sm:$0xff] %vm1058, %v1048
        %1082 = vst.msk [vmem:[#allocation2 + $0xb8] sm:$0xff] %vm1058, %v1049
        %1083 = vst.msk [vmem:[#allocation2 + $0xc0] sm:$0xff] %vm1058, %v1050
        %1084 = vst.msk [vmem:[#allocation2 + $0xc8] sm:$0xff] %vm1058, %v1051
        %1085 = vst.msk [vmem:[#allocation2 + $0xd0] sm:$0xff] %vm1058, %v1052
        %1086 = vst.msk [vmem:[#allocation2 + $0xd8] sm:$0xff] %vm1058, %v1053
        %1087 = vst.msk [vmem:[#allocation2 + $0xe0] sm:$0xff] %vm1058, %v1054
        %1088 = vst.msk [vmem:[#allocation2 + $0xe8] sm:$0xff] %vm1058, %v1055
        %1089 = vst.msk [vmem:[#allocation2 + $0xf0] sm:$0xff] %vm1058, %v1056
        %1090 = vst.msk [vmem:[#allocation2 + $0xf8] sm:$0xff] %vm1058, %v1057
        %p1091 = scmp.eq.s32.totalorder %s22, 1
        // Predicated region
        $region87: #{sage_forward.2} parent=77 // pred_check
          %p1092 = pneg %p1091
        $region88: #{sage_forward.2} parent=77 // pred_check_branch
          %1094 = sbr.rel (%p1092) target = $region90
        $region89: #{sage_forward.2} parent=77 // pred_region
          %v1095 = vld [vmem:[#allocation2] sm:$0xff]
          %v1096 = vld [vmem:[#allocation2 + $0x8] sm:$0xff]
          %v1097 = vld [vmem:[#allocation2 + $0x10] sm:$0xff]
          %v1098 = vld [vmem:[#allocation2 + $0x18] sm:$0xff]
          %v1099 = vld [vmem:[#allocation2 + $0x20] sm:$0xff]
          %v1100 = vld [vmem:[#allocation2 + $0x28] sm:$0xff]
          %v1101 = vld [vmem:[#allocation2 + $0x30] sm:$0xff]
          %v1102 = vld [vmem:[#allocation2 + $0x38] sm:$0xff]
          %v1103 = vld [vmem:[#allocation2 + $0x40] sm:$0xff]
          %v1104 = vld [vmem:[#allocation2 + $0x48] sm:$0xff]
          %v1105 = vld [vmem:[#allocation2 + $0x50] sm:$0xff]
          %v1106 = vld [vmem:[#allocation2 + $0x58] sm:$0xff]
          %v1107 = vld [vmem:[#allocation2 + $0x60] sm:$0xff]
          %v1108 = vld [vmem:[#allocation2 + $0x68] sm:$0xff]
          %v1109 = vld [vmem:[#allocation2 + $0x70] sm:$0xff]
          %v1110 = vld [vmem:[#allocation2 + $0x78] sm:$0xff]
          %v1111 = vld [vmem:[#allocation2 + $0x80] sm:$0xff]
          %v1112 = vld [vmem:[#allocation2 + $0x88] sm:$0xff]
          %v1113 = vld [vmem:[#allocation2 + $0x90] sm:$0xff]
          %v1114 = vld [vmem:[#allocation2 + $0x98] sm:$0xff]
          %v1115 = vld [vmem:[#allocation2 + $0xa0] sm:$0xff]
          %v1116 = vld [vmem:[#allocation2 + $0xa8] sm:$0xff]
          %v1117 = vld [vmem:[#allocation2 + $0xb0] sm:$0xff]
          %v1118 = vld [vmem:[#allocation2 + $0xb8] sm:$0xff]
          %v1119 = vld [vmem:[#allocation2 + $0xc0] sm:$0xff]
          %v1120 = vld [vmem:[#allocation2 + $0xc8] sm:$0xff]
          %v1121 = vld [vmem:[#allocation2 + $0xd0] sm:$0xff]
          %v1122 = vld [vmem:[#allocation2 + $0xd8] sm:$0xff]
          %v1123 = vld [vmem:[#allocation2 + $0xe0] sm:$0xff]
          %v1124 = vld [vmem:[#allocation2 + $0xe8] sm:$0xff]
          %v1125 = vld [vmem:[#allocation2 + $0xf0] sm:$0xff]
          %v1126 = vld [vmem:[#allocation2 + $0xf8] sm:$0xff]
          %v1127 = vld [vmem:[%s3] sm:$0xff]
          %v1128 = vld [vmem:[%s3 + $0x8] sm:$0xff]
          %v1129 = vld [vmem:[%s467] sm:$0xff]
          %v1130 = vld [vmem:[%s467 + $0x8] sm:$0xff]
          %v1131 = vld [vmem:[%s467 + $0x10] sm:$0xff]
          %v1132 = vld [vmem:[%s467 + $0x18] sm:$0xff]
          %v1133 = vld [vmem:[%s467 + $0x20] sm:$0xff]
          %v1134 = vld [vmem:[%s467 + $0x28] sm:$0xff]
          %v1135 = vld [vmem:[%s467 + $0x30] sm:$0xff]
          %v1136 = vld [vmem:[%s467 + $0x38] sm:$0xff]
          %v1137 = vld [vmem:[%s467 + $0x40] sm:$0xff]
          %v1138 = vld [vmem:[%s467 + $0x48] sm:$0xff]
          %v1139 = vld [vmem:[%s467 + $0x50] sm:$0xff]
          %v1140 = vld [vmem:[%s467 + $0x58] sm:$0xff]
          %v1141 = vld [vmem:[%s467 + $0x60] sm:$0xff]
          %v1142 = vld [vmem:[%s467 + $0x68] sm:$0xff]
          %v1143 = vld [vmem:[%s467 + $0x70] sm:$0xff]
          %v1144 = vld [vmem:[%s467 + $0x78] sm:$0xff]
          %v1145 = vld [vmem:[%s467 + $0x80] sm:$0xff]
          %v1146 = vld [vmem:[%s467 + $0x88] sm:$0xff]
          %v1147 = vld [vmem:[%s467 + $0x90] sm:$0xff]
          %v1148 = vld [vmem:[%s467 + $0x98] sm:$0xff]
          %v1149 = vld [vmem:[%s467 + $0xa0] sm:$0xff]
          %v1150 = vld [vmem:[%s467 + $0xa8] sm:$0xff]
          %v1151 = vld [vmem:[%s467 + $0xb0] sm:$0xff]
          %v1152 = vld [vmem:[%s467 + $0xb8] sm:$0xff]
          %v1153 = vld [vmem:[%s467 + $0xc0] sm:$0xff]
          %v1154 = vld [vmem:[%s467 + $0xc8] sm:$0xff]
          %v1155 = vld [vmem:[%s467 + $0xd0] sm:$0xff]
          %v1156 = vld [vmem:[%s467 + $0xd8] sm:$0xff]
          %v1157 = vld [vmem:[%s467 + $0xe0] sm:$0xff]
          %v1158 = vld [vmem:[%s467 + $0xe8] sm:$0xff]
          %v1159 = vld [vmem:[%s467 + $0xf0] sm:$0xff]
          %v1160 = vld [vmem:[%s467 + $0xf8] sm:$0xff]
          %v1161 = vld [vmem:[%s4] sm:$0xff]
          %v1162 = vld [vmem:[%s4 + $0x8] sm:$0xff]
          %v1164 = vsel %vm1058, %v1129, 0
          %v1167 = vsel %vm1058, %v1130, 0
          %v1170 = vsel %vm1058, %v1131, 0
          %v1173 = vsel %vm1058, %v1132, 0
          %v1176 = vsel %vm1058, %v1133, 0
          %v1179 = vsel %vm1058, %v1134, 0
          %v1182 = vsel %vm1058, %v1135, 0
          %v1185 = vsel %vm1058, %v1136, 0
          %v1188 = vsel %vm1058, %v1137, 0
          %v1191 = vsel %vm1058, %v1138, 0
          %v1194 = vsel %vm1058, %v1139, 0
          %v1197 = vsel %vm1058, %v1140, 0
          %v1200 = vsel %vm1058, %v1141, 0
          %v1203 = vsel %vm1058, %v1142, 0
          %v1206 = vsel %vm1058, %v1143, 0
          %v1209 = vsel %vm1058, %v1144, 0
          %v1212 = vsel %vm1058, %v1145, 0
          %v1215 = vsel %vm1058, %v1146, 0
          %v1218 = vsel %vm1058, %v1147, 0
          %v1221 = vsel %vm1058, %v1148, 0
          %v1224 = vsel %vm1058, %v1149, 0
          %v1227 = vsel %vm1058, %v1150, 0
          %v1230 = vsel %vm1058, %v1151, 0
          %v1233 = vsel %vm1058, %v1152, 0
          %v1236 = vsel %vm1058, %v1153, 0
          %v1239 = vsel %vm1058, %v1154, 0
          %v1242 = vsel %vm1058, %v1155, 0
          %v1245 = vsel %vm1058, %v1156, 0
          %v1248 = vsel %vm1058, %v1157, 0
          %v1251 = vsel %vm1058, %v1158, 0
          %v1254 = vsel %vm1058, %v1159, 0
          %v1257 = vsel %vm1058, %v1160, 0
          %1259 = vmatprep.subr.mxu0 0.0
          %1260 = vmatpush1.msra.mxu0 %v1161
          %1261 = vmatprep.subr.mxu0 0.0
          %1262 = vmatpush1.msra.mxu0 %v1162
          %1263 = vmatprep.subr.mxu0 0.0
          %1264 = vmatpush1.msra.mxu0 0.0
          %1265 = vmatprep.subr.mxu0 0.0
          %1266 = vmatpush1.msra.mxu0 0.0
          %1267 = vmatprep.subr.mxu0 0.0
          %1268 = vmatpush1.msra.mxu0 0.0
          %1269 = vmatprep.subr.mxu0 0.0
          %1270 = vmatpush1.msra.mxu0 0.0
          %1271 = vmatprep.subr.mxu0 0.0
          %1272 = vmatpush1.msra.mxu0 0.0
          %1273 = vmatprep.subr.mxu0 0.0
          %1274 = vmatpush1.msra.mxu0 0.0
          %1275 = vmatprep.subr.mxu0 0.0
          %1276 = vmatpush1.msra.mxu0 0.0
          %1277 = vmatprep.subr.mxu0 0.0
          %1278 = vmatpush1.msra.mxu0 0.0
          %1279 = vmatprep.subr.mxu0 0.0
          %1280 = vmatpush1.msra.mxu0 0.0
          %1281 = vmatprep.subr.mxu0 0.0
          %1282 = vmatpush1.msra.mxu0 0.0
          %1283 = vmatprep.subr.mxu0 0.0
          %1284 = vmatpush1.msra.mxu0 0.0
          %1285 = vmatprep.subr.mxu0 0.0
          %1286 = vmatpush1.msra.mxu0 0.0
          %1287 = vmatprep.subr.mxu0 0.0
          %1288 = vmatpush1.msra.mxu0 0.0
          %1289 = vmatprep.subr.mxu0 0.0
          %1290 = vmatpush1.msra.mxu0 0.0
          %1291 = vmatprep.subr.mxu0 0.0
          %1292 = vmatpush1.msra.mxu0 0.0
          %1293 = vmatprep.subr.mxu0 0.0
          %1294 = vmatpush1.msra.mxu0 0.0
          %1295 = vmatprep.subr.mxu0 0.0
          %1296 = vmatpush1.msra.mxu0 0.0
          %1297 = vmatprep.subr.mxu0 0.0
          %1298 = vmatpush1.msra.mxu0 0.0
          %1299 = vmatprep.subr.mxu0 0.0
          %1300 = vmatpush1.msra.mxu0 0.0
          %1301 = vmatprep.subr.mxu0 0.0
          %1302 = vmatpush1.msra.mxu0 0.0
          %1303 = vmatprep.subr.mxu0 0.0
          %1304 = vmatpush1.msra.mxu0 0.0
          %1305 = vmatprep.subr.mxu0 0.0
          %1306 = vmatpush1.msra.mxu0 0.0
          %1307 = vmatprep.subr.mxu0 0.0
          %1308 = vmatpush1.msra.mxu0 0.0
          %1309 = vmatprep.subr.mxu0 0.0
          %1310 = vmatpush1.msra.mxu0 0.0
          %1311 = vmatprep.subr.mxu0 0.0
          %1312 = vmatpush1.msra.mxu0 0.0
          %1313 = vmatprep.subr.mxu0 0.0
          %1314 = vmatpush1.msra.mxu0 0.0
          %1315 = vmatprep.subr.mxu0 0.0
          %1316 = vmatpush1.msra.mxu0 0.0
          %1317 = vmatprep.subr.mxu0 0.0
          %1318 = vmatpush1.msra.mxu0 0.0
          %1319 = vmatprep.subr.mxu0 0.0
          %1320 = vmatpush1.msra.mxu0 0.0
          %1321 = vmatprep.subr.mxu0 0.0
          %1322 = vmatpush1.msra.mxu0 0.0
          %1323 = vmatprep.mubr.f32.mxu0 0.0
          %1324 = vmatmul.mubr.f32.gmra.mrb[0].mxu0 %v1164
          %v1325 = vpop.f32.mrb[0].mxu0
          %v1326 = vadd.f32 0.0, %v1325
          %v1327 = vpop.f32.mrb[0].mxu0
          %1328 = vmatprep.mubr.f32.mxu0 0.0
          %1329 = vmatmul.mubr.f32.gmra.mrb[0].mxu0 %v1167
          %v1330 = vpop.f32.mrb[0].mxu0
          %v1331 = vadd.f32 0.0, %v1330
          %v1332 = vpop.f32.mrb[0].mxu0
          %1333 = vmatprep.mubr.f32.mxu0 0.0
          %1334 = vmatmul.mubr.f32.gmra.mrb[0].mxu0 %v1170
          %v1335 = vpop.f32.mrb[0].mxu0
          %v1336 = vadd.f32 0.0, %v1335
          %v1337 = vpop.f32.mrb[0].mxu0
          %1338 = vmatprep.mubr.f32.mxu0 0.0
          %1339 = vmatmul.mubr.f32.gmra.mrb[0].mxu0 %v1173
          %v1340 = vpop.f32.mrb[0].mxu0
          %v1341 = vadd.f32 0.0, %v1340
          %v1342 = vpop.f32.mrb[0].mxu0
          %1343 = vmatprep.mubr.f32.mxu0 0.0
          %1344 = vmatmul.mubr.f32.gmra.mrb[0].mxu0 %v1176
          %v1345 = vpop.f32.mrb[0].mxu0
          %v1346 = vadd.f32 0.0, %v1345
          %v1347 = vpop.f32.mrb[0].mxu0
          %1348 = vmatprep.mubr.f32.mxu0 0.0
          %1349 = vmatmul.mubr.f32.gmra.mrb[0].mxu0 %v1179
          %v1350 = vpop.f32.mrb[0].mxu0
          %v1351 = vadd.f32 0.0, %v1350
          %v1352 = vpop.f32.mrb[0].mxu0
          %1353 = vmatprep.mubr.f32.mxu0 0.0
          %1354 = vmatmul.mubr.f32.gmra.mrb[0].mxu0 %v1182
          %v1355 = vpop.f32.mrb[0].mxu0
          %v1356 = vadd.f32 0.0, %v1355
          %v1357 = vpop.f32.mrb[0].mxu0
          %1358 = vmatprep.mubr.f32.mxu0 0.0
          %1359 = vmatmul.mubr.f32.gmra.mrb[0].mxu0 %v1185
          %v1360 = vpop.f32.mrb[0].mxu0
          %v1361 = vadd.f32 0.0, %v1360
          %v1362 = vpop.f32.mrb[0].mxu0
          %1363 = vmatprep.mubr.f32.mxu0 0.0
          %1364 = vmatmul.mubr.f32.gmra.mrb[0].mxu0 %v1188
          %v1365 = vpop.f32.mrb[0].mxu0
          %v1366 = vadd.f32 0.0, %v1365
          %v1367 = vpop.f32.mrb[0].mxu0
          %1368 = vmatprep.mubr.f32.mxu0 0.0
          %1369 = vmatmul.mubr.f32.gmra.mrb[0].mxu0 %v1191
          %v1370 = vpop.f32.mrb[0].mxu0
          %v1371 = vadd.f32 0.0, %v1370
          %v1372 = vpop.f32.mrb[0].mxu0
          %1373 = vmatprep.mubr.f32.mxu0 0.0
          %1374 = vmatmul.mubr.f32.gmra.mrb[0].mxu0 %v1194
          %v1375 = vpop.f32.mrb[0].mxu0
          %v1376 = vadd.f32 0.0, %v1375
          %v1377 = vpop.f32.mrb[0].mxu0
          %1378 = vmatprep.mubr.f32.mxu0 0.0
          %1379 = vmatmul.mubr.f32.gmra.mrb[0].mxu0 %v1197
          %v1380 = vpop.f32.mrb[0].mxu0
          %v1381 = vadd.f32 0.0, %v1380
          %v1382 = vpop.f32.mrb[0].mxu0
          %1383 = vmatprep.mubr.f32.mxu0 0.0
          %1384 = vmatmul.mubr.f32.gmra.mrb[0].mxu0 %v1200
          %v1385 = vpop.f32.mrb[0].mxu0
          %v1386 = vadd.f32 0.0, %v1385
          %v1387 = vpop.f32.mrb[0].mxu0
          %1388 = vmatprep.mubr.f32.mxu0 0.0
          %1389 = vmatmul.mubr.f32.gmra.mrb[0].mxu0 %v1203
          %v1390 = vpop.f32.mrb[0].mxu0
          %v1391 = vadd.f32 0.0, %v1390
          %v1392 = vpop.f32.mrb[0].mxu0
          %1393 = vmatprep.mubr.f32.mxu0 0.0
          %1394 = vmatmul.mubr.f32.gmra.mrb[0].mxu0 %v1206
          %v1395 = vpop.f32.mrb[0].mxu0
          %v1396 = vadd.f32 0.0, %v1395
          %v1397 = vpop.f32.mrb[0].mxu0
          %1398 = vmatprep.mubr.f32.mxu0 0.0
          %1399 = vmatmul.mubr.f32.gmra.mrb[0].mxu0 %v1209
          %v1400 = vpop.f32.mrb[0].mxu0
          %v1401 = vadd.f32 0.0, %v1400
          %v1402 = vpop.f32.mrb[0].mxu0
          %1403 = vmatprep.mubr.f32.mxu0 0.0
          %1404 = vmatmul.mubr.f32.gmra.mrb[0].mxu0 %v1212
          %v1405 = vpop.f32.mrb[0].mxu0
          %v1406 = vadd.f32 0.0, %v1405
          %v1407 = vpop.f32.mrb[0].mxu0
          %1408 = vmatprep.mubr.f32.mxu0 0.0
          %1409 = vmatmul.mubr.f32.gmra.mrb[0].mxu0 %v1215
          %v1410 = vpop.f32.mrb[0].mxu0
          %v1411 = vadd.f32 0.0, %v1410
          %v1412 = vpop.f32.mrb[0].mxu0
          %1413 = vmatprep.mubr.f32.mxu0 0.0
          %1414 = vmatmul.mubr.f32.gmra.mrb[0].mxu0 %v1218
          %v1415 = vpop.f32.mrb[0].mxu0
          %v1416 = vadd.f32 0.0, %v1415
          %v1417 = vpop.f32.mrb[0].mxu0
          %1418 = vmatprep.mubr.f32.mxu0 0.0
          %1419 = vmatmul.mubr.f32.gmra.mrb[0].mxu0 %v1221
          %v1420 = vpop.f32.mrb[0].mxu0
          %v1421 = vadd.f32 0.0, %v1420
          %v1422 = vpop.f32.mrb[0].mxu0
          %1423 = vmatprep.mubr.f32.mxu0 0.0
          %1424 = vmatmul.mubr.f32.gmra.mrb[0].mxu0 %v1224
          %v1425 = vpop.f32.mrb[0].mxu0
          %v1426 = vadd.f32 0.0, %v1425
          %v1427 = vpop.f32.mrb[0].mxu0
          %1428 = vmatprep.mubr.f32.mxu0 0.0
          %1429 = vmatmul.mubr.f32.gmra.mrb[0].mxu0 %v1227
          %v1430 = vpop.f32.mrb[0].mxu0
          %v1431 = vadd.f32 0.0, %v1430
          %v1432 = vpop.f32.mrb[0].mxu0
          %1433 = vmatprep.mubr.f32.mxu0 0.0
          %1434 = vmatmul.mubr.f32.gmra.mrb[0].mxu0 %v1230
          %v1435 = vpop.f32.mrb[0].mxu0
          %v1436 = vadd.f32 0.0, %v1435
          %v1437 = vpop.f32.mrb[0].mxu0
          %1438 = vmatprep.mubr.f32.mxu0 0.0
          %1439 = vmatmul.mubr.f32.gmra.mrb[0].mxu0 %v1233
          %v1440 = vpop.f32.mrb[0].mxu0
          %v1441 = vadd.f32 0.0, %v1440
          %v1442 = vpop.f32.mrb[0].mxu0
          %1443 = vmatprep.mubr.f32.mxu0 0.0
          %1444 = vmatmul.mubr.f32.gmra.mrb[0].mxu0 %v1236
          %v1445 = vpop.f32.mrb[0].mxu0
          %v1446 = vadd.f32 0.0, %v1445
          %v1447 = vpop.f32.mrb[0].mxu0
          %1448 = vmatprep.mubr.f32.mxu0 0.0
          %1449 = vmatmul.mubr.f32.gmra.mrb[0].mxu0 %v1239
          %v1450 = vpop.f32.mrb[0].mxu0
          %v1451 = vadd.f32 0.0, %v1450
          %v1452 = vpop.f32.mrb[0].mxu0
          %1453 = vmatprep.mubr.f32.mxu0 0.0
          %1454 = vmatmul.mubr.f32.gmra.mrb[0].mxu0 %v1242
          %v1455 = vpop.f32.mrb[0].mxu0
          %v1456 = vadd.f32 0.0, %v1455
          %v1457 = vpop.f32.mrb[0].mxu0
          %1458 = vmatprep.mubr.f32.mxu0 0.0
          %1459 = vmatmul.mubr.f32.gmra.mrb[0].mxu0 %v1245
          %v1460 = vpop.f32.mrb[0].mxu0
          %v1461 = vadd.f32 0.0, %v1460
          %v1462 = vpop.f32.mrb[0].mxu0
          %1463 = vmatprep.mubr.f32.mxu0 0.0
          %1464 = vmatmul.mubr.f32.gmra.mrb[0].mxu0 %v1248
          %v1465 = vpop.f32.mrb[0].mxu0
          %v1466 = vadd.f32 0.0, %v1465
          %v1467 = vpop.f32.mrb[0].mxu0
          %1468 = vmatprep.mubr.f32.mxu0 0.0
          %1469 = vmatmul.mubr.f32.gmra.mrb[0].mxu0 %v1251
          %v1470 = vpop.f32.mrb[0].mxu0
          %v1471 = vadd.f32 0.0, %v1470
          %v1472 = vpop.f32.mrb[0].mxu0
          %1473 = vmatprep.mubr.f32.mxu0 0.0
          %1474 = vmatmul.mubr.f32.gmra.mrb[0].mxu0 %v1254
          %v1475 = vpop.f32.mrb[0].mxu0
          %v1476 = vadd.f32 0.0, %v1475
          %v1477 = vpop.f32.mrb[0].mxu0
          %1478 = vmatprep.mubr.f32.mxu0 0.0
          %1479 = vmatmul.mubr.f32.gmra.mrb[0].mxu0 %v1257
          %v1480 = vpop.f32.mrb[0].mxu0
          %v1481 = vadd.f32 0.0, %v1480
          %v1482 = vpop.f32.mrb[0].mxu0
          %1483 = vdwg.mxu0
          %v1485 = vsel %vm1058, %v1095, 0
          %v1488 = vsel %vm1058, %v1096, 0
          %v1491 = vsel %vm1058, %v1097, 0
          %v1494 = vsel %vm1058, %v1098, 0
          %v1497 = vsel %vm1058, %v1099, 0
          %v1500 = vsel %vm1058, %v1100, 0
          %v1503 = vsel %vm1058, %v1101, 0
          %v1506 = vsel %vm1058, %v1102, 0
          %v1509 = vsel %vm1058, %v1103, 0
          %v1512 = vsel %vm1058, %v1104, 0
          %v1515 = vsel %vm1058, %v1105, 0
          %v1518 = vsel %vm1058, %v1106, 0
          %v1521 = vsel %vm1058, %v1107, 0
          %v1524 = vsel %vm1058, %v1108, 0
          %v1527 = vsel %vm1058, %v1109, 0
          %v1530 = vsel %vm1058, %v1110, 0
          %v1533 = vsel %vm1058, %v1111, 0
          %v1536 = vsel %vm1058, %v1112, 0
          %v1539 = vsel %vm1058, %v1113, 0
          %v1542 = vsel %vm1058, %v1114, 0
          %v1545 = vsel %vm1058, %v1115, 0
          %v1548 = vsel %vm1058, %v1116, 0
          %v1551 = vsel %vm1058, %v1117, 0
          %v1554 = vsel %vm1058, %v1118, 0
          %v1557 = vsel %vm1058, %v1119, 0
          %v1560 = vsel %vm1058, %v1120, 0
          %v1563 = vsel %vm1058, %v1121, 0
          %v1566 = vsel %vm1058, %v1122, 0
          %v1569 = vsel %vm1058, %v1123, 0
          %v1572 = vsel %vm1058, %v1124, 0
          %v1575 = vsel %vm1058, %v1125, 0
          %v1578 = vsel %vm1058, %v1126, 0
          %1580 = vmatprep.subr.mxu0 0.0
          %1581 = vmatpush1.msra.mxu0 %v1127
          %1582 = vmatprep.subr.mxu0 0.0
          %1583 = vmatpush1.msra.mxu0 %v1128
          %1584 = vmatprep.subr.mxu0 0.0
          %1585 = vmatpush1.msra.mxu0 0.0
          %1586 = vmatprep.subr.mxu0 0.0
          %1587 = vmatpush1.msra.mxu0 0.0
          %1588 = vmatprep.subr.mxu0 0.0
          %1589 = vmatpush1.msra.mxu0 0.0
          %1590 = vmatprep.subr.mxu0 0.0
          %1591 = vmatpush1.msra.mxu0 0.0
          %1592 = vmatprep.subr.mxu0 0.0
          %1593 = vmatpush1.msra.mxu0 0.0
          %1594 = vmatprep.subr.mxu0 0.0
          %1595 = vmatpush1.msra.mxu0 0.0
          %1596 = vmatprep.subr.mxu0 0.0
          %1597 = vmatpush1.msra.mxu0 0.0
          %1598 = vmatprep.subr.mxu0 0.0
          %1599 = vmatpush1.msra.mxu0 0.0
          %1600 = vmatprep.subr.mxu0 0.0
          %1601 = vmatpush1.msra.mxu0 0.0
          %1602 = vmatprep.subr.mxu0 0.0
          %1603 = vmatpush1.msra.mxu0 0.0
          %1604 = vmatprep.subr.mxu0 0.0
          %1605 = vmatpush1.msra.mxu0 0.0
          %1606 = vmatprep.subr.mxu0 0.0
          %1607 = vmatpush1.msra.mxu0 0.0
          %1608 = vmatprep.subr.mxu0 0.0
          %1609 = vmatpush1.msra.mxu0 0.0
          %1610 = vmatprep.subr.mxu0 0.0
          %1611 = vmatpush1.msra.mxu0 0.0
          %1612 = vmatprep.subr.mxu0 0.0
          %1613 = vmatpush1.msra.mxu0 0.0
          %1614 = vmatprep.subr.mxu0 0.0
          %1615 = vmatpush1.msra.mxu0 0.0
          %1616 = vmatprep.subr.mxu0 0.0
          %1617 = vmatpush1.msra.mxu0 0.0
          %1618 = vmatprep.subr.mxu0 0.0
          %1619 = vmatpush1.msra.mxu0 0.0
          %1620 = vmatprep.subr.mxu0 0.0
          %1621 = vmatpush1.msra.mxu0 0.0
          %1622 = vmatprep.subr.mxu0 0.0
          %1623 = vmatpush1.msra.mxu0 0.0
          %1624 = vmatprep.subr.mxu0 0.0
          %1625 = vmatpush1.msra.mxu0 0.0
          %1626 = vmatprep.subr.mxu0 0.0
          %1627 = vmatpush1.msra.mxu0 0.0
          %1628 = vmatprep.subr.mxu0 0.0
          %1629 = vmatpush1.msra.mxu0 0.0
          %1630 = vmatprep.subr.mxu0 0.0
          %1631 = vmatpush1.msra.mxu0 0.0
          %1632 = vmatprep.subr.mxu0 0.0
          %1633 = vmatpush1.msra.mxu0 0.0
          %1634 = vmatprep.subr.mxu0 0.0
          %1635 = vmatpush1.msra.mxu0 0.0
          %1636 = vmatprep.subr.mxu0 0.0
          %1637 = vmatpush1.msra.mxu0 0.0
          %1638 = vmatprep.subr.mxu0 0.0
          %1639 = vmatpush1.msra.mxu0 0.0
          %1640 = vmatprep.subr.mxu0 0.0
          %1641 = vmatpush1.msra.mxu0 0.0
          %1642 = vmatprep.subr.mxu0 0.0
          %1643 = vmatpush1.msra.mxu0 0.0
          %1644 = vmatprep.mubr.f32.mxu0 0.0
          %1645 = vmatmul.mubr.f32.gmra.mrb[0].mxu0 %v1485
          %v1646 = vpop.f32.mrb[0].mxu0
          %v1647 = vadd.f32 %v1326, %v1646
          %v1648 = vpop.f32.mrb[0].mxu0
          %1649 = vmatprep.mubr.f32.mxu0 0.0
          %1650 = vmatmul.mubr.f32.gmra.mrb[0].mxu0 %v1488
          %v1651 = vpop.f32.mrb[0].mxu0
          %v1652 = vadd.f32 %v1331, %v1651
          %v1653 = vpop.f32.mrb[0].mxu0
          %1654 = vmatprep.mubr.f32.mxu0 0.0
          %1655 = vmatmul.mubr.f32.gmra.mrb[0].mxu0 %v1491
          %v1656 = vpop.f32.mrb[0].mxu0
          %v1657 = vadd.f32 %v1336, %v1656
          %v1658 = vpop.f32.mrb[0].mxu0
          %1659 = vmatprep.mubr.f32.mxu0 0.0
          %1660 = vmatmul.mubr.f32.gmra.mrb[0].mxu0 %v1494
          %v1661 = vpop.f32.mrb[0].mxu0
          %v1662 = vadd.f32 %v1341, %v1661
          %v1663 = vpop.f32.mrb[0].mxu0
          %1664 = vmatprep.mubr.f32.mxu0 0.0
          %1665 = vmatmul.mubr.f32.gmra.mrb[0].mxu0 %v1497
          %v1666 = vpop.f32.mrb[0].mxu0
          %v1667 = vadd.f32 %v1346, %v1666
          %v1668 = vpop.f32.mrb[0].mxu0
          %1669 = vmatprep.mubr.f32.mxu0 0.0
          %1670 = vmatmul.mubr.f32.gmra.mrb[0].mxu0 %v1500
          %v1671 = vpop.f32.mrb[0].mxu0
          %v1672 = vadd.f32 %v1351, %v1671
          %v1673 = vpop.f32.mrb[0].mxu0
          %1674 = vmatprep.mubr.f32.mxu0 0.0
          %1675 = vmatmul.mubr.f32.gmra.mrb[0].mxu0 %v1503
          %v1676 = vpop.f32.mrb[0].mxu0
          %v1677 = vadd.f32 %v1356, %v1676
          %v1678 = vpop.f32.mrb[0].mxu0
          %1679 = vmatprep.mubr.f32.mxu0 0.0
          %1680 = vmatmul.mubr.f32.gmra.mrb[0].mxu0 %v1506
          %v1681 = vpop.f32.mrb[0].mxu0
          %v1682 = vadd.f32 %v1361, %v1681
          %v1683 = vpop.f32.mrb[0].mxu0
          %1684 = vmatprep.mubr.f32.mxu0 0.0
          %1685 = vmatmul.mubr.f32.gmra.mrb[0].mxu0 %v1509
          %v1686 = vpop.f32.mrb[0].mxu0
          %v1687 = vadd.f32 %v1366, %v1686
          %v1688 = vpop.f32.mrb[0].mxu0
          %1689 = vmatprep.mubr.f32.mxu0 0.0
          %1690 = vmatmul.mubr.f32.gmra.mrb[0].mxu0 %v1512
          %v1691 = vpop.f32.mrb[0].mxu0
          %v1692 = vadd.f32 %v1371, %v1691
          %v1693 = vpop.f32.mrb[0].mxu0
          %1694 = vmatprep.mubr.f32.mxu0 0.0
          %1695 = vmatmul.mubr.f32.gmra.mrb[0].mxu0 %v1515
          %v1696 = vpop.f32.mrb[0].mxu0
          %v1697 = vadd.f32 %v1376, %v1696
          %v1698 = vpop.f32.mrb[0].mxu0
          %1699 = vmatprep.mubr.f32.mxu0 0.0
          %1700 = vmatmul.mubr.f32.gmra.mrb[0].mxu0 %v1518
          %v1701 = vpop.f32.mrb[0].mxu0
          %v1702 = vadd.f32 %v1381, %v1701
          %v1703 = vpop.f32.mrb[0].mxu0
          %1704 = vmatprep.mubr.f32.mxu0 0.0
          %1705 = vmatmul.mubr.f32.gmra.mrb[0].mxu0 %v1521
          %v1706 = vpop.f32.mrb[0].mxu0
          %v1707 = vadd.f32 %v1386, %v1706
          %v1708 = vpop.f32.mrb[0].mxu0
          %1709 = vmatprep.mubr.f32.mxu0 0.0
          %1710 = vmatmul.mubr.f32.gmra.mrb[0].mxu0 %v1524
          %v1711 = vpop.f32.mrb[0].mxu0
          %v1712 = vadd.f32 %v1391, %v1711
          %v1713 = vpop.f32.mrb[0].mxu0
          %1714 = vmatprep.mubr.f32.mxu0 0.0
          %1715 = vmatmul.mubr.f32.gmra.mrb[0].mxu0 %v1527
          %v1716 = vpop.f32.mrb[0].mxu0
          %v1717 = vadd.f32 %v1396, %v1716
          %v1718 = vpop.f32.mrb[0].mxu0
          %1719 = vmatprep.mubr.f32.mxu0 0.0
          %1720 = vmatmul.mubr.f32.gmra.mrb[0].mxu0 %v1530
          %v1721 = vpop.f32.mrb[0].mxu0
          %v1722 = vadd.f32 %v1401, %v1721
          %v1723 = vpop.f32.mrb[0].mxu0
          %1724 = vmatprep.mubr.f32.mxu0 0.0
          %1725 = vmatmul.mubr.f32.gmra.mrb[0].mxu0 %v1533
          %v1726 = vpop.f32.mrb[0].mxu0
          %v1727 = vadd.f32 %v1406, %v1726
          %v1728 = vpop.f32.mrb[0].mxu0
          %1729 = vmatprep.mubr.f32.mxu0 0.0
          %1730 = vmatmul.mubr.f32.gmra.mrb[0].mxu0 %v1536
          %v1731 = vpop.f32.mrb[0].mxu0
          %v1732 = vadd.f32 %v1411, %v1731
          %v1733 = vpop.f32.mrb[0].mxu0
          %1734 = vmatprep.mubr.f32.mxu0 0.0
          %1735 = vmatmul.mubr.f32.gmra.mrb[0].mxu0 %v1539
          %v1736 = vpop.f32.mrb[0].mxu0
          %v1737 = vadd.f32 %v1416, %v1736
          %v1738 = vpop.f32.mrb[0].mxu0
          %1739 = vmatprep.mubr.f32.mxu0 0.0
          %1740 = vmatmul.mubr.f32.gmra.mrb[0].mxu0 %v1542
          %v1741 = vpop.f32.mrb[0].mxu0
          %v1742 = vadd.f32 %v1421, %v1741
          %v1743 = vpop.f32.mrb[0].mxu0
          %1744 = vmatprep.mubr.f32.mxu0 0.0
          %1745 = vmatmul.mubr.f32.gmra.mrb[0].mxu0 %v1545
          %v1746 = vpop.f32.mrb[0].mxu0
          %v1747 = vadd.f32 %v1426, %v1746
          %v1748 = vpop.f32.mrb[0].mxu0
          %1749 = vmatprep.mubr.f32.mxu0 0.0
          %1750 = vmatmul.mubr.f32.gmra.mrb[0].mxu0 %v1548
          %v1751 = vpop.f32.mrb[0].mxu0
          %v1752 = vadd.f32 %v1431, %v1751
          %v1753 = vpop.f32.mrb[0].mxu0
          %1754 = vmatprep.mubr.f32.mxu0 0.0
          %1755 = vmatmul.mubr.f32.gmra.mrb[0].mxu0 %v1551
          %v1756 = vpop.f32.mrb[0].mxu0
          %v1757 = vadd.f32 %v1436, %v1756
          %v1758 = vpop.f32.mrb[0].mxu0
          %1759 = vmatprep.mubr.f32.mxu0 0.0
          %1760 = vmatmul.mubr.f32.gmra.mrb[0].mxu0 %v1554
          %v1761 = vpop.f32.mrb[0].mxu0
          %v1762 = vadd.f32 %v1441, %v1761
          %v1763 = vpop.f32.mrb[0].mxu0
          %1764 = vmatprep.mubr.f32.mxu0 0.0
          %1765 = vmatmul.mubr.f32.gmra.mrb[0].mxu0 %v1557
          %v1766 = vpop.f32.mrb[0].mxu0
          %v1767 = vadd.f32 %v1446, %v1766
          %v1768 = vpop.f32.mrb[0].mxu0
          %1769 = vmatprep.mubr.f32.mxu0 0.0
          %1770 = vmatmul.mubr.f32.gmra.mrb[0].mxu0 %v1560
          %v1771 = vpop.f32.mrb[0].mxu0
          %v1772 = vadd.f32 %v1451, %v1771
          %v1773 = vpop.f32.mrb[0].mxu0
          %1774 = vmatprep.mubr.f32.mxu0 0.0
          %1775 = vmatmul.mubr.f32.gmra.mrb[0].mxu0 %v1563
          %v1776 = vpop.f32.mrb[0].mxu0
          %v1777 = vadd.f32 %v1456, %v1776
          %v1778 = vpop.f32.mrb[0].mxu0
          %1779 = vmatprep.mubr.f32.mxu0 0.0
          %1780 = vmatmul.mubr.f32.gmra.mrb[0].mxu0 %v1566
          %v1781 = vpop.f32.mrb[0].mxu0
          %v1782 = vadd.f32 %v1461, %v1781
          %v1783 = vpop.f32.mrb[0].mxu0
          %1784 = vmatprep.mubr.f32.mxu0 0.0
          %1785 = vmatmul.mubr.f32.gmra.mrb[0].mxu0 %v1569
          %v1786 = vpop.f32.mrb[0].mxu0
          %v1787 = vadd.f32 %v1466, %v1786
          %v1788 = vpop.f32.mrb[0].mxu0
          %1789 = vmatprep.mubr.f32.mxu0 0.0
          %1790 = vmatmul.mubr.f32.gmra.mrb[0].mxu0 %v1572
          %v1791 = vpop.f32.mrb[0].mxu0
          %v1792 = vadd.f32 %v1471, %v1791
          %v1793 = vpop.f32.mrb[0].mxu0
          %1794 = vmatprep.mubr.f32.mxu0 0.0
          %1795 = vmatmul.mubr.f32.gmra.mrb[0].mxu0 %v1575
          %v1796 = vpop.f32.mrb[0].mxu0
          %v1797 = vadd.f32 %v1476, %v1796
          %v1798 = vpop.f32.mrb[0].mxu0
          %1799 = vmatprep.mubr.f32.mxu0 0.0
          %1800 = vmatmul.mubr.f32.gmra.mrb[0].mxu0 %v1578
          %v1801 = vpop.f32.mrb[0].mxu0
          %v1802 = vadd.f32 %v1481, %v1801
          %v1803 = vpop.f32.mrb[0].mxu0
          %1804 = vdwg.mxu0
          %v1805 = vld [vmem:[%s5] sm:$0x1]
          %v1807 = vlaneseq
          %v1808 = vshrl.u32 %v1807, 7
          %v1809 = vsub.s32 0, %v1808
          %v1810 = vrot.slane %v1805, %v1809
          %v1812 = vadd.f32 %v1647, %v1810
          %v1813 = vadd.f32 %v1652, %v1810
          %v1814 = vadd.f32 %v1657, %v1810
          %v1815 = vadd.f32 %v1662, %v1810
          %v1816 = vadd.f32 %v1667, %v1810
          %v1817 = vadd.f32 %v1672, %v1810
          %v1818 = vadd.f32 %v1677, %v1810
          %v1819 = vadd.f32 %v1682, %v1810
          %v1820 = vadd.f32 %v1687, %v1810
          %v1821 = vadd.f32 %v1692, %v1810
          %v1822 = vadd.f32 %v1697, %v1810
          %v1823 = vadd.f32 %v1702, %v1810
          %v1824 = vadd.f32 %v1707, %v1810
          %v1825 = vadd.f32 %v1712, %v1810
          %v1826 = vadd.f32 %v1717, %v1810
          %v1827 = vadd.f32 %v1722, %v1810
          %v1828 = vadd.f32 %v1727, %v1810
          %v1829 = vadd.f32 %v1732, %v1810
          %v1830 = vadd.f32 %v1737, %v1810
          %v1831 = vadd.f32 %v1742, %v1810
          %v1832 = vadd.f32 %v1747, %v1810
          %v1833 = vadd.f32 %v1752, %v1810
          %v1834 = vadd.f32 %v1757, %v1810
          %v1835 = vadd.f32 %v1762, %v1810
          %v1836 = vadd.f32 %v1767, %v1810
          %v1837 = vadd.f32 %v1772, %v1810
          %v1838 = vadd.f32 %v1777, %v1810
          %v1839 = vadd.f32 %v1782, %v1810
          %v1840 = vadd.f32 %v1787, %v1810
          %v1841 = vadd.f32 %v1792, %v1810
          %v1842 = vadd.f32 %v1797, %v1810
          %v1843 = vadd.f32 %v1802, %v1810
          %v1844 = vmax.f32 %v1812, 0.0
          %v1845 = vmax.f32 %v1813, 0.0
          %v1846 = vmax.f32 %v1814, 0.0
          %v1847 = vmax.f32 %v1815, 0.0
          %v1848 = vmax.f32 %v1816, 0.0
          %v1849 = vmax.f32 %v1817, 0.0
          %v1850 = vmax.f32 %v1818, 0.0
          %v1851 = vmax.f32 %v1819, 0.0
          %v1852 = vmax.f32 %v1820, 0.0
          %v1853 = vmax.f32 %v1821, 0.0
          %v1854 = vmax.f32 %v1822, 0.0
          %v1855 = vmax.f32 %v1823, 0.0
          %v1856 = vmax.f32 %v1824, 0.0
          %v1857 = vmax.f32 %v1825, 0.0
          %v1858 = vmax.f32 %v1826, 0.0
          %v1859 = vmax.f32 %v1827, 0.0
          %v1860 = vmax.f32 %v1828, 0.0
          %v1861 = vmax.f32 %v1829, 0.0
          %v1862 = vmax.f32 %v1830, 0.0
          %v1863 = vmax.f32 %v1831, 0.0
          %v1864 = vmax.f32 %v1832, 0.0
          %v1865 = vmax.f32 %v1833, 0.0
          %v1866 = vmax.f32 %v1834, 0.0
          %v1867 = vmax.f32 %v1835, 0.0
          %v1868 = vmax.f32 %v1836, 0.0
          %v1869 = vmax.f32 %v1837, 0.0
          %v1870 = vmax.f32 %v1838, 0.0
          %v1871 = vmax.f32 %v1839, 0.0
          %v1872 = vmax.f32 %v1840, 0.0
          %v1873 = vmax.f32 %v1841, 0.0
          %v1874 = vmax.f32 %v1842, 0.0
          %v1875 = vmax.f32 %v1843, 0.0
          %1876 = vst [vmem:[%s473] sm:$0xff] %v1844
          %1877 = vst [vmem:[%s473 + $0x8] sm:$0xff] %v1845
          %1878 = vst [vmem:[%s473 + $0x10] sm:$0xff] %v1846
          %1879 = vst [vmem:[%s473 + $0x18] sm:$0xff] %v1847
          %1880 = vst [vmem:[%s473 + $0x20] sm:$0xff] %v1848
          %1881 = vst [vmem:[%s473 + $0x28] sm:$0xff] %v1849
          %1882 = vst [vmem:[%s473 + $0x30] sm:$0xff] %v1850
          %1883 = vst [vmem:[%s473 + $0x38] sm:$0xff] %v1851
          %1884 = vst [vmem:[%s473 + $0x40] sm:$0xff] %v1852
          %1885 = vst [vmem:[%s473 + $0x48] sm:$0xff] %v1853
          %1886 = vst [vmem:[%s473 + $0x50] sm:$0xff] %v1854
          %1887 = vst [vmem:[%s473 + $0x58] sm:$0xff] %v1855
          %1888 = vst [vmem:[%s473 + $0x60] sm:$0xff] %v1856
          %1889 = vst [vmem:[%s473 + $0x68] sm:$0xff] %v1857
          %1890 = vst [vmem:[%s473 + $0x70] sm:$0xff] %v1858
          %1891 = vst [vmem:[%s473 + $0x78] sm:$0xff] %v1859
          %1892 = vst [vmem:[%s473 + $0x80] sm:$0xff] %v1860
          %1893 = vst [vmem:[%s473 + $0x88] sm:$0xff] %v1861
          %1894 = vst [vmem:[%s473 + $0x90] sm:$0xff] %v1862
          %1895 = vst [vmem:[%s473 + $0x98] sm:$0xff] %v1863
          %1896 = vst [vmem:[%s473 + $0xa0] sm:$0xff] %v1864
          %1897 = vst [vmem:[%s473 + $0xa8] sm:$0xff] %v1865
          %1898 = vst [vmem:[%s473 + $0xb0] sm:$0xff] %v1866
          %1899 = vst [vmem:[%s473 + $0xb8] sm:$0xff] %v1867
          %1900 = vst [vmem:[%s473 + $0xc0] sm:$0xff] %v1868
          %1901 = vst [vmem:[%s473 + $0xc8] sm:$0xff] %v1869
          %1902 = vst [vmem:[%s473 + $0xd0] sm:$0xff] %v1870
          %1903 = vst [vmem:[%s473 + $0xd8] sm:$0xff] %v1871
          %1904 = vst [vmem:[%s473 + $0xe0] sm:$0xff] %v1872
          %1905 = vst [vmem:[%s473 + $0xe8] sm:$0xff] %v1873
          %1906 = vst [vmem:[%s473 + $0xf0] sm:$0xff] %v1874
          %1907 = vst [vmem:[%s473 + $0xf8] sm:$0xff] %v1875
        $region90: #{sage_forward.2} parent=77 // pred_fallthru
          _
        %s1908 = smul.u32 32, %s21
        %p1909 = scmp.lt.s32.totalorder %s1908, 63
        %s1910 = scalar_select %p1909, %s1908, 63
        %s1911 = smul.addr %s1910, 8
        %s1912 = scalar_lea.vmem %s6, %s1911
        // Predicated region
        $region91: #{sage_forward.2} parent=77 // pred_check
          %p1913 = pneg %p190
        $region92: #{sage_forward.2} parent=77 // pred_check_branch
          %1915 = sbr.rel (%p1913) target = $region94
        $region93: #{sage_forward.2} parent=77 // pred_region
          %s1916 = smul.u32 32, %s21
        $region94: #{sage_forward.2} parent=77 // pred_fallthru
          _
      $region78: #{sage_forward.2} parent=5 // pred_fallthru
        _
      %p1917 = scmp.le.s32.totalorder 2, %s12
      // Predicated region
      $region95: #{sage_forward.2} parent=5 // pred_check
        %p1918 = pneg %p1917
      $region96: #{sage_forward.2} parent=5 // pred_check_branch
        %1920 = sbr.rel (%p1918) target = $region98
      $region97: #{sage_forward.2} parent=5 // pred_region
        %s1921 = ssub.s32 %s12, 2
        // Predicated region
        $region99: #{sage_forward.2} parent=97 // pred_check
          %p1922 = pneg %p196
        $region100: #{sage_forward.2} parent=97 // pred_check_branch
          %1924 = sbr.rel (%p1922) target = $region102
        $region101: #{sage_forward.2} parent=97 // pred_region
          %s1925 = smul.u32 32, %s23
          %p1926 = scmp.lt.s32.totalorder %s1925, 63
          %s1927 = scalar_select %p1926, %s1925, 63
          %s1928 = smul.addr %s1927, 8
          %s1929 = scalar_lea.vmem %s6, %s1928
        $region102: #{sage_forward.2} parent=97 // pred_fallthru
          _
      $region98: #{sage_forward.2} parent=5 // pred_fallthru
        _
    $region6: #{sage_forward.2} parent=1 // loop_footer
      %s16 = sadd.s32 1, %s12
    $region7: #{sage_forward.2} parent=1 // loop_footer_branch
      %11 = sbr.rel target = $region3
    $region8: #{sage_forward.2} parent=1 // loop_exit
      _

// kernel: sage_forward.3
$region0: #{sage_forward.3}
  #allocation0 [shape = 'u32[]', space=smem, size = 0x4, offset = 0x4, fixed_abs, tag = 'smem constant byte address 0x4 - core index']
  #allocation1 [shape = 'u32[144,128]{1,0:T(1,128)}', space=vmem, size = 0x12000, scoped, tag = 'internal scratch']
  #allocation2 [shape = 'f32[256,128]{1,0:T(8,128)}', space=vmem, size = 0x20000, scoped, tag = 'scratch operand']
  %s0 = inlined_call_operand.vmem [shape: bf16[512,512], index: 0, kind: input, shape index: {}]
  %s1 = inlined_call_operand.vmem [shape: bf16[512,128], index: 1, kind: input, shape index: {}]
  %s2 = inlined_call_operand.vmem [shape: f32[512,128], index: 2, kind: input, shape index: {}]
  %s3 = inlined_call_operand.vmem [shape: f32[128,128], index: 3, kind: input, shape index: {}]
  %s4 = inlined_call_operand.vmem [shape: f32[128,128], index: 4, kind: input, shape index: {}]
  %s5 = inlined_call_operand.vmem [shape: f32[1,128], index: 5, kind: input, shape index: {}]
  %s6 = inlined_call_operand.vmem [shape: f32[512,128], index: 6, kind: output, shape index: {}]
  %s7 = sld [smem:[#allocation0]]
  $region103: #{sage_forward.3} parent=0
    _
  %s9 = ssub.s32 1, %s7
  %s10 = scalar_select 0, %s9, %s7
  $region1: #{sage_forward.3} parent=0
    #allocation3 [shape = 'u8[262144]{0}', space=vmem, size = 0x40000, scoped, tag = 'input window, operand 0']
    loop: start=0, step=1, limit=6
    $region2: #{sage_forward.3} parent=1 // loop_pre_header
      _
    $region3: #{sage_forward.3} parent=1 // loop_header
      %s12 = sphi 0, %s16
      %p13 = scmp.ge.s32.totalorder %s12, 6
      %s19 = sphi 0, %s31
      %s20 = sphi 0, %s27
      %s21 = sphi 0, %s19
      %s22 = sphi 0, %s20
      %s23 = sphi 0, %s21
      %s24 = sphi 0, %s22
      %s36 = sphi 0, %s38
      %s39 = sphi 0, %s36
      %s40 = sphi 0, %s39
      %s56 = sphi 0, %s40
      %s62 = sphi 0, %s64
      %s65 = sphi 0, %s62
      %s66 = sphi 0, %s65
      %s82 = sphi 0, %s66
      %s88 = sphi 0, %s90
      %s91 = sphi 0, %s88
      %s92 = sphi 0, %s91
      %s108 = sphi 0, %s92
      %s112 = sphi 0, %s112
      %s114 = sphi 0, %s112
      %s115 = sphi 0, %s114
      %s129 = sphi 0, %s115
      %s133 = sphi 0, %s133
      %s135 = sphi 0, %s133
      %s136 = sphi 0, %s135
      %s150 = sphi 0, %s136
      %s154 = sphi 0, %s154
      %s156 = sphi 0, %s154
      %s157 = sphi 0, %s156
      %s171 = sphi 0, %s157
      %s177 = sphi 0, %s179
      %s180 = sphi 0, %s177
      %s181 = sphi 0, %s180
      %s197 = sphi 0, %s181
    $region4: #{sage_forward.3} parent=1 // loop_header_branch
      %15 = sbr.rel (%p13) target = $region8
    $region5: #{sage_forward.3} parent=1 // loop_body
      %s17 = ssub.s32 %s12, 1
      %s18 = ssub.s32 %s12, 2
      %s25 = sadd.s32 1, %s20
      %p26 = scmp.ge.s32.totalorder %s25, 2
      %s27 = scalar_select %p26, 0, %s25
      %s28 = sadd.s32 1, %s19
      %s29 = scalar_select %p26, %s28, %s19
      %p30 = scmp.ge.s32.totalorder %s29, 2
      %s31 = scalar_select %p30, 0, %s29
      %s32 = ssub.s32 %s19, %s31
      %s33 = ssub.s32 %s20, %s27
      %s34 = sor.u32 %s32, %s33
      %p35 = scmp.eq.s32.totalorder %s34, 0
      %s37 = sadd.s32 %s36, 1
      %s38 = scalar_select %p35, %s36, %s37
      %p41 = pneg %p35
      %p42 = scmp.eq.s32.totalorder %s12, 3
      %p43 = por %p41, %p42
      %p44 = scmp.ne.s32.totalorder %s36, %s39
      %p45 = scmp.eq.s32.totalorder %s12, 0
      %p46 = por %p44, %p45
      %p47 = scmp.ne.s32.totalorder %s36, %s39
      %p48 = scmp.eq.s32.totalorder %s17, 3
      %p49 = por %p47, %p48
      %p50 = scmp.ne.s32.totalorder %s39, %s40
      %p51 = scmp.eq.s32.totalorder %s17, 0
      %p52 = por %p50, %p51
      %p53 = scmp.ne.s32.totalorder %s39, %s40
      %p54 = scmp.eq.s32.totalorder %s18, 3
      %p55 = por %p53, %p54
      %p57 = scmp.ne.s32.totalorder %s40, %s56
      %p58 = scmp.eq.s32.totalorder %s18, 0
      %p59 = por %p57, %p58
      %s60 = ssub.s32 %s20, %s27
      %p61 = scmp.eq.s32.totalorder %s60, 0
      %s63 = sadd.s32 %s62, 1
      %s64 = scalar_select %p61, %s62, %s63
      %p67 = pneg %p61
      %p68 = scmp.eq.s32.totalorder %s12, 3
      %p69 = por %p67, %p68
      %p70 = scmp.ne.s32.totalorder %s62, %s65
      %p71 = scmp.eq.s32.totalorder %s12, 0
      %p72 = por %p70, %p71
      %p73 = scmp.ne.s32.totalorder %s62, %s65
      %p74 = scmp.eq.s32.totalorder %s17, 3
      %p75 = por %p73, %p74
      %p76 = scmp.ne.s32.totalorder %s65, %s66
      %p77 = scmp.eq.s32.totalorder %s17, 0
      %p78 = por %p76, %p77
      %p79 = scmp.ne.s32.totalorder %s65, %s66
      %p80 = scmp.eq.s32.totalorder %s18, 3
      %p81 = por %p79, %p80
      %p83 = scmp.ne.s32.totalorder %s66, %s82
      %p84 = scmp.eq.s32.totalorder %s18, 0
      %p85 = por %p83, %p84
      %s86 = ssub.s32 %s19, %s31
      %p87 = scmp.eq.s32.totalorder %s86, 0
      %s89 = sadd.s32 %s88, 1
      %s90 = scalar_select %p87, %s88, %s89
      %p93 = pneg %p87
      %p94 = scmp.eq.s32.totalorder %s12, 3
      %p95 = por %p93, %p94
      %p96 = scmp.ne.s32.totalorder %s88, %s91
      %p97 = scmp.eq.s32.totalorder %s12, 0
      %p98 = por %p96, %p97
      %p99 = scmp.ne.s32.totalorder %s88, %s91
      %p100 = scmp.eq.s32.totalorder %s17, 3
      %p101 = por %p99, %p100
      %p102 = scmp.ne.s32.totalorder %s91, %s92
      %p103 = scmp.eq.s32.totalorder %s17, 0
      %p104 = por %p102, %p103
      %p105 = scmp.ne.s32.totalorder %s91, %s92
      %p106 = scmp.eq.s32.totalorder %s18, 3
      %p107 = por %p105, %p106
      %p109 = scmp.ne.s32.totalorder %s92, %s108
      %p110 = scmp.eq.s32.totalorder %s18, 0
      %p111 = por %p109, %p110
      %s113 = sadd.s32 %s112, 1
      %p116 = scmp.eq.s32.totalorder %s12, 3
      %p117 = scmp.ne.s32.totalorder %s112, %s114
      %p118 = scmp.eq.s32.totalorder %s12, 0
      %p119 = por %p117, %p118
      %p120 = scmp.ne.s32.totalorder %s112, %s114
      %p121 = scmp.eq.s32.totalorder %s17, 3
      %p122 = por %p120, %p121
      %p123 = scmp.ne.s32.totalorder %s114, %s115
      %p124 = scmp.eq.s32.totalorder %s17, 0
      %p125 = por %p123, %p124
      %p126 = scmp.ne.s32.totalorder %s114, %s115
      %p127 = scmp.eq.s32.totalorder %s18, 3
      %p128 = por %p126, %p127
      %p130 = scmp.ne.s32.totalorder %s115, %s129
      %p131 = scmp.eq.s32.totalorder %s18, 0
      %p132 = por %p130, %p131
      %s134 = sadd.s32 %s133, 1
      %p137 = scmp.eq.s32.totalorder %s12, 3
      %p138 = scmp.ne.s32.totalorder %s133, %s135
      %p139 = scmp.eq.s32.totalorder %s12, 0
      %p140 = por %p138, %p139
      %p141 = scmp.ne.s32.totalorder %s133, %s135
      %p142 = scmp.eq.s32.totalorder %s17, 3
      %p143 = por %p141, %p142
      %p144 = scmp.ne.s32.totalorder %s135, %s136
      %p145 = scmp.eq.s32.totalorder %s17, 0
      %p146 = por %p144, %p145
      %p147 = scmp.ne.s32.totalorder %s135, %s136
      %p148 = scmp.eq.s32.totalorder %s18, 3
      %p149 = por %p147, %p148
      %p151 = scmp.ne.s32.totalorder %s136, %s150
      %p152 = scmp.eq.s32.totalorder %s18, 0
      %p153 = por %p151, %p152
      %s155 = sadd.s32 %s154, 1
      %p158 = scmp.eq.s32.totalorder %s12, 3
      %p159 = scmp.ne.s32.totalorder %s154, %s156
      %p160 = scmp.eq.s32.totalorder %s12, 0
      %p161 = por %p159, %p160
      %p162 = scmp.ne.s32.totalorder %s154, %s156
      %p163 = scmp.eq.s32.totalorder %s17, 3
      %p164 = por %p162, %p163
      %p165 = scmp.ne.s32.totalorder %s156, %s157
      %p166 = scmp.eq.s32.totalorder %s17, 0
      %p167 = por %p165, %p166
      %p168 = scmp.ne.s32.totalorder %s156, %s157
      %p169 = scmp.eq.s32.totalorder %s18, 3
      %p170 = por %p168, %p169
      %p172 = scmp.ne.s32.totalorder %s157, %s171
      %p173 = scmp.eq.s32.totalorder %s18, 0
      %p174 = por %p172, %p173
      %s175 = ssub.s32 %s19, %s31
      %p176 = scmp.eq.s32.totalorder %s175, 0
      %s178 = sadd.s32 %s177, 1
      %s179 = scalar_select %p176, %s177, %s178
      %p182 = pneg %p176
      %p183 = scmp.eq.s32.totalorder %s12, 3
      %p184 = por %p182, %p183
      %p185 = scmp.ne.s32.totalorder %s177, %s180
      %p186 = scmp.eq.s32.totalorder %s12, 0
      %p187 = por %p185, %p186
      %p188 = scmp.ne.s32.totalorder %s177, %s180
      %p189 = scmp.eq.s32.totalorder %s17, 3
      %p190 = por %p188, %p189
      %p191 = scmp.ne.s32.totalorder %s180, %s181
      %p192 = scmp.eq.s32.totalorder %s17, 0
      %p193 = por %p191, %p192
      %p194 = scmp.ne.s32.totalorder %s180, %s181
      %p195 = scmp.eq.s32.totalorder %s18, 3
      %p196 = por %p194, %p195
      %p198 = scmp.ne.s32.totalorder %s181, %s197
      %p199 = scmp.eq.s32.totalorder %s18, 0
      %p200 = por %p198, %p199
      %p201 = scmp.le.s32.totalorder 1, %s12
      %p202 = scmp.lt.s32.totalorder %s12, 5
      %p203 = pnand %p201, %p202
      %p204 = pneg %p203
      // Predicated region
      $region9: #{sage_forward.3} parent=5 // pred_check
        _
      $region10: #{sage_forward.3} parent=5 // pred_check_branch
        %206 = sbr.rel (%p203) target = $region12
      $region11: #{sage_forward.3} parent=5 // pred_region
        %s207 = ssub.s32 %s12, 1
        // Predicated region
        $region13: #{sage_forward.3} parent=11 // pred_check
          %p208 = pneg %p125
        $region14: #{sage_forward.3} parent=11 // pred_check_branch
          %210 = sbr.rel (%p208) target = $region16
        $region15: #{sage_forward.3} parent=11 // pred_region
          _
        $region16: #{sage_forward.3} parent=11 // pred_fallthru
          _
        // Predicated region
        $region17: #{sage_forward.3} parent=11 // pred_check
          %p211 = pneg %p146
        $region18: #{sage_forward.3} parent=11 // pred_check_branch
          %213 = sbr.rel (%p211) target = $region20
        $region19: #{sage_forward.3} parent=11 // pred_region
          _
        $region20: #{sage_forward.3} parent=11 // pred_fallthru
          _
        // Predicated region
        $region21: #{sage_forward.3} parent=11 // pred_check
          %p214 = pneg %p167
        $region22: #{sage_forward.3} parent=11 // pred_check_branch
          %216 = sbr.rel (%p214) target = $region24
        $region23: #{sage_forward.3} parent=11 // pred_region
          _
        $region24: #{sage_forward.3} parent=11 // pred_fallthru
          _
      $region12: #{sage_forward.3} parent=5 // pred_fallthru
        _
      %p217 = scmp.lt.s32.totalorder %s12, 4
      // Predicated region
      $region25: #{sage_forward.3} parent=5 // pred_check
        %p218 = pneg %p217
      $region26: #{sage_forward.3} parent=5 // pred_check_branch
        %220 = sbr.rel (%p218) target = $region28
      $region27: #{sage_forward.3} parent=5 // pred_region
        // Predicated region
        $region29: #{sage_forward.3} parent=27 // pred_check
          %p221 = pneg %p46
        $region30: #{sage_forward.3} parent=27 // pred_check_branch
          %223 = sbr.rel (%p221) target = $region32
        $region31: #{sage_forward.3} parent=27 // pred_region
          %s224 = sand.u32 %s36, 1
          %s225 = sand.u32 %s36, 1
          %s226 = smul.addr %s225, 256
          %s227 = scalar_lea.vmem [#allocation3], %s226
          %s228 = smul.u32 32, %s19
          %s229 = smul.u32 2, %s20
          %s230 = smul.addr %s228, 4
          %s231 = sadd.s32 %s229, %s230
          %s232 = smul.addr %s231, 4
          %s233 = scalar_lea.vmem %s0, %s232
          // Predicated region
          $region33: #{sage_forward.3} parent=31 // pred_check
            _
          $region34: #{sage_forward.3} parent=31 // pred_check_branch
            %235 = sbr.rel (0) target = $region36
          $region35: #{sage_forward.3} parent=31 // pred_region
            // Predicated region
            $region37: #{sage_forward.3} parent=35 // pred_check
              _
            $region38: #{sage_forward.3} parent=35 // pred_check_branch
              %237 = sbr.rel (0) target = $region40
            $region39: #{sage_forward.3} parent=35 // pred_region
              // Predicated region
              $region52: #{sage_forward.3} parent=39 // pred_check
                _
              $region53: #{sage_forward.3} parent=39 // pred_check_branch
                %314 = sbr.rel (0) target = $region55
              $region54: #{sage_forward.3} parent=39 // pred_region
                loop: start=0, step=1, limit=1
                $region56: #{sage_forward.3} parent=54 // loop_pre_header
                  _
                $region57: #{sage_forward.3} parent=54 // loop_header
                  %s316 = sphi 0, %s320
                  %p317 = scmp.ge.s32.totalorder %s316, 1
                  %s321 = sphi %s233, %s233
                  %s322 = sphi %s227, %s227
                $region58: #{sage_forward.3} parent=54 // loop_header_branch
                  %319 = sbr.rel (%p317) target = $region62
                $region59: #{sage_forward.3} parent=54 // loop_body
                  %v323 = vld [vmem:[%s321] sm:$0xff]
                  %324 = vst [vmem:[%s322] sm:$0xff] %v323
                  %v325 = vld [vmem:[%s321 + $0x10] sm:$0xff]
                  %326 = vst [vmem:[%s322 + $0x8] sm:$0xff] %v325
                  %v327 = vld [vmem:[%s321 + $0x20] sm:$0xff]
                  %328 = vst [vmem:[%s322 + $0x10] sm:$0xff] %v327
                  %v329 = vld [vmem:[%s321 + $0x30] sm:$0xff]
                  %330 = vst [vmem:[%s322 + $0x18] sm:$0xff] %v329
                  %v331 = vld [vmem:[%s321 + $0x40] sm:$0xff]
                  %332 = vst [vmem:[%s322 + $0x20] sm:$0xff] %v331
                  %v333 = vld [vmem:[%s321 + $0x50] sm:$0xff]
                  %334 = vst [vmem:[%s322 + $0x28] sm:$0xff] %v333
                  %v335 = vld [vmem:[%s321 + $0x60] sm:$0xff]
                  %336 = vst [vmem:[%s322 + $0x30] sm:$0xff] %v335
                  %v337 = vld [vmem:[%s321 + $0x70] sm:$0xff]
                  %338 = vst [vmem:[%s322 + $0x38] sm:$0xff] %v337
                  %v339 = vld [vmem:[%s321 + $0x80] sm:$0xff]
                  %340 = vst [vmem:[%s322 + $0x40] sm:$0xff] %v339
                  %v341 = vld [vmem:[%s321 + $0x90] sm:$0xff]
                  %342 = vst [vmem:[%s322 + $0x48] sm:$0xff] %v341
                  %v343 = vld [vmem:[%s321 + $0xa0] sm:$0xff]
                  %344 = vst [vmem:[%s322 + $0x50] sm:$0xff] %v343
                  %v345 = vld [vmem:[%s321 + $0xb0] sm:$0xff]
                  %346 = vst [vmem:[%s322 + $0x58] sm:$0xff] %v345
                  %v347 = vld [vmem:[%s321 + $0xc0] sm:$0xff]
                  %348 = vst [vmem:[%s322 + $0x60] sm:$0xff] %v347
                  %v349 = vld [vmem:[%s321 + $0xd0] sm:$0xff]
                  %350 = vst [vmem:[%s322 + $0x68] sm:$0xff] %v349
                  %v351 = vld [vmem:[%s321 + $0xe0] sm:$0xff]
                  %352 = vst [vmem:[%s322 + $0x70] sm:$0xff] %v351
                  %v353 = vld [vmem:[%s321 + $0xf0] sm:$0xff]
                  %354 = vst [vmem:[%s322 + $0x78] sm:$0xff] %v353
                  %v355 = vld [vmem:[%s321 + $0x100] sm:$0xff]
                  %356 = vst [vmem:[%s322 + $0x80] sm:$0xff] %v355
                  %v357 = vld [vmem:[%s321 + $0x110] sm:$0xff]
                  %358 = vst [vmem:[%s322 + $0x88] sm:$0xff] %v357
                  %v359 = vld [vmem:[%s321 + $0x120] sm:$0xff]
                  %360 = vst [vmem:[%s322 + $0x90] sm:$0xff] %v359
                  %v361 = vld [vmem:[%s321 + $0x130] sm:$0xff]
                  %362 = vst [vmem:[%s322 + $0x98] sm:$0xff] %v361
                  %v363 = vld [vmem:[%s321 + $0x140] sm:$0xff]
                  %364 = vst [vmem:[%s322 + $0xa0] sm:$0xff] %v363
                  %v365 = vld [vmem:[%s321 + $0x150] sm:$0xff]
                  %366 = vst [vmem:[%s322 + $0xa8] sm:$0xff] %v365
                  %v367 = vld [vmem:[%s321 + $0x160] sm:$0xff]
                  %368 = vst [vmem:[%s322 + $0xb0] sm:$0xff] %v367
                  %v369 = vld [vmem:[%s321 + $0x170] sm:$0xff]
                  %370 = vst [vmem:[%s322 + $0xb8] sm:$0xff] %v369
                  %v371 = vld [vmem:[%s321 + $0x180] sm:$0xff]
                  %372 = vst [vmem:[%s322 + $0xc0] sm:$0xff] %v371
                  %v373 = vld [vmem:[%s321 + $0x190] sm:$0xff]
                  %374 = vst [vmem:[%s322 + $0xc8] sm:$0xff] %v373
                  %v375 = vld [vmem:[%s321 + $0x1a0] sm:$0xff]
                  %376 = vst [vmem:[%s322 + $0xd0] sm:$0xff] %v375
                  %v377 = vld [vmem:[%s321 + $0x1b0] sm:$0xff]
                  %378 = vst [vmem:[%s322 + $0xd8] sm:$0xff] %v377
                  %v379 = vld [vmem:[%s321 + $0x1c0] sm:$0xff]
                  %380 = vst [vmem:[%s322 + $0xe0] sm:$0xff] %v379
                  %v381 = vld [vmem:[%s321 + $0x1d0] sm:$0xff]
                  %382 = vst [vmem:[%s322 + $0xe8] sm:$0xff] %v381
                  %v383 = vld [vmem:[%s321 + $0x1e0] sm:$0xff]
                  %384 = vst [vmem:[%s322 + $0xf0] sm:$0xff] %v383
                  %v385 = vld [vmem:[%s321 + $0x1f0] sm:$0xff]
                  %386 = vst [vmem:[%s322 + $0xf8] sm:$0xff] %v385
                $region60: #{sage_forward.3} parent=54 // loop_footer
                  %s320 = sadd.s32 1, %s316
                $region61: #{sage_forward.3} parent=54 // loop_footer_branch
                  %315 = sbr.rel target = $region57
                $region62: #{sage_forward.3} parent=54 // loop_exit
                  _
              $region55: #{sage_forward.3} parent=39 // pred_fallthru
                _
              // Predicated region
              $region63: #{sage_forward.3} parent=39 // pred_check
                _
              $region64: #{sage_forward.3} parent=39 // pred_check_branch
                %388 = sbr.rel target = $region66
              $region65: #{sage_forward.3} parent=39 // pred_region
                _
              $region66: #{sage_forward.3} parent=39 // pred_fallthru
                _
            $region40: #{sage_forward.3} parent=35 // pred_fallthru
              _
            // Predicated region
            $region41: #{sage_forward.3} parent=35 // pred_check
              _
            $region42: #{sage_forward.3} parent=35 // pred_check_branch
              %239 = sbr.rel target = $region44
            $region43: #{sage_forward.3} parent=35 // pred_region
              loop: start=0, step=1, limit=1
              $region45: #{sage_forward.3} parent=43 // loop_pre_header
                _
              $region46: #{sage_forward.3} parent=43 // loop_header
                %s242 = sphi 0, %s246
                %p243 = scmp.ge.s32.totalorder %s242, 1
                %s247 = sphi %s233, %s233
                %s248 = sphi %s227, %s227
              $region47: #{sage_forward.3} parent=43 // loop_header_branch
                %245 = sbr.rel (%p243) target = $region51
              $region48: #{sage_forward.3} parent=43 // loop_body
                %v249 = vld [vmem:[%s247] sm:$0xff]
                %250 = vst [vmem:[%s248] sm:$0xff] %v249
                %v251 = vld [vmem:[%s247 + $0x10] sm:$0xff]
                %252 = vst [vmem:[%s248 + $0x8] sm:$0xff] %v251
                %v253 = vld [vmem:[%s247 + $0x20] sm:$0xff]
                %254 = vst [vmem:[%s248 + $0x10] sm:$0xff] %v253
                %v255 = vld [vmem:[%s247 + $0x30] sm:$0xff]
                %256 = vst [vmem:[%s248 + $0x18] sm:$0xff] %v255
                %v257 = vld [vmem:[%s247 + $0x40] sm:$0xff]
                %258 = vst [vmem:[%s248 + $0x20] sm:$0xff] %v257
                %v259 = vld [vmem:[%s247 + $0x50] sm:$0xff]
                %260 = vst [vmem:[%s248 + $0x28] sm:$0xff] %v259
                %v261 = vld [vmem:[%s247 + $0x60] sm:$0xff]
                %262 = vst [vmem:[%s248 + $0x30] sm:$0xff] %v261
                %v263 = vld [vmem:[%s247 + $0x70] sm:$0xff]
                %264 = vst [vmem:[%s248 + $0x38] sm:$0xff] %v263
                %v265 = vld [vmem:[%s247 + $0x80] sm:$0xff]
                %266 = vst [vmem:[%s248 + $0x40] sm:$0xff] %v265
                %v267 = vld [vmem:[%s247 + $0x90] sm:$0xff]
                %268 = vst [vmem:[%s248 + $0x48] sm:$0xff] %v267
                %v269 = vld [vmem:[%s247 + $0xa0] sm:$0xff]
                %270 = vst [vmem:[%s248 + $0x50] sm:$0xff] %v269
                %v271 = vld [vmem:[%s247 + $0xb0] sm:$0xff]
                %272 = vst [vmem:[%s248 + $0x58] sm:$0xff] %v271
                %v273 = vld [vmem:[%s247 + $0xc0] sm:$0xff]
                %274 = vst [vmem:[%s248 + $0x60] sm:$0xff] %v273
                %v275 = vld [vmem:[%s247 + $0xd0] sm:$0xff]
                %276 = vst [vmem:[%s248 + $0x68] sm:$0xff] %v275
                %v277 = vld [vmem:[%s247 + $0xe0] sm:$0xff]
                %278 = vst [vmem:[%s248 + $0x70] sm:$0xff] %v277
                %v279 = vld [vmem:[%s247 + $0xf0] sm:$0xff]
                %280 = vst [vmem:[%s248 + $0x78] sm:$0xff] %v279
                %v281 = vld [vmem:[%s247 + $0x100] sm:$0xff]
                %282 = vst [vmem:[%s248 + $0x80] sm:$0xff] %v281
                %v283 = vld [vmem:[%s247 + $0x110] sm:$0xff]
                %284 = vst [vmem:[%s248 + $0x88] sm:$0xff] %v283
                %v285 = vld [vmem:[%s247 + $0x120] sm:$0xff]
                %286 = vst [vmem:[%s248 + $0x90] sm:$0xff] %v285
                %v287 = vld [vmem:[%s247 + $0x130] sm:$0xff]
                %288 = vst [vmem:[%s248 + $0x98] sm:$0xff] %v287
                %v289 = vld [vmem:[%s247 + $0x140] sm:$0xff]
                %290 = vst [vmem:[%s248 + $0xa0] sm:$0xff] %v289
                %v291 = vld [vmem:[%s247 + $0x150] sm:$0xff]
                %292 = vst [vmem:[%s248 + $0xa8] sm:$0xff] %v291
                %v293 = vld [vmem:[%s247 + $0x160] sm:$0xff]
                %294 = vst [vmem:[%s248 + $0xb0] sm:$0xff] %v293
                %v295 = vld [vmem:[%s247 + $0x170] sm:$0xff]
                %296 = vst [vmem:[%s248 + $0xb8] sm:$0xff] %v295
                %v297 = vld [vmem:[%s247 + $0x180] sm:$0xff]
                %298 = vst [vmem:[%s248 + $0xc0] sm:$0xff] %v297
                %v299 = vld [vmem:[%s247 + $0x190] sm:$0xff]
                %300 = vst [vmem:[%s248 + $0xc8] sm:$0xff] %v299
                %v301 = vld [vmem:[%s247 + $0x1a0] sm:$0xff]
                %302 = vst [vmem:[%s248 + $0xd0] sm:$0xff] %v301
                %v303 = vld [vmem:[%s247 + $0x1b0] sm:$0xff]
                %304 = vst [vmem:[%s248 + $0xd8] sm:$0xff] %v303
                %v305 = vld [vmem:[%s247 + $0x1c0] sm:$0xff]
                %306 = vst [vmem:[%s248 + $0xe0] sm:$0xff] %v305
                %v307 = vld [vmem:[%s247 + $0x1d0] sm:$0xff]
                %308 = vst [vmem:[%s248 + $0xe8] sm:$0xff] %v307
                %v309 = vld [vmem:[%s247 + $0x1e0] sm:$0xff]
                %310 = vst [vmem:[%s248 + $0xf0] sm:$0xff] %v309
                %v311 = vld [vmem:[%s247 + $0x1f0] sm:$0xff]
                %312 = vst [vmem:[%s248 + $0xf8] sm:$0xff] %v311
              $region49: #{sage_forward.3} parent=43 // loop_footer
                %s246 = sadd.s32 1, %s242
              $region50: #{sage_forward.3} parent=43 // loop_footer_branch
                %241 = sbr.rel target = $region46
              $region51: #{sage_forward.3} parent=43 // loop_exit
                _
            $region44: #{sage_forward.3} parent=35 // pred_fallthru
              _
          $region36: #{sage_forward.3} parent=31 // pred_fallthru
            _
          %389 = vnop
        $region32: #{sage_forward.3} parent=27 // pred_fallthru
          _
        // Predicated region
        $region67: #{sage_forward.3} parent=27 // pred_check
          %p390 = pneg %p72
        $region68: #{sage_forward.3} parent=27 // pred_check_branch
          %392 = sbr.rel (%p390) target = $region70
        $region69: #{sage_forward.3} parent=27 // pred_region
          %s393 = smul.u32 32, %s20
          %p394 = scmp.lt.s32.totalorder %s393, 63
          %s395 = scalar_select %p394, %s393, 63
          %s396 = smul.addr %s395, 4
          %s397 = scalar_lea.vmem %s1, %s396
          %s398 = smul.u32 32, %s20
        $region70: #{sage_forward.3} parent=27 // pred_fallthru
          _
        // Predicated region
        $region71: #{sage_forward.3} parent=27 // pred_check
          %p399 = pneg %p98
        $region72: #{sage_forward.3} parent=27 // pred_check_branch
          %401 = sbr.rel (%p399) target = $region74
        $region73: #{sage_forward.3} parent=27 // pred_region
          %s402 = smul.u32 32, %s19
          %p403 = scmp.lt.s32.totalorder %s402, 63
          %s404 = scalar_select %p403, %s402, 63
          %s405 = smul.addr %s404, 8
          %s406 = scalar_lea.vmem %s2, %s405
          %s407 = smul.u32 32, %s19
        $region74: #{sage_forward.3} parent=27 // pred_fallthru
          _
      $region28: #{sage_forward.3} parent=5 // pred_fallthru
        _
      %p408 = scmp.le.s32.totalorder 1, %s12
      %p409 = scmp.lt.s32.totalorder %s12, 5
      %p410 = pnand %p408, %p409
      %p411 = pneg %p410
      // Predicated region
      $region75: #{sage_forward.3} parent=5 // pred_check
        _
      $region76: #{sage_forward.3} parent=5 // pred_check_branch
        %413 = sbr.rel (%p410) target = $region78
      $region77: #{sage_forward.3} parent=5 // pred_region
        %s414 = ssub.s32 %s12, 1
        %s415 = sand.u32 %s39, 1
        %s416 = sand.u32 %s39, 1
        %s417 = smul.addr %s416, 256
        %s418 = scalar_lea.vmem [#allocation3], %s417
        // Predicated region
        $region79: #{sage_forward.3} parent=77 // pred_check
          %p419 = pneg %p52
        $region80: #{sage_forward.3} parent=77 // pred_check_branch
          %421 = sbr.rel (%p419) target = $region82
        $region81: #{sage_forward.3} parent=77 // pred_region
          _
        $region82: #{sage_forward.3} parent=77 // pred_fallthru
          _
        %s422 = sand.u32 %s39, 1
        %s423 = sand.u32 %s39, 1
        %s424 = smul.addr %s423, 256
        %s425 = scalar_lea.vmem [#allocation3], %s424
        %p426 = pneg %p52
        %p427 = pneg %p49
        %s428 = smul.u32 32, %s22
        %p429 = scmp.lt.s32.totalorder %s428, 63
        %s430 = scalar_select %p429, %s428, 63
        %s431 = smul.addr %s430, 4
        %s432 = scalar_lea.vmem %s1, %s431
        %p433 = pneg %p78
        %p434 = pneg %p75
        %s435 = smul.u32 32, %s21
        %p436 = scmp.lt.s32.totalorder %s435, 63
        %s437 = scalar_select %p436, %s435, 63
        %s438 = smul.addr %s437, 8
        %s439 = scalar_lea.vmem %s2, %s438
        %p440 = pneg %p104
        %p441 = pneg %p101
        %p442 = pneg %p125
        %p443 = pneg %p122
        %p444 = pneg %p146
        %p445 = pneg %p143
        %p446 = pneg %p167
        %p447 = pneg %p164
        %p448 = pneg %p193
        %p449 = pneg %p190
        %s450 = smul.u32 32, %s21
        %p451 = scmp.lt.s32.totalorder %s450, 63
        %s452 = scalar_select %p451, %s450, 63
        %s453 = smul.addr %s452, 8
        %s454 = scalar_lea.vmem %s6, %s453
        %s455 = smul.u32 32, %s21
        %s456 = smul.u32 2, %s22
        %s457 = smul.u32 32, %s22
        %p458 = scmp.lt.s32.totalorder %s457, 63
        %s459 = scalar_select %p458, %s457, 63
        %s460 = smul.addr %s459, 4
        %s461 = scalar_lea.vmem %s1, %s460
        %s462 = smul.u32 32, %s22
        %s463 = smul.u32 32, %s21
        %p464 = scmp.lt.s32.totalorder %s463, 63
        %s465 = scalar_select %p464, %s463, 63
        %s466 = smul.addr %s465, 8
        %s467 = scalar_lea.vmem %s2, %s466
        %s468 = smul.u32 32, %s21
        %s469 = smul.u32 32, %s21
        %p470 = scmp.lt.s32.totalorder %s469, 63
        %s471 = scalar_select %p470, %s469, 63
        %s472 = smul.addr %s471, 8
        %s473 = scalar_lea.vmem %s6, %s472
        %s474 = smul.u32 32, %s21
        %p476 = scmp.eq.s32.totalorder %s22, 0
        // Predicated region
        $region83: #{sage_forward.3} parent=77 // pred_check
          %p477 = pneg %p476
        $region84: #{sage_forward.3} parent=77 // pred_check_branch
          %479 = sbr.rel (%p477) target = $region86
        $region85: #{sage_forward.3} parent=77 // pred_region
          %480 = vst [vmem:[#allocation2] sm:$0xff] 0.0
          %481 = vst [vmem:[#allocation2 + $0x8] sm:$0xff] 0.0
          %482 = vst [vmem:[#allocation2 + $0x10] sm:$0xff] 0.0
          %483 = vst [vmem:[#allocation2 + $0x18] sm:$0xff] 0.0
          %484 = vst [vmem:[#allocation2 + $0x20] sm:$0xff] 0.0
          %485 = vst [vmem:[#allocation2 + $0x28] sm:$0xff] 0.0
          %486 = vst [vmem:[#allocation2 + $0x30] sm:$0xff] 0.0
          %487 = vst [vmem:[#allocation2 + $0x38] sm:$0xff] 0.0
          %488 = vst [vmem:[#allocation2 + $0x40] sm:$0xff] 0.0
          %489 = vst [vmem:[#allocation2 + $0x48] sm:$0xff] 0.0
          %490 = vst [vmem:[#allocation2 + $0x50] sm:$0xff] 0.0
          %491 = vst [vmem:[#allocation2 + $0x58] sm:$0xff] 0.0
          %492 = vst [vmem:[#allocation2 + $0x60] sm:$0xff] 0.0
          %493 = vst [vmem:[#allocation2 + $0x68] sm:$0xff] 0.0
          %494 = vst [vmem:[#allocation2 + $0x70] sm:$0xff] 0.0
          %495 = vst [vmem:[#allocation2 + $0x78] sm:$0xff] 0.0
          %496 = vst [vmem:[#allocation2 + $0x80] sm:$0xff] 0.0
          %497 = vst [vmem:[#allocation2 + $0x88] sm:$0xff] 0.0
          %498 = vst [vmem:[#allocation2 + $0x90] sm:$0xff] 0.0
          %499 = vst [vmem:[#allocation2 + $0x98] sm:$0xff] 0.0
          %500 = vst [vmem:[#allocation2 + $0xa0] sm:$0xff] 0.0
          %501 = vst [vmem:[#allocation2 + $0xa8] sm:$0xff] 0.0
          %502 = vst [vmem:[#allocation2 + $0xb0] sm:$0xff] 0.0
          %503 = vst [vmem:[#allocation2 + $0xb8] sm:$0xff] 0.0
          %504 = vst [vmem:[#allocation2 + $0xc0] sm:$0xff] 0.0
          %505 = vst [vmem:[#allocation2 + $0xc8] sm:$0xff] 0.0
          %506 = vst [vmem:[#allocation2 + $0xd0] sm:$0xff] 0.0
          %507 = vst [vmem:[#allocation2 + $0xd8] sm:$0xff] 0.0
          %508 = vst [vmem:[#allocation2 + $0xe0] sm:$0xff] 0.0
          %509 = vst [vmem:[#allocation2 + $0xe8] sm:$0xff] 0.0
          %510 = vst [vmem:[#allocation2 + $0xf0] sm:$0xff] 0.0
          %511 = vst [vmem:[#allocation2 + $0xf8] sm:$0xff] 0.0
        $region86: #{sage_forward.3} parent=77 // pred_fallthru
          _
        %v512 = vld [vmem:[#allocation2] sm:$0xff]
        %v513 = vld [vmem:[#allocation2 + $0x8] sm:$0xff]
        %v514 = vld [vmem:[#allocation2 + $0x10] sm:$0xff]
        %v515 = vld [vmem:[#allocation2 + $0x18] sm:$0xff]
        %v516 = vld [vmem:[#allocation2 + $0x20] sm:$0xff]
        %v517 = vld [vmem:[#allocation2 + $0x28] sm:$0xff]
        %v518 = vld [vmem:[#allocation2 + $0x30] sm:$0xff]
        %v519 = vld [vmem:[#allocation2 + $0x38] sm:$0xff]
        %v520 = vld [vmem:[#allocation2 + $0x40] sm:$0xff]
        %v521 = vld [vmem:[#allocation2 + $0x48] sm:$0xff]
        %v522 = vld [vmem:[#allocation2 + $0x50] sm:$0xff]
        %v523 = vld [vmem:[#allocation2 + $0x58] sm:$0xff]
        %v524 = vld [vmem:[#allocation2 + $0x60] sm:$0xff]
        %v525 = vld [vmem:[#allocation2 + $0x68] sm:$0xff]
        %v526 = vld [vmem:[#allocation2 + $0x70] sm:$0xff]
        %v527 = vld [vmem:[#allocation2 + $0x78] sm:$0xff]
        %v528 = vld [vmem:[#allocation2 + $0x80] sm:$0xff]
        %v529 = vld [vmem:[#allocation2 + $0x88] sm:$0xff]
        %v530 = vld [vmem:[#allocation2 + $0x90] sm:$0xff]
        %v531 = vld [vmem:[#allocation2 + $0x98] sm:$0xff]
        %v532 = vld [vmem:[#allocation2 + $0xa0] sm:$0xff]
        %v533 = vld [vmem:[#allocation2 + $0xa8] sm:$0xff]
        %v534 = vld [vmem:[#allocation2 + $0xb0] sm:$0xff]
        %v535 = vld [vmem:[#allocation2 + $0xb8] sm:$0xff]
        %v536 = vld [vmem:[#allocation2 + $0xc0] sm:$0xff]
        %v537 = vld [vmem:[#allocation2 + $0xc8] sm:$0xff]
        %v538 = vld [vmem:[#allocation2 + $0xd0] sm:$0xff]
        %v539 = vld [vmem:[#allocation2 + $0xd8] sm:$0xff]
        %v540 = vld [vmem:[#allocation2 + $0xe0] sm:$0xff]
        %v541 = vld [vmem:[#allocation2 + $0xe8] sm:$0xff]
        %v542 = vld [vmem:[#allocation2 + $0xf0] sm:$0xff]
        %v543 = vld [vmem:[#allocation2 + $0xf8] sm:$0xff]
        %v544 = vld [vmem:[%s418] sm:$0xff]
        %v545 = vld [vmem:[%s418 + $0x8] sm:$0xff]
        %v546 = vld [vmem:[%s418 + $0x10] sm:$0xff]
        %v547 = vld [vmem:[%s418 + $0x18] sm:$0xff]
        %v548 = vld [vmem:[%s418 + $0x20] sm:$0xff]
        %v549 = vld [vmem:[%s418 + $0x28] sm:$0xff]
        %v550 = vld [vmem:[%s418 + $0x30] sm:$0xff]
        %v551 = vld [vmem:[%s418 + $0x38] sm:$0xff]
        %v552 = vld [vmem:[%s418 + $0x40] sm:$0xff]
        %v553 = vld [vmem:[%s418 + $0x48] sm:$0xff]
        %v554 = vld [vmem:[%s418 + $0x50] sm:$0xff]
        %v555 = vld [vmem:[%s418 + $0x58] sm:$0xff]
        %v556 = vld [vmem:[%s418 + $0x60] sm:$0xff]
        %v557 = vld [vmem:[%s418 + $0x68] sm:$0xff]
        %v558 = vld [vmem:[%s418 + $0x70] sm:$0xff]
        %v559 = vld [vmem:[%s418 + $0x78] sm:$0xff]
        %v560 = vld [vmem:[%s418 + $0x80] sm:$0xff]
        %v561 = vld [vmem:[%s418 + $0x88] sm:$0xff]
        %v562 = vld [vmem:[%s418 + $0x90] sm:$0xff]
        %v563 = vld [vmem:[%s418 + $0x98] sm:$0xff]
        %v564 = vld [vmem:[%s418 + $0xa0] sm:$0xff]
        %v565 = vld [vmem:[%s418 + $0xa8] sm:$0xff]
        %v566 = vld [vmem:[%s418 + $0xb0] sm:$0xff]
        %v567 = vld [vmem:[%s418 + $0xb8] sm:$0xff]
        %v568 = vld [vmem:[%s418 + $0xc0] sm:$0xff]
        %v569 = vld [vmem:[%s418 + $0xc8] sm:$0xff]
        %v570 = vld [vmem:[%s418 + $0xd0] sm:$0xff]
        %v571 = vld [vmem:[%s418 + $0xd8] sm:$0xff]
        %v572 = vld [vmem:[%s418 + $0xe0] sm:$0xff]
        %v573 = vld [vmem:[%s418 + $0xe8] sm:$0xff]
        %v574 = vld [vmem:[%s418 + $0xf0] sm:$0xff]
        %v575 = vld [vmem:[%s418 + $0xf8] sm:$0xff]
        %v576 = vld [vmem:[%s461] sm:$0xf]
        %v577 = vld [vmem:[%s461 + $0x4] sm:$0xf]
        %v578 = vld [vmem:[%s461 + $0x8] sm:$0xf]
        %v579 = vld [vmem:[%s461 + $0xc] sm:$0xf]
        %v580 = vld [vmem:[%s461 + $0x10] sm:$0xf]
        %v581 = vld [vmem:[%s461 + $0x14] sm:$0xf]
        %v582 = vld [vmem:[%s461 + $0x18] sm:$0xf]
        %v583 = vld [vmem:[%s461 + $0x1c] sm:$0xf]
        %v584 = vld [vmem:[%s461 + $0x20] sm:$0xf]
        %v585 = vld [vmem:[%s461 + $0x24] sm:$0xf]
        %v586 = vld [vmem:[%s461 + $0x28] sm:$0xf]
        %v587 = vld [vmem:[%s461 + $0x2c] sm:$0xf]
        %v588 = vld [vmem:[%s461 + $0x30] sm:$0xf]
        %v589 = vld [vmem:[%s461 + $0x34] sm:$0xf]
        %v590 = vld [vmem:[%s461 + $0x38] sm:$0xf]
        %v591 = vld [vmem:[%s461 + $0x3c] sm:$0xf]
        %v592 = vld [vmem:[%s461 + $0x40] sm:$0xf]
        %v593 = vld [vmem:[%s461 + $0x44] sm:$0xf]
        %v594 = vld [vmem:[%s461 + $0x48] sm:$0xf]
        %v595 = vld [vmem:[%s461 + $0x4c] sm:$0xf]
        %v596 = vld [vmem:[%s461 + $0x50] sm:$0xf]
        %v597 = vld [vmem:[%s461 + $0x54] sm:$0xf]
        %v598 = vld [vmem:[%s461 + $0x58] sm:$0xf]
        %v599 = vld [vmem:[%s461 + $0x5c] sm:$0xf]
        %v600 = vld [vmem:[%s461 + $0x60] sm:$0xf]
        %v601 = vld [vmem:[%s461 + $0x64] sm:$0xf]
        %v602 = vld [vmem:[%s461 + $0x68] sm:$0xf]
        %v603 = vld [vmem:[%s461 + $0x6c] sm:$0xf]
        %v604 = vld [vmem:[%s461 + $0x70] sm:$0xf]
        %v605 = vld [vmem:[%s461 + $0x74] sm:$0xf]
        %v606 = vld [vmem:[%s461 + $0x78] sm:$0xf]
        %v607 = vld [vmem:[%s461 + $0x7c] sm:$0xf]
        %v640 = vunpack.c.l.b16 %v544
        %v641 = vunpack.c.h.b16 %v544
        %v642 = vunpack.c.l.b16 %v545
        %v643 = vunpack.c.h.b16 %v545
        %v644 = vunpack.c.l.b16 %v546
        %v645 = vunpack.c.h.b16 %v546
        %v646 = vunpack.c.l.b16 %v547
        %v647 = vunpack.c.h.b16 %v547
        %v648 = vunpack.c.l.b16 %v548
        %v649 = vunpack.c.h.b16 %v548
        %v650 = vunpack.c.l.b16 %v549
        %v651 = vunpack.c.h.b16 %v549
        %v652 = vunpack.c.l.b16 %v550
        %v653 = vunpack.c.h.b16 %v550
        %v654 = vunpack.c.l.b16 %v551
        %v655 = vunpack.c.h.b16 %v551
        %v656 = vunpack.c.l.b16 %v552
        %v657 = vunpack.c.h.b16 %v552
        %v658 = vunpack.c.l.b16 %v553
        %v659 = vunpack.c.h.b16 %v553
        %v660 = vunpack.c.l.b16 %v554
        %v661 = vunpack.c.h.b16 %v554
        %v662 = vunpack.c.l.b16 %v555
        %v663 = vunpack.c.h.b16 %v555
        %v664 = vunpack.c.l.b16 %v556
        %v665 = vunpack.c.h.b16 %v556
        %v666 = vunpack.c.l.b16 %v557
        %v667 = vunpack.c.h.b16 %v557
        %v668 = vunpack.c.l.b16 %v558
        %v669 = vunpack.c.h.b16 %v558
        %v670 = vunpack.c.l.b16 %v559
        %v671 = vunpack.c.h.b16 %v559
        %v672 = vunpack.c.l.b16 %v560
        %v673 = vunpack.c.h.b16 %v560
        %v674 = vunpack.c.l.b16 %v561
        %v675 = vunpack.c.h.b16 %v561
        %v676 = vunpack.c.l.b16 %v562
        %v677 = vunpack.c.h.b16 %v562
        %v678 = vunpack.c.l.b16 %v563
        %v679 = vunpack.c.h.b16 %v563
        %v680 = vunpack.c.l.b16 %v564
        %v681 = vunpack.c.h.b16 %v564
        %v682 = vunpack.c.l.b16 %v565
        %v683 = vunpack.c.h.b16 %v565
        %v684 = vunpack.c.l.b16 %v566
        %v685 = vunpack.c.h.b16 %v566
        %v686 = vunpack.c.l.b16 %v567
        %v687 = vunpack.c.h.b16 %v567
        %v688 = vunpack.c.l.b16 %v568
        %v689 = vunpack.c.h.b16 %v568
        %v690 = vunpack.c.l.b16 %v569
        %v691 = vunpack.c.h.b16 %v569
        %v692 = vunpack.c.l.b16 %v570
        %v693 = vunpack.c.h.b16 %v570
        %v694 = vunpack.c.l.b16 %v571
        %v695 = vunpack.c.h.b16 %v571
        %v696 = vunpack.c.l.b16 %v572
        %v697 = vunpack.c.h.b16 %v572
        %v698 = vunpack.c.l.b16 %v573
        %v699 = vunpack.c.h.b16 %v573
        %v700 = vunpack.c.l.b16 %v574
        %v701 = vunpack.c.h.b16 %v574
        %v702 = vunpack.c.l.b16 %v575
        %v703 = vunpack.c.h.b16 %v575
        %v704 = vpack.c.b16 %v642, %v640
        %v705 = vpack.c.b16 %v643, %v641
        %v706 = vpack.c.b16 %v646, %v644
        %v707 = vpack.c.b16 %v647, %v645
        %v708 = vpack.c.b16 %v650, %v648
        %v709 = vpack.c.b16 %v651, %v649
        %v710 = vpack.c.b16 %v654, %v652
        %v711 = vpack.c.b16 %v655, %v653
        %v712 = vpack.c.b16 %v658, %v656
        %v713 = vpack.c.b16 %v659, %v657
        %v714 = vpack.c.b16 %v662, %v660
        %v715 = vpack.c.b16 %v663, %v661
        %v716 = vpack.c.b16 %v666, %v664
        %v717 = vpack.c.b16 %v667, %v665
        %v718 = vpack.c.b16 %v670, %v668
        %v719 = vpack.c.b16 %v671, %v669
        %v720 = vpack.c.b16 %v674, %v672
        %v721 = vpack.c.b16 %v675, %v673
        %v722 = vpack.c.b16 %v678, %v676
        %v723 = vpack.c.b16 %v679, %v677
        %v724 = vpack.c.b16 %v682, %v680
        %v725 = vpack.c.b16 %v683, %v681
        %v726 = vpack.c.b16 %v686, %v684
        %v727 = vpack.c.b16 %v687, %v685
        %v728 = vpack.c.b16 %v690, %v688
        %v729 = vpack.c.b16 %v691, %v689
        %v730 = vpack.c.b16 %v694, %v692
        %v731 = vpack.c.b16 %v695, %v693
        %v732 = vpack.c.b16 %v698, %v696
        %v733 = vpack.c.b16 %v699, %v697
        %v734 = vpack.c.b16 %v702, %v700
        %v735 = vpack.c.b16 %v703, %v701
        %v800 = vunpack.c.l.b16 %v576
        %v801 = vunpack.c.l.b16 %v577
        %v802 = vunpack.c.l.b16 %v578
        %v803 = vunpack.c.l.b16 %v579
        %v804 = vunpack.c.l.b16 %v580
        %v805 = vunpack.c.l.b16 %v581
        %v806 = vunpack.c.l.b16 %v582
        %v807 = vunpack.c.l.b16 %v583
        %v808 = vunpack.c.l.b16 %v584
        %v809 = vunpack.c.l.b16 %v585
        %v810 = vunpack.c.l.b16 %v586
        %v811 = vunpack.c.l.b16 %v587
        %v812 = vunpack.c.l.b16 %v588
        %v813 = vunpack.c.l.b16 %v589
        %v814 = vunpack.c.l.b16 %v590
        %v815 = vunpack.c.l.b16 %v591
        %v816 = vunpack.c.l.b16 %v592
        %v817 = vunpack.c.l.b16 %v593
        %v818 = vunpack.c.l.b16 %v594
        %v819 = vunpack.c.l.b16 %v595
        %v820 = vunpack.c.l.b16 %v596
        %v821 = vunpack.c.l.b16 %v597
        %v822 = vunpack.c.l.b16 %v598
        %v823 = vunpack.c.l.b16 %v599
        %v824 = vunpack.c.l.b16 %v600
        %v825 = vunpack.c.l.b16 %v601
        %v826 = vunpack.c.l.b16 %v602
        %v827 = vunpack.c.l.b16 %v603
        %v828 = vunpack.c.l.b16 %v604
        %v829 = vunpack.c.l.b16 %v605
        %v830 = vunpack.c.l.b16 %v606
        %v831 = vunpack.c.l.b16 %v607
        %v832 = vpack.c.b16 %v801, %v800
        %v833 = vpack.c.b16 %v803, %v802
        %v834 = vpack.c.b16 %v805, %v804
        %v835 = vpack.c.b16 %v807, %v806
        %v836 = vpack.c.b16 %v809, %v808
        %v837 = vpack.c.b16 %v811, %v810
        %v838 = vpack.c.b16 %v813, %v812
        %v839 = vpack.c.b16 %v815, %v814
        %v840 = vpack.c.b16 %v817, %v816
        %v841 = vpack.c.b16 %v819, %v818
        %v842 = vpack.c.b16 %v821, %v820
        %v843 = vpack.c.b16 %v823, %v822
        %v844 = vpack.c.b16 %v825, %v824
        %v845 = vpack.c.b16 %v827, %v826
        %v846 = vpack.c.b16 %v829, %v828
        %v847 = vpack.c.b16 %v831, %v830
        %864 = vmatprep.subr.bf16.mxu0 0
        %865 = vmatpush1.bf16.msra.mxu0 %v832
        %866 = vmatprep.subr.bf16.mxu0 0
        %867 = vmatpush1.bf16.msra.mxu0 %v833
        %868 = vmatprep.subr.bf16.mxu0 0
        %869 = vmatpush1.bf16.msra.mxu0 %v834
        %870 = vmatprep.subr.bf16.mxu0 0
        %871 = vmatpush1.bf16.msra.mxu0 %v835
        %872 = vmatprep.subr.bf16.mxu0 0
        %873 = vmatpush1.bf16.msra.mxu0 %v836
        %874 = vmatprep.subr.bf16.mxu0 0
        %875 = vmatpush1.bf16.msra.mxu0 %v837
        %876 = vmatprep.subr.bf16.mxu0 0
        %877 = vmatpush1.bf16.msra.mxu0 %v838
        %878 = vmatprep.subr.bf16.mxu0 0
        %879 = vmatpush1.bf16.msra.mxu0 %v839
        %880 = vmatprep.subr.bf16.mxu0 0
        %881 = vmatpush1.bf16.msra.mxu0 %v840
        %882 = vmatprep.subr.bf16.mxu0 0
        %883 = vmatpush1.bf16.msra.mxu0 %v841
        %884 = vmatprep.subr.bf16.mxu0 0
        %885 = vmatpush1.bf16.msra.mxu0 %v842
        %886 = vmatprep.subr.bf16.mxu0 0
        %887 = vmatpush1.bf16.msra.mxu0 %v843
        %888 = vmatprep.subr.bf16.mxu0 0
        %889 = vmatpush1.bf16.msra.mxu0 %v844
        %890 = vmatprep.subr.bf16.mxu0 0
        %891 = vmatpush1.bf16.msra.mxu0 %v845
        %892 = vmatprep.subr.bf16.mxu0 0
        %893 = vmatpush1.bf16.msra.mxu0 %v846
        %894 = vmatprep.subr.bf16.mxu0 0
        %895 = vmatpush1.bf16.msra.mxu0 %v847
        %896 = vmatprep.mubr.bf16.mxu0 %v705
        %897 = vmatmul.mubr.bf16.gmra.mrb[0].mxu0 %v704
        %v898 = vpop.f32.mrb[0].mxu0
        %v899 = vadd.f32 0.0, %v898
        %v900 = vpop.f32.mrb[0].mxu0
        %v901 = vpop.f32.mrb[0].mxu0
        %v902 = vadd.f32 0.0, %v901
        %v903 = vpop.f32.mrb[0].mxu0
        %904 = vmatprep.mubr.bf16.mxu0 %v707
        %905 = vmatmul.mubr.bf16.gmra.mrb[0].mxu0 %v706
        %v906 = vpop.f32.mrb[0].mxu0
        %v907 = vadd.f32 0.0, %v906
        %v908 = vpop.f32.mrb[0].mxu0
        %v909 = vpop.f32.mrb[0].mxu0
        %v910 = vadd.f32 0.0, %v909
        %v911 = vpop.f32.mrb[0].mxu0
        %912 = vmatprep.mubr.bf16.mxu0 %v709
        %913 = vmatmul.mubr.bf16.gmra.mrb[0].mxu0 %v708
        %v914 = vpop.f32.mrb[0].mxu0
        %v915 = vadd.f32 0.0, %v914
        %v916 = vpop.f32.mrb[0].mxu0
        %v917 = vpop.f32.mrb[0].mxu0
        %v918 = vadd.f32 0.0, %v917
        %v919 = vpop.f32.mrb[0].mxu0
        %920 = vmatprep.mubr.bf16.mxu0 %v711
        %921 = vmatmul.mubr.bf16.gmra.mrb[0].mxu0 %v710
        %v922 = vpop.f32.mrb[0].mxu0
        %v923 = vadd.f32 0.0, %v922
        %v924 = vpop.f32.mrb[0].mxu0
        %v925 = vpop.f32.mrb[0].mxu0
        %v926 = vadd.f32 0.0, %v925
        %v927 = vpop.f32.mrb[0].mxu0
        %928 = vmatprep.mubr.bf16.mxu0 %v713
        %929 = vmatmul.mubr.bf16.gmra.mrb[0].mxu0 %v712
        %v930 = vpop.f32.mrb[0].mxu0
        %v931 = vadd.f32 0.0, %v930
        %v932 = vpop.f32.mrb[0].mxu0
        %v933 = vpop.f32.mrb[0].mxu0
        %v934 = vadd.f32 0.0, %v933
        %v935 = vpop.f32.mrb[0].mxu0
        %936 = vmatprep.mubr.bf16.mxu0 %v715
        %937 = vmatmul.mubr.bf16.gmra.mrb[0].mxu0 %v714
        %v938 = vpop.f32.mrb[0].mxu0
        %v939 = vadd.f32 0.0, %v938
        %v940 = vpop.f32.mrb[0].mxu0
        %v941 = vpop.f32.mrb[0].mxu0
        %v942 = vadd.f32 0.0, %v941
        %v943 = vpop.f32.mrb[0].mxu0
        %944 = vmatprep.mubr.bf16.mxu0 %v717
        %945 = vmatmul.mubr.bf16.gmra.mrb[0].mxu0 %v716
        %v946 = vpop.f32.mrb[0].mxu0
        %v947 = vadd.f32 0.0, %v946
        %v948 = vpop.f32.mrb[0].mxu0
        %v949 = vpop.f32.mrb[0].mxu0
        %v950 = vadd.f32 0.0, %v949
        %v951 = vpop.f32.mrb[0].mxu0
        %952 = vmatprep.mubr.bf16.mxu0 %v719
        %953 = vmatmul.mubr.bf16.gmra.mrb[0].mxu0 %v718
        %v954 = vpop.f32.mrb[0].mxu0
        %v955 = vadd.f32 0.0, %v954
        %v956 = vpop.f32.mrb[0].mxu0
        %v957 = vpop.f32.mrb[0].mxu0
        %v958 = vadd.f32 0.0, %v957
        %v959 = vpop.f32.mrb[0].mxu0
        %960 = vmatprep.mubr.bf16.mxu0 %v721
        %961 = vmatmul.mubr.bf16.gmra.mrb[0].mxu0 %v720
        %v962 = vpop.f32.mrb[0].mxu0
        %v963 = vadd.f32 0.0, %v962
        %v964 = vpop.f32.mrb[0].mxu0
        %v965 = vpop.f32.mrb[0].mxu0
        %v966 = vadd.f32 0.0, %v965
        %v967 = vpop.f32.mrb[0].mxu0
        %968 = vmatprep.mubr.bf16.mxu0 %v723
        %969 = vmatmul.mubr.bf16.gmra.mrb[0].mxu0 %v722
        %v970 = vpop.f32.mrb[0].mxu0
        %v971 = vadd.f32 0.0, %v970
        %v972 = vpop.f32.mrb[0].mxu0
        %v973 = vpop.f32.mrb[0].mxu0
        %v974 = vadd.f32 0.0, %v973
        %v975 = vpop.f32.mrb[0].mxu0
        %976 = vmatprep.mubr.bf16.mxu0 %v725
        %977 = vmatmul.mubr.bf16.gmra.mrb[0].mxu0 %v724
        %v978 = vpop.f32.mrb[0].mxu0
        %v979 = vadd.f32 0.0, %v978
        %v980 = vpop.f32.mrb[0].mxu0
        %v981 = vpop.f32.mrb[0].mxu0
        %v982 = vadd.f32 0.0, %v981
        %v983 = vpop.f32.mrb[0].mxu0
        %984 = vmatprep.mubr.bf16.mxu0 %v727
        %985 = vmatmul.mubr.bf16.gmra.mrb[0].mxu0 %v726
        %v986 = vpop.f32.mrb[0].mxu0
        %v987 = vadd.f32 0.0, %v986
        %v988 = vpop.f32.mrb[0].mxu0
        %v989 = vpop.f32.mrb[0].mxu0
        %v990 = vadd.f32 0.0, %v989
        %v991 = vpop.f32.mrb[0].mxu0
        %992 = vmatprep.mubr.bf16.mxu0 %v729
        %993 = vmatmul.mubr.bf16.gmra.mrb[0].mxu0 %v728
        %v994 = vpop.f32.mrb[0].mxu0
        %v995 = vadd.f32 0.0, %v994
        %v996 = vpop.f32.mrb[0].mxu0
        %v997 = vpop.f32.mrb[0].mxu0
        %v998 = vadd.f32 0.0, %v997
        %v999 = vpop.f32.mrb[0].mxu0
        %1000 = vmatprep.mubr.bf16.mxu0 %v731
        %1001 = vmatmul.mubr.bf16.gmra.mrb[0].mxu0 %v730
        %v1002 = vpop.f32.mrb[0].mxu0
        %v1003 = vadd.f32 0.0, %v1002
        %v1004 = vpop.f32.mrb[0].mxu0
        %v1005 = vpop.f32.mrb[0].mxu0
        %v1006 = vadd.f32 0.0, %v1005
        %v1007 = vpop.f32.mrb[0].mxu0
        %1008 = vmatprep.mubr.bf16.mxu0 %v733
        %1009 = vmatmul.mubr.bf16.gmra.mrb[0].mxu0 %v732
        %v1010 = vpop.f32.mrb[0].mxu0
        %v1011 = vadd.f32 0.0, %v1010
        %v1012 = vpop.f32.mrb[0].mxu0
        %v1013 = vpop.f32.mrb[0].mxu0
        %v1014 = vadd.f32 0.0, %v1013
        %v1015 = vpop.f32.mrb[0].mxu0
        %1016 = vmatprep.mubr.bf16.mxu0 %v735
        %1017 = vmatmul.mubr.bf16.gmra.mrb[0].mxu0 %v734
        %v1018 = vpop.f32.mrb[0].mxu0
        %v1019 = vadd.f32 0.0, %v1018
        %v1020 = vpop.f32.mrb[0].mxu0
        %v1021 = vpop.f32.mrb[0].mxu0
        %v1022 = vadd.f32 0.0, %v1021
        %v1023 = vpop.f32.mrb[0].mxu0
        %1024 = vdwg.mxu0
        %v1025 = vadd.f32 %v512, %v899
        %v1026 = vadd.f32 %v513, %v902
        %v1027 = vadd.f32 %v514, %v907
        %v1028 = vadd.f32 %v515, %v910
        %v1029 = vadd.f32 %v516, %v915
        %v1030 = vadd.f32 %v517, %v918
        %v1031 = vadd.f32 %v518, %v923
        %v1032 = vadd.f32 %v519, %v926
        %v1033 = vadd.f32 %v520, %v931
        %v1034 = vadd.f32 %v521, %v934
        %v1035 = vadd.f32 %v522, %v939
        %v1036 = vadd.f32 %v523, %v942
        %v1037 = vadd.f32 %v524, %v947
        %v1038 = vadd.f32 %v525, %v950
        %v1039 = vadd.f32 %v526, %v955
        %v1040 = vadd.f32 %v527, %v958
        %v1041 = vadd.f32 %v528, %v963
        %v1042 = vadd.f32 %v529, %v966
        %v1043 = vadd.f32 %v530, %v971
        %v1044 = vadd.f32 %v531, %v974
        %v1045 = vadd.f32 %v532, %v979
        %v1046 = vadd.f32 %v533, %v982
        %v1047 = vadd.f32 %v534, %v987
        %v1048 = vadd.f32 %v535, %v990
        %v1049 = vadd.f32 %v536, %v995
        %v1050 = vadd.f32 %v537, %v998
        %v1051 = vadd.f32 %v538, %v1003
        %v1052 = vadd.f32 %v539, %v1006
        %v1053 = vadd.f32 %v540, %v1011
        %v1054 = vadd.f32 %v541, %v1014
        %v1055 = vadd.f32 %v542, %v1019
        %v1056 = vadd.f32 %v543, %v1022
        %1057 = vst [vmem:[#allocation2] sm:$0xff] %v1025
        %1058 = vst [vmem:[#allocation2 + $0x8] sm:$0xff] %v1026
        %1059 = vst [vmem:[#allocation2 + $0x10] sm:$0xff] %v1027
        %1060 = vst [vmem:[#allocation2 + $0x18] sm:$0xff] %v1028
        %1061 = vst [vmem:[#allocation2 + $0x20] sm:$0xff] %v1029
        %1062 = vst [vmem:[#allocation2 + $0x28] sm:$0xff] %v1030
        %1063 = vst [vmem:[#allocation2 + $0x30] sm:$0xff] %v1031
        %1064 = vst [vmem:[#allocation2 + $0x38] sm:$0xff] %v1032
        %1065 = vst [vmem:[#allocation2 + $0x40] sm:$0xff] %v1033
        %1066 = vst [vmem:[#allocation2 + $0x48] sm:$0xff] %v1034
        %1067 = vst [vmem:[#allocation2 + $0x50] sm:$0xff] %v1035
        %1068 = vst [vmem:[#allocation2 + $0x58] sm:$0xff] %v1036
        %1069 = vst [vmem:[#allocation2 + $0x60] sm:$0xff] %v1037
        %1070 = vst [vmem:[#allocation2 + $0x68] sm:$0xff] %v1038
        %1071 = vst [vmem:[#allocation2 + $0x70] sm:$0xff] %v1039
        %1072 = vst [vmem:[#allocation2 + $0x78] sm:$0xff] %v1040
        %1073 = vst [vmem:[#allocation2 + $0x80] sm:$0xff] %v1041
        %1074 = vst [vmem:[#allocation2 + $0x88] sm:$0xff] %v1042
        %1075 = vst [vmem:[#allocation2 + $0x90] sm:$0xff] %v1043
        %1076 = vst [vmem:[#allocation2 + $0x98] sm:$0xff] %v1044
        %1077 = vst [vmem:[#allocation2 + $0xa0] sm:$0xff] %v1045
        %1078 = vst [vmem:[#allocation2 + $0xa8] sm:$0xff] %v1046
        %1079 = vst [vmem:[#allocation2 + $0xb0] sm:$0xff] %v1047
        %1080 = vst [vmem:[#allocation2 + $0xb8] sm:$0xff] %v1048
        %1081 = vst [vmem:[#allocation2 + $0xc0] sm:$0xff] %v1049
        %1082 = vst [vmem:[#allocation2 + $0xc8] sm:$0xff] %v1050
        %1083 = vst [vmem:[#allocation2 + $0xd0] sm:$0xff] %v1051
        %1084 = vst [vmem:[#allocation2 + $0xd8] sm:$0xff] %v1052
        %1085 = vst [vmem:[#allocation2 + $0xe0] sm:$0xff] %v1053
        %1086 = vst [vmem:[#allocation2 + $0xe8] sm:$0xff] %v1054
        %1087 = vst [vmem:[#allocation2 + $0xf0] sm:$0xff] %v1055
        %1088 = vst [vmem:[#allocation2 + $0xf8] sm:$0xff] %v1056
        %p1089 = scmp.eq.s32.totalorder %s22, 1
        // Predicated region
        $region87: #{sage_forward.3} parent=77 // pred_check
          %p1090 = pneg %p1089
        $region88: #{sage_forward.3} parent=77 // pred_check_branch
          %1092 = sbr.rel (%p1090) target = $region90
        $region89: #{sage_forward.3} parent=77 // pred_region
          %v1093 = vld [vmem:[#allocation2] sm:$0xff]
          %v1094 = vld [vmem:[#allocation2 + $0x8] sm:$0xff]
          %v1095 = vld [vmem:[#allocation2 + $0x10] sm:$0xff]
          %v1096 = vld [vmem:[#allocation2 + $0x18] sm:$0xff]
          %v1097 = vld [vmem:[#allocation2 + $0x20] sm:$0xff]
          %v1098 = vld [vmem:[#allocation2 + $0x28] sm:$0xff]
          %v1099 = vld [vmem:[#allocation2 + $0x30] sm:$0xff]
          %v1100 = vld [vmem:[#allocation2 + $0x38] sm:$0xff]
          %v1101 = vld [vmem:[#allocation2 + $0x40] sm:$0xff]
          %v1102 = vld [vmem:[#allocation2 + $0x48] sm:$0xff]
          %v1103 = vld [vmem:[#allocation2 + $0x50] sm:$0xff]
          %v1104 = vld [vmem:[#allocation2 + $0x58] sm:$0xff]
          %v1105 = vld [vmem:[#allocation2 + $0x60] sm:$0xff]
          %v1106 = vld [vmem:[#allocation2 + $0x68] sm:$0xff]
          %v1107 = vld [vmem:[#allocation2 + $0x70] sm:$0xff]
          %v1108 = vld [vmem:[#allocation2 + $0x78] sm:$0xff]
          %v1109 = vld [vmem:[#allocation2 + $0x80] sm:$0xff]
          %v1110 = vld [vmem:[#allocation2 + $0x88] sm:$0xff]
          %v1111 = vld [vmem:[#allocation2 + $0x90] sm:$0xff]
          %v1112 = vld [vmem:[#allocation2 + $0x98] sm:$0xff]
          %v1113 = vld [vmem:[#allocation2 + $0xa0] sm:$0xff]
          %v1114 = vld [vmem:[#allocation2 + $0xa8] sm:$0xff]
          %v1115 = vld [vmem:[#allocation2 + $0xb0] sm:$0xff]
          %v1116 = vld [vmem:[#allocation2 + $0xb8] sm:$0xff]
          %v1117 = vld [vmem:[#allocation2 + $0xc0] sm:$0xff]
          %v1118 = vld [vmem:[#allocation2 + $0xc8] sm:$0xff]
          %v1119 = vld [vmem:[#allocation2 + $0xd0] sm:$0xff]
          %v1120 = vld [vmem:[#allocation2 + $0xd8] sm:$0xff]
          %v1121 = vld [vmem:[#allocation2 + $0xe0] sm:$0xff]
          %v1122 = vld [vmem:[#allocation2 + $0xe8] sm:$0xff]
          %v1123 = vld [vmem:[#allocation2 + $0xf0] sm:$0xff]
          %v1124 = vld [vmem:[#allocation2 + $0xf8] sm:$0xff]
          %v1125 = vld [vmem:[%s3] sm:$0xff]
          %v1126 = vld [vmem:[%s3 + $0x8] sm:$0xff]
          %v1127 = vld [vmem:[%s3 + $0x10] sm:$0xff]
          %v1128 = vld [vmem:[%s3 + $0x18] sm:$0xff]
          %v1129 = vld [vmem:[%s3 + $0x20] sm:$0xff]
          %v1130 = vld [vmem:[%s3 + $0x28] sm:$0xff]
          %v1131 = vld [vmem:[%s3 + $0x30] sm:$0xff]
          %v1132 = vld [vmem:[%s3 + $0x38] sm:$0xff]
          %v1133 = vld [vmem:[%s3 + $0x40] sm:$0xff]
          %v1134 = vld [vmem:[%s3 + $0x48] sm:$0xff]
          %v1135 = vld [vmem:[%s3 + $0x50] sm:$0xff]
          %v1136 = vld [vmem:[%s3 + $0x58] sm:$0xff]
          %v1137 = vld [vmem:[%s3 + $0x60] sm:$0xff]
          %v1138 = vld [vmem:[%s3 + $0x68] sm:$0xff]
          %v1139 = vld [vmem:[%s3 + $0x70] sm:$0xff]
          %v1140 = vld [vmem:[%s3 + $0x78] sm:$0xff]
          %v1141 = vld [vmem:[%s467] sm:$0xff]
          %v1142 = vld [vmem:[%s467 + $0x8] sm:$0xff]
          %v1143 = vld [vmem:[%s467 + $0x10] sm:$0xff]
          %v1144 = vld [vmem:[%s467 + $0x18] sm:$0xff]
          %v1145 = vld [vmem:[%s467 + $0x20] sm:$0xff]
          %v1146 = vld [vmem:[%s467 + $0x28] sm:$0xff]
          %v1147 = vld [vmem:[%s467 + $0x30] sm:$0xff]
          %v1148 = vld [vmem:[%s467 + $0x38] sm:$0xff]
          %v1149 = vld [vmem:[%s467 + $0x40] sm:$0xff]
          %v1150 = vld [vmem:[%s467 + $0x48] sm:$0xff]
          %v1151 = vld [vmem:[%s467 + $0x50] sm:$0xff]
          %v1152 = vld [vmem:[%s467 + $0x58] sm:$0xff]
          %v1153 = vld [vmem:[%s467 + $0x60] sm:$0xff]
          %v1154 = vld [vmem:[%s467 + $0x68] sm:$0xff]
          %v1155 = vld [vmem:[%s467 + $0x70] sm:$0xff]
          %v1156 = vld [vmem:[%s467 + $0x78] sm:$0xff]
          %v1157 = vld [vmem:[%s467 + $0x80] sm:$0xff]
          %v1158 = vld [vmem:[%s467 + $0x88] sm:$0xff]
          %v1159 = vld [vmem:[%s467 + $0x90] sm:$0xff]
          %v1160 = vld [vmem:[%s467 + $0x98] sm:$0xff]
          %v1161 = vld [vmem:[%s467 + $0xa0] sm:$0xff]
          %v1162 = vld [vmem:[%s467 + $0xa8] sm:$0xff]
          %v1163 = vld [vmem:[%s467 + $0xb0] sm:$0xff]
          %v1164 = vld [vmem:[%s467 + $0xb8] sm:$0xff]
          %v1165 = vld [vmem:[%s467 + $0xc0] sm:$0xff]
          %v1166 = vld [vmem:[%s467 + $0xc8] sm:$0xff]
          %v1167 = vld [vmem:[%s467 + $0xd0] sm:$0xff]
          %v1168 = vld [vmem:[%s467 + $0xd8] sm:$0xff]
          %v1169 = vld [vmem:[%s467 + $0xe0] sm:$0xff]
          %v1170 = vld [vmem:[%s467 + $0xe8] sm:$0xff]
          %v1171 = vld [vmem:[%s467 + $0xf0] sm:$0xff]
          %v1172 = vld [vmem:[%s467 + $0xf8] sm:$0xff]
          %v1173 = vld [vmem:[%s4] sm:$0xff]
          %v1174 = vld [vmem:[%s4 + $0x8] sm:$0xff]
          %v1175 = vld [vmem:[%s4 + $0x10] sm:$0xff]
          %v1176 = vld [vmem:[%s4 + $0x18] sm:$0xff]
          %v1177 = vld [vmem:[%s4 + $0x20] sm:$0xff]
          %v1178 = vld [vmem:[%s4 + $0x28] sm:$0xff]
          %v1179 = vld [vmem:[%s4 + $0x30] sm:$0xff]
          %v1180 = vld [vmem:[%s4 + $0x38] sm:$0xff]
          %v1181 = vld [vmem:[%s4 + $0x40] sm:$0xff]
          %v1182 = vld [vmem:[%s4 + $0x48] sm:$0xff]
          %v1183 = vld [vmem:[%s4 + $0x50] sm:$0xff]
          %v1184 = vld [vmem:[%s4 + $0x58] sm:$0xff]
          %v1185 = vld [vmem:[%s4 + $0x60] sm:$0xff]
          %v1186 = vld [vmem:[%s4 + $0x68] sm:$0xff]
          %v1187 = vld [vmem:[%s4 + $0x70] sm:$0xff]
          %v1188 = vld [vmem:[%s4 + $0x78] sm:$0xff]
          %1189 = vmatprep.subr.mxu0 0.0
          %1190 = vmatpush1.msra.mxu0 %v1173
          %1191 = vmatprep.subr.mxu0 0.0
          %1192 = vmatpush1.msra.mxu0 %v1174
          %1193 = vmatprep.subr.mxu0 0.0
          %1194 = vmatpush1.msra.mxu0 %v1175
          %1195 = vmatprep.subr.mxu0 0.0
          %1196 = vmatpush1.msra.mxu0 %v1176
          %1197 = vmatprep.subr.mxu0 0.0
          %1198 = vmatpush1.msra.mxu0 %v1177
          %1199 = vmatprep.subr.mxu0 0.0
          %1200 = vmatpush1.msra.mxu0 %v1178
          %1201 = vmatprep.subr.mxu0 0.0
          %1202 = vmatpush1.msra.mxu0 %v1179
          %1203 = vmatprep.subr.mxu0 0.0
          %1204 = vmatpush1.msra.mxu0 %v1180
          %1205 = vmatprep.subr.mxu0 0.0
          %1206 = vmatpush1.msra.mxu0 %v1181
          %1207 = vmatprep.subr.mxu0 0.0
          %1208 = vmatpush1.msra.mxu0 %v1182
          %1209 = vmatprep.subr.mxu0 0.0
          %1210 = vmatpush1.msra.mxu0 %v1183
          %1211 = vmatprep.subr.mxu0 0.0
          %1212 = vmatpush1.msra.mxu0 %v1184
          %1213 = vmatprep.subr.mxu0 0.0
          %1214 = vmatpush1.msra.mxu0 %v1185
          %1215 = vmatprep.subr.mxu0 0.0
          %1216 = vmatpush1.msra.mxu0 %v1186
          %1217 = vmatprep.subr.mxu0 0.0
          %1218 = vmatpush1.msra.mxu0 %v1187
          %1219 = vmatprep.subr.mxu0 0.0
          %1220 = vmatpush1.msra.mxu0 %v1188
          %1221 = vmatprep.subr.mxu0 0.0
          %1222 = vmatpush1.msra.mxu0 0.0
          %1223 = vmatprep.subr.mxu0 0.0
          %1224 = vmatpush1.msra.mxu0 0.0
          %1225 = vmatprep.subr.mxu0 0.0
          %1226 = vmatpush1.msra.mxu0 0.0
          %1227 = vmatprep.subr.mxu0 0.0
          %1228 = vmatpush1.msra.mxu0 0.0
          %1229 = vmatprep.subr.mxu0 0.0
          %1230 = vmatpush1.msra.mxu0 0.0
          %1231 = vmatprep.subr.mxu0 0.0
          %1232 = vmatpush1.msra.mxu0 0.0
          %1233 = vmatprep.subr.mxu0 0.0
          %1234 = vmatpush1.msra.mxu0 0.0
          %1235 = vmatprep.subr.mxu0 0.0
          %1236 = vmatpush1.msra.mxu0 0.0
          %1237 = vmatprep.subr.mxu0 0.0
          %1238 = vmatpush1.msra.mxu0 0.0
          %1239 = vmatprep.subr.mxu0 0.0
          %1240 = vmatpush1.msra.mxu0 0.0
          %1241 = vmatprep.subr.mxu0 0.0
          %1242 = vmatpush1.msra.mxu0 0.0
          %1243 = vmatprep.subr.mxu0 0.0
          %1244 = vmatpush1.msra.mxu0 0.0
          %1245 = vmatprep.subr.mxu0 0.0
          %1246 = vmatpush1.msra.mxu0 0.0
          %1247 = vmatprep.subr.mxu0 0.0
          %1248 = vmatpush1.msra.mxu0 0.0
          %1249 = vmatprep.subr.mxu0 0.0
          %1250 = vmatpush1.msra.mxu0 0.0
          %1251 = vmatprep.subr.mxu0 0.0
          %1252 = vmatpush1.msra.mxu0 0.0
          %1253 = vmatprep.mubr.f32.mxu0 0.0
          %1254 = vmatmul.mubr.f32.gmra.mrb[0].mxu0 %v1141
          %v1255 = vpop.f32.mrb[0].mxu0
          %v1256 = vadd.f32 0.0, %v1255
          %v1257 = vpop.f32.mrb[0].mxu0
          %1258 = vmatprep.mubr.f32.mxu0 0.0
          %1259 = vmatmul.mubr.f32.gmra.mrb[0].mxu0 %v1142
          %v1260 = vpop.f32.mrb[0].mxu0
          %v1261 = vadd.f32 0.0, %v1260
          %v1262 = vpop.f32.mrb[0].mxu0
          %1263 = vmatprep.mubr.f32.mxu0 0.0
          %1264 = vmatmul.mubr.f32.gmra.mrb[0].mxu0 %v1143
          %v1265 = vpop.f32.mrb[0].mxu0
          %v1266 = vadd.f32 0.0, %v1265
          %v1267 = vpop.f32.mrb[0].mxu0
          %1268 = vmatprep.mubr.f32.mxu0 0.0
          %1269 = vmatmul.mubr.f32.gmra.mrb[0].mxu0 %v1144
          %v1270 = vpop.f32.mrb[0].mxu0
          %v1271 = vadd.f32 0.0, %v1270
          %v1272 = vpop.f32.mrb[0].mxu0
          %1273 = vmatprep.mubr.f32.mxu0 0.0
          %1274 = vmatmul.mubr.f32.gmra.mrb[0].mxu0 %v1145
          %v1275 = vpop.f32.mrb[0].mxu0
          %v1276 = vadd.f32 0.0, %v1275
          %v1277 = vpop.f32.mrb[0].mxu0
          %1278 = vmatprep.mubr.f32.mxu0 0.0
          %1279 = vmatmul.mubr.f32.gmra.mrb[0].mxu0 %v1146
          %v1280 = vpop.f32.mrb[0].mxu0
          %v1281 = vadd.f32 0.0, %v1280
          %v1282 = vpop.f32.mrb[0].mxu0
          %1283 = vmatprep.mubr.f32.mxu0 0.0
          %1284 = vmatmul.mubr.f32.gmra.mrb[0].mxu0 %v1147
          %v1285 = vpop.f32.mrb[0].mxu0
          %v1286 = vadd.f32 0.0, %v1285
          %v1287 = vpop.f32.mrb[0].mxu0
          %1288 = vmatprep.mubr.f32.mxu0 0.0
          %1289 = vmatmul.mubr.f32.gmra.mrb[0].mxu0 %v1148
          %v1290 = vpop.f32.mrb[0].mxu0
          %v1291 = vadd.f32 0.0, %v1290
          %v1292 = vpop.f32.mrb[0].mxu0
          %1293 = vmatprep.mubr.f32.mxu0 0.0
          %1294 = vmatmul.mubr.f32.gmra.mrb[0].mxu0 %v1149
          %v1295 = vpop.f32.mrb[0].mxu0
          %v1296 = vadd.f32 0.0, %v1295
          %v1297 = vpop.f32.mrb[0].mxu0
          %1298 = vmatprep.mubr.f32.mxu0 0.0
          %1299 = vmatmul.mubr.f32.gmra.mrb[0].mxu0 %v1150
          %v1300 = vpop.f32.mrb[0].mxu0
          %v1301 = vadd.f32 0.0, %v1300
          %v1302 = vpop.f32.mrb[0].mxu0
          %1303 = vmatprep.mubr.f32.mxu0 0.0
          %1304 = vmatmul.mubr.f32.gmra.mrb[0].mxu0 %v1151
          %v1305 = vpop.f32.mrb[0].mxu0
          %v1306 = vadd.f32 0.0, %v1305
          %v1307 = vpop.f32.mrb[0].mxu0
          %1308 = vmatprep.mubr.f32.mxu0 0.0
          %1309 = vmatmul.mubr.f32.gmra.mrb[0].mxu0 %v1152
          %v1310 = vpop.f32.mrb[0].mxu0
          %v1311 = vadd.f32 0.0, %v1310
          %v1312 = vpop.f32.mrb[0].mxu0
          %1313 = vmatprep.mubr.f32.mxu0 0.0
          %1314 = vmatmul.mubr.f32.gmra.mrb[0].mxu0 %v1153
          %v1315 = vpop.f32.mrb[0].mxu0
          %v1316 = vadd.f32 0.0, %v1315
          %v1317 = vpop.f32.mrb[0].mxu0
          %1318 = vmatprep.mubr.f32.mxu0 0.0
          %1319 = vmatmul.mubr.f32.gmra.mrb[0].mxu0 %v1154
          %v1320 = vpop.f32.mrb[0].mxu0
          %v1321 = vadd.f32 0.0, %v1320
          %v1322 = vpop.f32.mrb[0].mxu0
          %1323 = vmatprep.mubr.f32.mxu0 0.0
          %1324 = vmatmul.mubr.f32.gmra.mrb[0].mxu0 %v1155
          %v1325 = vpop.f32.mrb[0].mxu0
          %v1326 = vadd.f32 0.0, %v1325
          %v1327 = vpop.f32.mrb[0].mxu0
          %1328 = vmatprep.mubr.f32.mxu0 0.0
          %1329 = vmatmul.mubr.f32.gmra.mrb[0].mxu0 %v1156
          %v1330 = vpop.f32.mrb[0].mxu0
          %v1331 = vadd.f32 0.0, %v1330
          %v1332 = vpop.f32.mrb[0].mxu0
          %1333 = vmatprep.mubr.f32.mxu0 0.0
          %1334 = vmatmul.mubr.f32.gmra.mrb[0].mxu0 %v1157
          %v1335 = vpop.f32.mrb[0].mxu0
          %v1336 = vadd.f32 0.0, %v1335
          %v1337 = vpop.f32.mrb[0].mxu0
          %1338 = vmatprep.mubr.f32.mxu0 0.0
          %1339 = vmatmul.mubr.f32.gmra.mrb[0].mxu0 %v1158
          %v1340 = vpop.f32.mrb[0].mxu0
          %v1341 = vadd.f32 0.0, %v1340
          %v1342 = vpop.f32.mrb[0].mxu0
          %1343 = vmatprep.mubr.f32.mxu0 0.0
          %1344 = vmatmul.mubr.f32.gmra.mrb[0].mxu0 %v1159
          %v1345 = vpop.f32.mrb[0].mxu0
          %v1346 = vadd.f32 0.0, %v1345
          %v1347 = vpop.f32.mrb[0].mxu0
          %1348 = vmatprep.mubr.f32.mxu0 0.0
          %1349 = vmatmul.mubr.f32.gmra.mrb[0].mxu0 %v1160
          %v1350 = vpop.f32.mrb[0].mxu0
          %v1351 = vadd.f32 0.0, %v1350
          %v1352 = vpop.f32.mrb[0].mxu0
          %1353 = vmatprep.mubr.f32.mxu0 0.0
          %1354 = vmatmul.mubr.f32.gmra.mrb[0].mxu0 %v1161
          %v1355 = vpop.f32.mrb[0].mxu0
          %v1356 = vadd.f32 0.0, %v1355
          %v1357 = vpop.f32.mrb[0].mxu0
          %1358 = vmatprep.mubr.f32.mxu0 0.0
          %1359 = vmatmul.mubr.f32.gmra.mrb[0].mxu0 %v1162
          %v1360 = vpop.f32.mrb[0].mxu0
          %v1361 = vadd.f32 0.0, %v1360
          %v1362 = vpop.f32.mrb[0].mxu0
          %1363 = vmatprep.mubr.f32.mxu0 0.0
          %1364 = vmatmul.mubr.f32.gmra.mrb[0].mxu0 %v1163
          %v1365 = vpop.f32.mrb[0].mxu0
          %v1366 = vadd.f32 0.0, %v1365
          %v1367 = vpop.f32.mrb[0].mxu0
          %1368 = vmatprep.mubr.f32.mxu0 0.0
          %1369 = vmatmul.mubr.f32.gmra.mrb[0].mxu0 %v1164
          %v1370 = vpop.f32.mrb[0].mxu0
          %v1371 = vadd.f32 0.0, %v1370
          %v1372 = vpop.f32.mrb[0].mxu0
          %1373 = vmatprep.mubr.f32.mxu0 0.0
          %1374 = vmatmul.mubr.f32.gmra.mrb[0].mxu0 %v1165
          %v1375 = vpop.f32.mrb[0].mxu0
          %v1376 = vadd.f32 0.0, %v1375
          %v1377 = vpop.f32.mrb[0].mxu0
          %1378 = vmatprep.mubr.f32.mxu0 0.0
          %1379 = vmatmul.mubr.f32.gmra.mrb[0].mxu0 %v1166
          %v1380 = vpop.f32.mrb[0].mxu0
          %v1381 = vadd.f32 0.0, %v1380
          %v1382 = vpop.f32.mrb[0].mxu0
          %1383 = vmatprep.mubr.f32.mxu0 0.0
          %1384 = vmatmul.mubr.f32.gmra.mrb[0].mxu0 %v1167
          %v1385 = vpop.f32.mrb[0].mxu0
          %v1386 = vadd.f32 0.0, %v1385
          %v1387 = vpop.f32.mrb[0].mxu0
          %1388 = vmatprep.mubr.f32.mxu0 0.0
          %1389 = vmatmul.mubr.f32.gmra.mrb[0].mxu0 %v1168
          %v1390 = vpop.f32.mrb[0].mxu0
          %v1391 = vadd.f32 0.0, %v1390
          %v1392 = vpop.f32.mrb[0].mxu0
          %1393 = vmatprep.mubr.f32.mxu0 0.0
          %1394 = vmatmul.mubr.f32.gmra.mrb[0].mxu0 %v1169
          %v1395 = vpop.f32.mrb[0].mxu0
          %v1396 = vadd.f32 0.0, %v1395
          %v1397 = vpop.f32.mrb[0].mxu0
          %1398 = vmatprep.mubr.f32.mxu0 0.0
          %1399 = vmatmul.mubr.f32.gmra.mrb[0].mxu0 %v1170
          %v1400 = vpop.f32.mrb[0].mxu0
          %v1401 = vadd.f32 0.0, %v1400
          %v1402 = vpop.f32.mrb[0].mxu0
          %1403 = vmatprep.mubr.f32.mxu0 0.0
          %1404 = vmatmul.mubr.f32.gmra.mrb[0].mxu0 %v1171
          %v1405 = vpop.f32.mrb[0].mxu0
          %v1406 = vadd.f32 0.0, %v1405
          %v1407 = vpop.f32.mrb[0].mxu0
          %1408 = vmatprep.mubr.f32.mxu0 0.0
          %1409 = vmatmul.mubr.f32.gmra.mrb[0].mxu0 %v1172
          %v1410 = vpop.f32.mrb[0].mxu0
          %v1411 = vadd.f32 0.0, %v1410
          %v1412 = vpop.f32.mrb[0].mxu0
          %1413 = vdwg.mxu0
          %1414 = vmatprep.subr.mxu0 0.0
          %1415 = vmatpush1.msra.mxu0 %v1125
          %1416 = vmatprep.subr.mxu0 0.0
          %1417 = vmatpush1.msra.mxu0 %v1126
          %1418 = vmatprep.subr.mxu0 0.0
          %1419 = vmatpush1.msra.mxu0 %v1127
          %1420 = vmatprep.subr.mxu0 0.0
          %1421 = vmatpush1.msra.mxu0 %v1128
          %1422 = vmatprep.subr.mxu0 0.0
          %1423 = vmatpush1.msra.mxu0 %v1129
          %1424 = vmatprep.subr.mxu0 0.0
          %1425 = vmatpush1.msra.mxu0 %v1130
          %1426 = vmatprep.subr.mxu0 0.0
          %1427 = vmatpush1.msra.mxu0 %v1131
          %1428 = vmatprep.subr.mxu0 0.0
          %1429 = vmatpush1.msra.mxu0 %v1132
          %1430 = vmatprep.subr.mxu0 0.0
          %1431 = vmatpush1.msra.mxu0 %v1133
          %1432 = vmatprep.subr.mxu0 0.0
          %1433 = vmatpush1.msra.mxu0 %v1134
          %1434 = vmatprep.subr.mxu0 0.0
          %1435 = vmatpush1.msra.mxu0 %v1135
          %1436 = vmatprep.subr.mxu0 0.0
          %1437 = vmatpush1.msra.mxu0 %v1136
          %1438 = vmatprep.subr.mxu0 0.0
          %1439 = vmatpush1.msra.mxu0 %v1137
          %1440 = vmatprep.subr.mxu0 0.0
          %1441 = vmatpush1.msra.mxu0 %v1138
          %1442 = vmatprep.subr.mxu0 0.0
          %1443 = vmatpush1.msra.mxu0 %v1139
          %1444 = vmatprep.subr.mxu0 0.0
          %1445 = vmatpush1.msra.mxu0 %v1140
          %1446 = vmatprep.subr.mxu0 0.0
          %1447 = vmatpush1.msra.mxu0 0.0
          %1448 = vmatprep.subr.mxu0 0.0
          %1449 = vmatpush1.msra.mxu0 0.0
          %1450 = vmatprep.subr.mxu0 0.0
          %1451 = vmatpush1.msra.mxu0 0.0
          %1452 = vmatprep.subr.mxu0 0.0
          %1453 = vmatpush1.msra.mxu0 0.0
          %1454 = vmatprep.subr.mxu0 0.0
          %1455 = vmatpush1.msra.mxu0 0.0
          %1456 = vmatprep.subr.mxu0 0.0
          %1457 = vmatpush1.msra.mxu0 0.0
          %1458 = vmatprep.subr.mxu0 0.0
          %1459 = vmatpush1.msra.mxu0 0.0
          %1460 = vmatprep.subr.mxu0 0.0
          %1461 = vmatpush1.msra.mxu0 0.0
          %1462 = vmatprep.subr.mxu0 0.0
          %1463 = vmatpush1.msra.mxu0 0.0
          %1464 = vmatprep.subr.mxu0 0.0
          %1465 = vmatpush1.msra.mxu0 0.0
          %1466 = vmatprep.subr.mxu0 0.0
          %1467 = vmatpush1.msra.mxu0 0.0
          %1468 = vmatprep.subr.mxu0 0.0
          %1469 = vmatpush1.msra.mxu0 0.0
          %1470 = vmatprep.subr.mxu0 0.0
          %1471 = vmatpush1.msra.mxu0 0.0
          %1472 = vmatprep.subr.mxu0 0.0
          %1473 = vmatpush1.msra.mxu0 0.0
          %1474 = vmatprep.subr.mxu0 0.0
          %1475 = vmatpush1.msra.mxu0 0.0
          %1476 = vmatprep.subr.mxu0 0.0
          %1477 = vmatpush1.msra.mxu0 0.0
          %1478 = vmatprep.mubr.f32.mxu0 0.0
          %1479 = vmatmul.mubr.f32.gmra.mrb[0].mxu0 %v1093
          %v1480 = vpop.f32.mrb[0].mxu0
          %v1481 = vadd.f32 %v1256, %v1480
          %v1482 = vpop.f32.mrb[0].mxu0
          %1483 = vmatprep.mubr.f32.mxu0 0.0
          %1484 = vmatmul.mubr.f32.gmra.mrb[0].mxu0 %v1094
          %v1485 = vpop.f32.mrb[0].mxu0
          %v1486 = vadd.f32 %v1261, %v1485
          %v1487 = vpop.f32.mrb[0].mxu0
          %1488 = vmatprep.mubr.f32.mxu0 0.0
          %1489 = vmatmul.mubr.f32.gmra.mrb[0].mxu0 %v1095
          %v1490 = vpop.f32.mrb[0].mxu0
          %v1491 = vadd.f32 %v1266, %v1490
          %v1492 = vpop.f32.mrb[0].mxu0
          %1493 = vmatprep.mubr.f32.mxu0 0.0
          %1494 = vmatmul.mubr.f32.gmra.mrb[0].mxu0 %v1096
          %v1495 = vpop.f32.mrb[0].mxu0
          %v1496 = vadd.f32 %v1271, %v1495
          %v1497 = vpop.f32.mrb[0].mxu0
          %1498 = vmatprep.mubr.f32.mxu0 0.0
          %1499 = vmatmul.mubr.f32.gmra.mrb[0].mxu0 %v1097
          %v1500 = vpop.f32.mrb[0].mxu0
          %v1501 = vadd.f32 %v1276, %v1500
          %v1502 = vpop.f32.mrb[0].mxu0
          %1503 = vmatprep.mubr.f32.mxu0 0.0
          %1504 = vmatmul.mubr.f32.gmra.mrb[0].mxu0 %v1098
          %v1505 = vpop.f32.mrb[0].mxu0
          %v1506 = vadd.f32 %v1281, %v1505
          %v1507 = vpop.f32.mrb[0].mxu0
          %1508 = vmatprep.mubr.f32.mxu0 0.0
          %1509 = vmatmul.mubr.f32.gmra.mrb[0].mxu0 %v1099
          %v1510 = vpop.f32.mrb[0].mxu0
          %v1511 = vadd.f32 %v1286, %v1510
          %v1512 = vpop.f32.mrb[0].mxu0
          %1513 = vmatprep.mubr.f32.mxu0 0.0
          %1514 = vmatmul.mubr.f32.gmra.mrb[0].mxu0 %v1100
          %v1515 = vpop.f32.mrb[0].mxu0
          %v1516 = vadd.f32 %v1291, %v1515
          %v1517 = vpop.f32.mrb[0].mxu0
          %1518 = vmatprep.mubr.f32.mxu0 0.0
          %1519 = vmatmul.mubr.f32.gmra.mrb[0].mxu0 %v1101
          %v1520 = vpop.f32.mrb[0].mxu0
          %v1521 = vadd.f32 %v1296, %v1520
          %v1522 = vpop.f32.mrb[0].mxu0
          %1523 = vmatprep.mubr.f32.mxu0 0.0
          %1524 = vmatmul.mubr.f32.gmra.mrb[0].mxu0 %v1102
          %v1525 = vpop.f32.mrb[0].mxu0
          %v1526 = vadd.f32 %v1301, %v1525
          %v1527 = vpop.f32.mrb[0].mxu0
          %1528 = vmatprep.mubr.f32.mxu0 0.0
          %1529 = vmatmul.mubr.f32.gmra.mrb[0].mxu0 %v1103
          %v1530 = vpop.f32.mrb[0].mxu0
          %v1531 = vadd.f32 %v1306, %v1530
          %v1532 = vpop.f32.mrb[0].mxu0
          %1533 = vmatprep.mubr.f32.mxu0 0.0
          %1534 = vmatmul.mubr.f32.gmra.mrb[0].mxu0 %v1104
          %v1535 = vpop.f32.mrb[0].mxu0
          %v1536 = vadd.f32 %v1311, %v1535
          %v1537 = vpop.f32.mrb[0].mxu0
          %1538 = vmatprep.mubr.f32.mxu0 0.0
          %1539 = vmatmul.mubr.f32.gmra.mrb[0].mxu0 %v1105
          %v1540 = vpop.f32.mrb[0].mxu0
          %v1541 = vadd.f32 %v1316, %v1540
          %v1542 = vpop.f32.mrb[0].mxu0
          %1543 = vmatprep.mubr.f32.mxu0 0.0
          %1544 = vmatmul.mubr.f32.gmra.mrb[0].mxu0 %v1106
          %v1545 = vpop.f32.mrb[0].mxu0
          %v1546 = vadd.f32 %v1321, %v1545
          %v1547 = vpop.f32.mrb[0].mxu0
          %1548 = vmatprep.mubr.f32.mxu0 0.0
          %1549 = vmatmul.mubr.f32.gmra.mrb[0].mxu0 %v1107
          %v1550 = vpop.f32.mrb[0].mxu0
          %v1551 = vadd.f32 %v1326, %v1550
          %v1552 = vpop.f32.mrb[0].mxu0
          %1553 = vmatprep.mubr.f32.mxu0 0.0
          %1554 = vmatmul.mubr.f32.gmra.mrb[0].mxu0 %v1108
          %v1555 = vpop.f32.mrb[0].mxu0
          %v1556 = vadd.f32 %v1331, %v1555
          %v1557 = vpop.f32.mrb[0].mxu0
          %1558 = vmatprep.mubr.f32.mxu0 0.0
          %1559 = vmatmul.mubr.f32.gmra.mrb[0].mxu0 %v1109
          %v1560 = vpop.f32.mrb[0].mxu0
          %v1561 = vadd.f32 %v1336, %v1560
          %v1562 = vpop.f32.mrb[0].mxu0
          %1563 = vmatprep.mubr.f32.mxu0 0.0
          %1564 = vmatmul.mubr.f32.gmra.mrb[0].mxu0 %v1110
          %v1565 = vpop.f32.mrb[0].mxu0
          %v1566 = vadd.f32 %v1341, %v1565
          %v1567 = vpop.f32.mrb[0].mxu0
          %1568 = vmatprep.mubr.f32.mxu0 0.0
          %1569 = vmatmul.mubr.f32.gmra.mrb[0].mxu0 %v1111
          %v1570 = vpop.f32.mrb[0].mxu0
          %v1571 = vadd.f32 %v1346, %v1570
          %v1572 = vpop.f32.mrb[0].mxu0
          %1573 = vmatprep.mubr.f32.mxu0 0.0
          %1574 = vmatmul.mubr.f32.gmra.mrb[0].mxu0 %v1112
          %v1575 = vpop.f32.mrb[0].mxu0
          %v1576 = vadd.f32 %v1351, %v1575
          %v1577 = vpop.f32.mrb[0].mxu0
          %1578 = vmatprep.mubr.f32.mxu0 0.0
          %1579 = vmatmul.mubr.f32.gmra.mrb[0].mxu0 %v1113
          %v1580 = vpop.f32.mrb[0].mxu0
          %v1581 = vadd.f32 %v1356, %v1580
          %v1582 = vpop.f32.mrb[0].mxu0
          %1583 = vmatprep.mubr.f32.mxu0 0.0
          %1584 = vmatmul.mubr.f32.gmra.mrb[0].mxu0 %v1114
          %v1585 = vpop.f32.mrb[0].mxu0
          %v1586 = vadd.f32 %v1361, %v1585
          %v1587 = vpop.f32.mrb[0].mxu0
          %1588 = vmatprep.mubr.f32.mxu0 0.0
          %1589 = vmatmul.mubr.f32.gmra.mrb[0].mxu0 %v1115
          %v1590 = vpop.f32.mrb[0].mxu0
          %v1591 = vadd.f32 %v1366, %v1590
          %v1592 = vpop.f32.mrb[0].mxu0
          %1593 = vmatprep.mubr.f32.mxu0 0.0
          %1594 = vmatmul.mubr.f32.gmra.mrb[0].mxu0 %v1116
          %v1595 = vpop.f32.mrb[0].mxu0
          %v1596 = vadd.f32 %v1371, %v1595
          %v1597 = vpop.f32.mrb[0].mxu0
          %1598 = vmatprep.mubr.f32.mxu0 0.0
          %1599 = vmatmul.mubr.f32.gmra.mrb[0].mxu0 %v1117
          %v1600 = vpop.f32.mrb[0].mxu0
          %v1601 = vadd.f32 %v1376, %v1600
          %v1602 = vpop.f32.mrb[0].mxu0
          %1603 = vmatprep.mubr.f32.mxu0 0.0
          %1604 = vmatmul.mubr.f32.gmra.mrb[0].mxu0 %v1118
          %v1605 = vpop.f32.mrb[0].mxu0
          %v1606 = vadd.f32 %v1381, %v1605
          %v1607 = vpop.f32.mrb[0].mxu0
          %1608 = vmatprep.mubr.f32.mxu0 0.0
          %1609 = vmatmul.mubr.f32.gmra.mrb[0].mxu0 %v1119
          %v1610 = vpop.f32.mrb[0].mxu0
          %v1611 = vadd.f32 %v1386, %v1610
          %v1612 = vpop.f32.mrb[0].mxu0
          %1613 = vmatprep.mubr.f32.mxu0 0.0
          %1614 = vmatmul.mubr.f32.gmra.mrb[0].mxu0 %v1120
          %v1615 = vpop.f32.mrb[0].mxu0
          %v1616 = vadd.f32 %v1391, %v1615
          %v1617 = vpop.f32.mrb[0].mxu0
          %1618 = vmatprep.mubr.f32.mxu0 0.0
          %1619 = vmatmul.mubr.f32.gmra.mrb[0].mxu0 %v1121
          %v1620 = vpop.f32.mrb[0].mxu0
          %v1621 = vadd.f32 %v1396, %v1620
          %v1622 = vpop.f32.mrb[0].mxu0
          %1623 = vmatprep.mubr.f32.mxu0 0.0
          %1624 = vmatmul.mubr.f32.gmra.mrb[0].mxu0 %v1122
          %v1625 = vpop.f32.mrb[0].mxu0
          %v1626 = vadd.f32 %v1401, %v1625
          %v1627 = vpop.f32.mrb[0].mxu0
          %1628 = vmatprep.mubr.f32.mxu0 0.0
          %1629 = vmatmul.mubr.f32.gmra.mrb[0].mxu0 %v1123
          %v1630 = vpop.f32.mrb[0].mxu0
          %v1631 = vadd.f32 %v1406, %v1630
          %v1632 = vpop.f32.mrb[0].mxu0
          %1633 = vmatprep.mubr.f32.mxu0 0.0
          %1634 = vmatmul.mubr.f32.gmra.mrb[0].mxu0 %v1124
          %v1635 = vpop.f32.mrb[0].mxu0
          %v1636 = vadd.f32 %v1411, %v1635
          %v1637 = vpop.f32.mrb[0].mxu0
          %1638 = vdwg.mxu0
          %v1639 = vld [vmem:[%s5] sm:$0x1]
          %v1641 = vlaneseq
          %v1642 = vshrl.u32 %v1641, 7
          %v1643 = vsub.s32 0, %v1642
          %v1644 = vrot.slane %v1639, %v1643
          %v1646 = vadd.f32 %v1481, %v1644
          %v1647 = vadd.f32 %v1486, %v1644
          %v1648 = vadd.f32 %v1491, %v1644
          %v1649 = vadd.f32 %v1496, %v1644
          %v1650 = vadd.f32 %v1501, %v1644
          %v1651 = vadd.f32 %v1506, %v1644
          %v1652 = vadd.f32 %v1511, %v1644
          %v1653 = vadd.f32 %v1516, %v1644
          %v1654 = vadd.f32 %v1521, %v1644
          %v1655 = vadd.f32 %v1526, %v1644
          %v1656 = vadd.f32 %v1531, %v1644
          %v1657 = vadd.f32 %v1536, %v1644
          %v1658 = vadd.f32 %v1541, %v1644
          %v1659 = vadd.f32 %v1546, %v1644
          %v1660 = vadd.f32 %v1551, %v1644
          %v1661 = vadd.f32 %v1556, %v1644
          %v1662 = vadd.f32 %v1561, %v1644
          %v1663 = vadd.f32 %v1566, %v1644
          %v1664 = vadd.f32 %v1571, %v1644
          %v1665 = vadd.f32 %v1576, %v1644
          %v1666 = vadd.f32 %v1581, %v1644
          %v1667 = vadd.f32 %v1586, %v1644
          %v1668 = vadd.f32 %v1591, %v1644
          %v1669 = vadd.f32 %v1596, %v1644
          %v1670 = vadd.f32 %v1601, %v1644
          %v1671 = vadd.f32 %v1606, %v1644
          %v1672 = vadd.f32 %v1611, %v1644
          %v1673 = vadd.f32 %v1616, %v1644
          %v1674 = vadd.f32 %v1621, %v1644
          %v1675 = vadd.f32 %v1626, %v1644
          %v1676 = vadd.f32 %v1631, %v1644
          %v1677 = vadd.f32 %v1636, %v1644
          %1678 = vst [vmem:[%s473] sm:$0xff] %v1646
          %1679 = vst [vmem:[%s473 + $0x8] sm:$0xff] %v1647
          %1680 = vst [vmem:[%s473 + $0x10] sm:$0xff] %v1648
          %1681 = vst [vmem:[%s473 + $0x18] sm:$0xff] %v1649
          %1682 = vst [vmem:[%s473 + $0x20] sm:$0xff] %v1650
          %1683 = vst [vmem:[%s473 + $0x28] sm:$0xff] %v1651
          %1684 = vst [vmem:[%s473 + $0x30] sm:$0xff] %v1652
          %1685 = vst [vmem:[%s473 + $0x38] sm:$0xff] %v1653
          %1686 = vst [vmem:[%s473 + $0x40] sm:$0xff] %v1654
          %1687 = vst [vmem:[%s473 + $0x48] sm:$0xff] %v1655
          %1688 = vst [vmem:[%s473 + $0x50] sm:$0xff] %v1656
          %1689 = vst [vmem:[%s473 + $0x58] sm:$0xff] %v1657
          %1690 = vst [vmem:[%s473 + $0x60] sm:$0xff] %v1658
          %1691 = vst [vmem:[%s473 + $0x68] sm:$0xff] %v1659
          %1692 = vst [vmem:[%s473 + $0x70] sm:$0xff] %v1660
          %1693 = vst [vmem:[%s473 + $0x78] sm:$0xff] %v1661
          %1694 = vst [vmem:[%s473 + $0x80] sm:$0xff] %v1662
          %1695 = vst [vmem:[%s473 + $0x88] sm:$0xff] %v1663
          %1696 = vst [vmem:[%s473 + $0x90] sm:$0xff] %v1664
          %1697 = vst [vmem:[%s473 + $0x98] sm:$0xff] %v1665
          %1698 = vst [vmem:[%s473 + $0xa0] sm:$0xff] %v1666
          %1699 = vst [vmem:[%s473 + $0xa8] sm:$0xff] %v1667
          %1700 = vst [vmem:[%s473 + $0xb0] sm:$0xff] %v1668
          %1701 = vst [vmem:[%s473 + $0xb8] sm:$0xff] %v1669
          %1702 = vst [vmem:[%s473 + $0xc0] sm:$0xff] %v1670
          %1703 = vst [vmem:[%s473 + $0xc8] sm:$0xff] %v1671
          %1704 = vst [vmem:[%s473 + $0xd0] sm:$0xff] %v1672
          %1705 = vst [vmem:[%s473 + $0xd8] sm:$0xff] %v1673
          %1706 = vst [vmem:[%s473 + $0xe0] sm:$0xff] %v1674
          %1707 = vst [vmem:[%s473 + $0xe8] sm:$0xff] %v1675
          %1708 = vst [vmem:[%s473 + $0xf0] sm:$0xff] %v1676
          %1709 = vst [vmem:[%s473 + $0xf8] sm:$0xff] %v1677
        $region90: #{sage_forward.3} parent=77 // pred_fallthru
          _
        %s1710 = smul.u32 32, %s21
        %p1711 = scmp.lt.s32.totalorder %s1710, 63
        %s1712 = scalar_select %p1711, %s1710, 63
        %s1713 = smul.addr %s1712, 8
        %s1714 = scalar_lea.vmem %s6, %s1713
        // Predicated region
        $region91: #{sage_forward.3} parent=77 // pred_check
          %p1715 = pneg %p190
        $region92: #{sage_forward.3} parent=77 // pred_check_branch
          %1717 = sbr.rel (%p1715) target = $region94
        $region93: #{sage_forward.3} parent=77 // pred_region
          %s1718 = smul.u32 32, %s21
        $region94: #{sage_forward.3} parent=77 // pred_fallthru
          _
      $region78: #{sage_forward.3} parent=5 // pred_fallthru
        _
      %p1719 = scmp.le.s32.totalorder 2, %s12
      // Predicated region
      $region95: #{sage_forward.3} parent=5 // pred_check
        %p1720 = pneg %p1719
      $region96: #{sage_forward.3} parent=5 // pred_check_branch
        %1722 = sbr.rel (%p1720) target = $region98
      $region97: #{sage_forward.3} parent=5 // pred_region
        %s1723 = ssub.s32 %s12, 2
        // Predicated region
        $region99: #{sage_forward.3} parent=97 // pred_check
          %p1724 = pneg %p196
        $region100: #{sage_forward.3} parent=97 // pred_check_branch
          %1726 = sbr.rel (%p1724) target = $region102
        $region101: #{sage_forward.3} parent=97 // pred_region
          %s1727 = smul.u32 32, %s23
          %p1728 = scmp.lt.s32.totalorder %s1727, 63
          %s1729 = scalar_select %p1728, %s1727, 63
          %s1730 = smul.addr %s1729, 8
          %s1731 = scalar_lea.vmem %s6, %s1730
        $region102: #{sage_forward.3} parent=97 // pred_fallthru
          _
      $region98: #{sage_forward.3} parent=5 // pred_fallthru
        _
    $region6: #{sage_forward.3} parent=1 // loop_footer
      %s16 = sadd.s32 1, %s12
    $region7: #{sage_forward.3} parent=1 // loop_footer_branch
      %11 = sbr.rel target = $region3
    $region8: #{sage_forward.3} parent=1 // loop_exit
      _

</llo_original>
